<compile_context>
chip_gen: v6e
topology: v6e:2x2x1
jax: 0.10.0
libtpu: 0.0.40
codegen_flags: <defaults>
</compile_context>

<pallas_src>
import jax
import jax.numpy as jnp
from jax import lax
from jax.experimental import pallas as pl
from jax.experimental.pallas import tpu as pltpu


# ----------------------------------------------------------------------------
# Fused kernel: one grid step == one image
# ----------------------------------------------------------------------------
def _upsample_block_kernel(xs_ref, w_ref, sc_ref, sh_ref, o_ref, abuf):
    # xs_ref : (1, M, C)        pixel-shuffled activation, NHWC-flat (M = Hs*Ws)
    # w_ref  : (C, 9C + C)      shared conv weight, im2col layout [(ky,kx,ci) | I_C];
    #                           the identity block folds the residual add into conv #2
    # sc_ref : (1, C)           folded BN scale = gamma / sqrt(var + eps)
    # sh_ref : (1, C)           folded BN shift = beta - mean * scale
    # o_ref  : (1, C, M)        output, channel-planar == NCHW-flat (lane-dense stores)
    # abuf   : (Hs+2, Ws+2, C)  VMEM scratch: zero-halo activation buffer
    Hp, Wp, C = abuf.shape
    Hs, Ws = Hp - 2, Wp - 2
    M = Hs * Ws
    K = 9 * C

    scale = sc_ref[...]                       # (1, C) broadcasts over (M, C)
    shift = sh_ref[...]
    w_aug = w_ref[...]                        # (C, 9C + C)

    # Zero ONLY the 1-px halo border (interior is fully rewritten before every read).
    # Done per step (not @pl.when(pid==0)) so it stays correct when the "parallel"
    # axis is split across TensorCores, each with its own uninitialized scratch.
    abuf[0:1, :, :] = jnp.zeros((1, Wp, C), jnp.float32)
    abuf[Hs + 1:Hs + 2, :, :] = jnp.zeros((1, Wp, C), jnp.float32)
    abuf[:, 0:1, :] = jnp.zeros((Hp, 1, C), jnp.float32)
    abuf[:, Ws + 1:Ws + 2, :] = jnp.zeros((Hp, 1, C), jnp.float32)

    def im2col_taps():
        # 9 shifted views of the halo'd buffer, concatenated on the lane axis later.
        # TODO(synk): at production C (multiple of 128) generate the kx-shifted taps with
        # pltpu.roll / aligned offsets instead of offset-1 slices.
        return [abuf[ky:ky + Hs, kx:kx + Ws, :]
                for ky in range(3) for kx in range(3)]

    x_mc = xs_ref[0].astype(jnp.float32)      # (M, C)   "initial"

    # ---- BasicBlock #1: conv3x3(relu(bn(initial))) --------------------------------
    a1 = jnp.maximum(x_mc * scale + shift, 0.0)
    abuf[1:Hs + 1, 1:Ws + 1, :] = a1.reshape(Hs, Ws, C)
    p1 = jnp.concatenate(im2col_taps(), axis=-1).reshape(M, K)           # (M, 9C)
    # TODO(synk): cast patches/weights to bf16 (keep f32 accumulation) once C >= 64
    # (bf16 MXU inputs are fine on v5e/v6e/v7x), and split K per-ky into 3 accumulated
    # dots to fit v7x's 64 MiB VMEM at production sizes.
    h1 = lax.dot_general(p1, w_aug[:, :K],
                         dimension_numbers=(((1,), (1,)), ((), ())),
                         preferred_element_type=jnp.float32)             # (M, C)

    # ---- BasicBlock #2 (same shared weights/BN) + residual, fused in one matmul ---
    a2 = jnp.maximum(h1 * scale + shift, 0.0)
    abuf[1:Hs + 1, 1:Ws + 1, :] = a2.reshape(Hs, Ws, C)
    # Append `initial` as a 10th tap; the identity block in w_aug adds it back, so the
    # result is conv(a2) + initial directly in channel-planar (C, M) layout.
    p2 = jnp.concatenate(im2col_taps() + [x_mc.reshape(Hs, Ws, C)],
                         axis=-1).reshape(M, K + C)                      # (M, 9C + C)
    out = lax.dot_general(w_aug, p2,
                          dimension_numbers=(((1,), (1,)), ((), ())),
                          preferred_element_type=jnp.float32)            # (C, M)
    o_ref[0] = out.astype(o_ref.dtype)                                   # lane-dense store


# ----------------------------------------------------------------------------
# Wrapper: PixelShuffle (single XLA layout copy) + pallas_call
# ----------------------------------------------------------------------------
@jax.jit
def upsample_block_forward(x_nchw, w_oihw, bn_scale, bn_shift):
    """x: (N, 4C, H, W) -> (N, C, 2H, 2W). Conv/BN params shared by both BasicBlocks."""
    N, C4, H, W = x_nchw.shape
    C = C4 // 4
    Hs, Ws = 2 * H, 2 * W
    M = Hs * Ws

    # PixelShuffle(2): initial[n, c, 2h+i, 2w+j] = x[n, 4c+2i+j, h, w]
    # done as ONE layout copy straight into the kernel's NHWC-flat input layout.
    # TODO(synk): fold the shuffle itself into the kernel (strided VMEM scatter) to also
    # drop this remaining write+read of the upscaled activation.
    t = x_nchw.astype(jnp.float32).reshape(N, C, 2, 2, H, W)
    xs = jnp.transpose(t, (0, 4, 2, 5, 3, 1)).reshape(N, M, C)           # (N, M, C)

    # Single shared weight, im2col layout (co) x (ky,kx,ci), plus an identity block so
    # conv #2 also performs the residual add (no transposed weight copy in HBM/VMEM).
    w = jnp.transpose(w_oihw, (0, 2, 3, 1)).reshape(C, 9 * C).astype(jnp.float32)
    w_aug = jnp.concatenate([w, jnp.eye(C, dtype=jnp.float32)], axis=1)  # (C, 10C)
    sc = bn_scale.reshape(1, C).astype(jnp.float32)
    sh = bn_shift.reshape(1, C).astype(jnp.float32)

    # TODO(synk): at production sizes ship activations as bf16 (upcast in-kernel), pad C to
    # a multiple of 128, tile Hs into halo'd row blocks as a second "parallel" grid axis
    # (v7x 64 MiB VMEM / odd-N core balance) and set vmem_limit_bytes accordingly.
    out_cp = pl.pallas_call(
        _upsample_block_kernel,
        out_shape=jax.ShapeDtypeStruct((N, C, M), jnp.float32),
        grid=(N,),
        in_specs=[
            pl.BlockSpec((1, M, C), lambda n: (n, 0, 0)),
            pl.BlockSpec((C, 10 * C), lambda n: (0, 0)),
            pl.BlockSpec((1, C), lambda n: (0, 0)),
            pl.BlockSpec((1, C), lambda n: (0, 0)),
        ],
        out_specs=pl.BlockSpec((1, C, M), lambda n: (n, 0, 0)),
        scratch_shapes=[pltpu.VMEM((Hs + 2, Ws + 2, C), jnp.float32)],
        compiler_params=pltpu.CompilerParams(
            dimension_semantics=("parallel",)),   # one image per core on multi-TC chips
    )(xs, w_aug, sc, sh)

    return out_cp.reshape(N, C, Hs, Ws)           # planar == NCHW-flat; reshape is free


# ----------------------------------------------------------------------------
# Module wrapper with deterministic synthetic parameters + pure-JAX reference
# ----------------------------------------------------------------------------
class UpsampleBlockPallas:
    """JAX/Pallas port of UpsampleBlock(in_ch, out_ch, kernel_size=3, stride=1, padding=1).

    nn.Sequential(*[BasicBlock(...)] * 2) duplicates the SAME module, so both applications
    share one Conv2d weight and one BatchNorm; composition + residual require
    in_channels == out_channels (== input_channels / 4 after PixelShuffle).
    """

    def __init__(self, key, in_channels, out_channels, eps=1e-5):
        assert in_channels == out_channels, \
            "shared-BasicBlock composition + residual require in_channels == out_channels"
        C = in_channels
        kw, kg, kb, km, kv = jax.random.split(key, 5)
        self.weight = jax.random.normal(kw, (C, C, 3, 3), jnp.float32) * 0.1  # OIHW, bias=False
        # Inference-mode BatchNorm folded into a per-channel affine.
        # TODO(synk): training-mode BatchNorm (batch statistics / running stats) not implemented.
        gamma = 1.0 + 0.1 * jax.random.normal(kg, (C,), jnp.float32)
        beta = 0.1 * jax.random.normal(kb, (C,), jnp.float32)
        mean = 0.1 * jax.random.normal(km, (C,), jnp.float32)
        var = jax.random.uniform(kv, (C,), jnp.float32, minval=0.5, maxval=1.5)
        self.scale = gamma / jnp.sqrt(var + eps)
        self.shift = beta - mean * self.scale

    def __call__(self, x_nchw):
        return upsample_block_forward(x_nchw, self.weight, self.scale, self.shift)

    # pure-JAX reference for correctness checking
    def reference(self, x_nchw):
        N, C4, H, W = x_nchw.shape
        C = C4 // 4
        t = x_nchw.astype(jnp.float32).reshape(N, C, 2, 2, H, W)
        initial = jnp.transpose(t, (0, 1, 4, 2, 5, 3)).reshape(N, C, 2 * H, 2 * W)
        a = jnp.transpose(initial, (0, 2, 3, 1))                          # NHWC
        w_hwio = jnp.transpose(self.weight, (2, 3, 1, 0))
        sc = self.scale.reshape(1, 1, 1, C)
        sh = self.shift.reshape(1, 1, 1, C)

        def bb(y):
            z = jnp.maximum(y * sc + sh, 0.0)
            return lax.conv_general_dilated(
                z, w_hwio, (1, 1), "SAME",
                dimension_numbers=("NHWC", "HWIO", "NHWC"))

        out = a + bb(bb(a))
        return jnp.transpose(out, (0, 3, 1, 2))


# ----------------------------------------------------------------------------
# Demo
# ----------------------------------------------------------------------------
if __name__ == "__main__":
    key = jax.random.PRNGKey(0)
    kx, kp = jax.random.split(key)

    # x: (N, 4*C, H, W) = (2, 16, 8, 8)  ->  PixelShuffle(2)  ->  (2, 4, 16, 16)
    N, Cin, H, W = 2, 16, 8, 8
    x = jax.random.normal(kx, (N, Cin, H, W), jnp.float32)

    blk = UpsampleBlockPallas(kp, Cin // 4, Cin // 4)
    out = jax.block_until_ready(blk(x))
    assert out.shape == (N, Cin // 4, 2 * H, 2 * W)

    ref = blk.reference(x)
    assert jnp.allclose(out, ref, atol=1e-4, rtol=1e-4), \
        float(jnp.max(jnp.abs(out - ref)))

    print("KERNEL_OK")
</pallas_src>

<mosaic_0001>
module attributes {stable_mosaic.version = 11 : i64} {
  func.func @_upsample_block_kernel(%arg0: i32, %arg1: memref<1x256x4xf32, #tpu.memory_space<vmem>>, %arg2: memref<4x40xf32, #tpu.memory_space<vmem>>, %arg3: memref<1x4xf32, #tpu.memory_space<vmem>>, %arg4: memref<1x4xf32, #tpu.memory_space<vmem>>, %arg5: memref<1x4x256xf32, #tpu.memory_space<vmem>>, %arg6: memref<18x18x4xf32, #tpu.memory_space<vmem>>) attributes {dimension_semantics = [#tpu.dimension_semantics<parallel>], iteration_bounds = array<i64: 2>, scalar_prefetch = 0 : i64, scratch_operands = 1 : i64, tpu.core_type = #tpu.core_type<tc>, window_params = [{transform_indices = @transform_0, window_bounds = array<i64: 1, 256, 4>}, {pipeline_mode = #tpu.pipeline_mode<synchronous>, transform_indices = @transform_1, window_bounds = array<i64: 4, 40>}, {pipeline_mode = #tpu.pipeline_mode<synchronous>, transform_indices = @transform_2, window_bounds = array<i64: 1, 4>}, {pipeline_mode = #tpu.pipeline_mode<synchronous>, transform_indices = @transform_3, window_bounds = array<i64: 1, 4>}, {transform_indices = @transform_4, window_bounds = array<i64: 1, 4, 256>}]} {
    %c0 = arith.constant 0 : index
    %c0_0 = arith.constant 0 : index
    %0 = vector.load %arg3[%c0, %c0_0] : memref<1x4xf32, #tpu.memory_space<vmem>>, vector<1x4xf32>
    %c0_1 = arith.constant 0 : index
    %c0_2 = arith.constant 0 : index
    %1 = vector.load %arg4[%c0_1, %c0_2] : memref<1x4xf32, #tpu.memory_space<vmem>>, vector<1x4xf32>
    %c0_3 = arith.constant 0 : index
    %c0_4 = arith.constant 0 : index
    %2 = vector.load %arg2[%c0_3, %c0_4] : memref<4x40xf32, #tpu.memory_space<vmem>>, vector<4x40xf32>
    %cst = arith.constant 0.000000e+00 : f32
    %3 = vector.broadcast %cst : f32 to vector<1x18x4xf32>
    %c0_5 = arith.constant 0 : index
    %c0_6 = arith.constant 0 : index
    %c0_7 = arith.constant 0 : index
    %4 = vector.load %arg6[%c0_5, %c0_6, %c0_7] : memref<18x18x4xf32, #tpu.memory_space<vmem>>, vector<1x18x4xf32>
    tpu.vector_store %arg6[%c0_5, %c0_6, %c0_7], %3 {strides = array<i32>} : memref<18x18x4xf32, #tpu.memory_space<vmem>>, vector<1x18x4xf32>,
    %cst_8 = arith.constant 0.000000e+00 : f32
    %5 = vector.broadcast %cst_8 : f32 to vector<1x18x4xf32>
    %c17 = arith.constant 17 : index
    %c0_9 = arith.constant 0 : index
    %c0_10 = arith.constant 0 : index
    %6 = vector.load %arg6[%c17, %c0_9, %c0_10] : memref<18x18x4xf32, #tpu.memory_space<vmem>>, vector<1x18x4xf32>
    tpu.vector_store %arg6[%c17, %c0_9, %c0_10], %5 {strides = array<i32>} : memref<18x18x4xf32, #tpu.memory_space<vmem>>, vector<1x18x4xf32>,
    %cst_11 = arith.constant 0.000000e+00 : f32
    %7 = vector.broadcast %cst_11 : f32 to vector<18x1x4xf32>
    %c0_12 = arith.constant 0 : index
    %c0_13 = arith.constant 0 : index
    %c0_14 = arith.constant 0 : index
    %8 = vector.load %arg6[%c0_12, %c0_13, %c0_14] : memref<18x18x4xf32, #tpu.memory_space<vmem>>, vector<18x1x4xf32>
    tpu.vector_store %arg6[%c0_12, %c0_13, %c0_14], %7 {strides = array<i32>} : memref<18x18x4xf32, #tpu.memory_space<vmem>>, vector<18x1x4xf32>,
    %cst_15 = arith.constant 0.000000e+00 : f32
    %9 = vector.broadcast %cst_15 : f32 to vector<18x1x4xf32>
    %c0_16 = arith.constant 0 : index
    %c17_17 = arith.constant 17 : index
    %c0_18 = arith.constant 0 : index
    %10 = vector.load %arg6[%c0_16, %c17_17, %c0_18] : memref<18x18x4xf32, #tpu.memory_space<vmem>>, vector<18x1x4xf32>
    tpu.vector_store %arg6[%c0_16, %c17_17, %c0_18], %9 {strides = array<i32>} : memref<18x18x4xf32, #tpu.memory_space<vmem>>, vector<18x1x4xf32>,
    %c0_19 = arith.constant 0 : index
    %c0_20 = arith.constant 0 : index
    %c0_21 = arith.constant 0 : index
    %11 = vector.load %arg1[%c0_19, %c0_20, %c0_21] : memref<1x256x4xf32, #tpu.memory_space<vmem>>, vector<1x256x4xf32>
    %12 = vector.shape_cast %11 : vector<1x256x4xf32> to vector<256x4xf32>
    %13 = vector.broadcast %0 : vector<1x4xf32> to vector<256x4xf32>
    %14 = arith.mulf %12, %13 : vector<256x4xf32>
    %15 = vector.broadcast %1 : vector<1x4xf32> to vector<256x4xf32>
    %16 = arith.addf %14, %15 : vector<256x4xf32>
    %cst_22 = arith.constant 0.000000e+00 : f32
    %17 = vector.broadcast %cst_22 : f32 to vector<256x4xf32>
    %18 = arith.maximumf %16, %17 : vector<256x4xf32>
    %19 = vector.shape_cast %18 : vector<256x4xf32> to vector<16x16x4xf32>
    %c1 = arith.constant 1 : index
    %c1_23 = arith.constant 1 : index
    %c0_24 = arith.constant 0 : index
    %20 = vector.load %arg6[%c1, %c1_23, %c0_24] : memref<18x18x4xf32, #tpu.memory_space<vmem>>, vector<16x16x4xf32>
    tpu.vector_store %arg6[%c1, %c1_23, %c0_24], %19 {strides = array<i32>} : memref<18x18x4xf32, #tpu.memory_space<vmem>>, vector<16x16x4xf32>,
    %c0_25 = arith.constant 0 : index
    %c0_26 = arith.constant 0 : index
    %c0_27 = arith.constant 0 : index
    %21 = vector.load %arg6[%c0_25, %c0_26, %c0_27] : memref<18x18x4xf32, #tpu.memory_space<vmem>>, vector<16x16x4xf32>
    %c0_28 = arith.constant 0 : index
    %c1_29 = arith.constant 1 : index
    %c0_30 = arith.constant 0 : index
    %22 = vector.load %arg6[%c0_28, %c1_29, %c0_30] : memref<18x18x4xf32, #tpu.memory_space<vmem>>, vector<16x16x4xf32>
    %c0_31 = arith.constant 0 : index
    %c2 = arith.constant 2 : index
    %c0_32 = arith.constant 0 : index
    %23 = vector.load %arg6[%c0_31, %c2, %c0_32] : memref<18x18x4xf32, #tpu.memory_space<vmem>>, vector<16x16x4xf32>
    %c1_33 = arith.constant 1 : index
    %c0_34 = arith.constant 0 : index
    %c0_35 = arith.constant 0 : index
    %24 = vector.load %arg6[%c1_33, %c0_34, %c0_35] : memref<18x18x4xf32, #tpu.memory_space<vmem>>, vector<16x16x4xf32>
    %c1_36 = arith.constant 1 : index
    %c1_37 = arith.constant 1 : index
    %c0_38 = arith.constant 0 : index
    %25 = vector.load %arg6[%c1_36, %c1_37, %c0_38] : memref<18x18x4xf32, #tpu.memory_space<vmem>>, vector<16x16x4xf32>
    %c1_39 = arith.constant 1 : index
    %c2_40 = arith.constant 2 : index
    %c0_41 = arith.constant 0 : index
    %26 = vector.load %arg6[%c1_39, %c2_40, %c0_41] : memref<18x18x4xf32, #tpu.memory_space<vmem>>, vector<16x16x4xf32>
    %c2_42 = arith.constant 2 : index
    %c0_43 = arith.constant 0 : index
    %c0_44 = arith.constant 0 : index
    %27 = vector.load %arg6[%c2_42, %c0_43, %c0_44] : memref<18x18x4xf32, #tpu.memory_space<vmem>>, vector<16x16x4xf32>
    %c2_45 = arith.constant 2 : index
    %c1_46 = arith.constant 1 : index
    %c0_47 = arith.constant 0 : index
    %28 = vector.load %arg6[%c2_45, %c1_46, %c0_47] : memref<18x18x4xf32, #tpu.memory_space<vmem>>, vector<16x16x4xf32>
    %c2_48 = arith.constant 2 : index
    %c2_49 = arith.constant 2 : index
    %c0_50 = arith.constant 0 : index
    %29 = vector.load %arg6[%c2_48, %c2_49, %c0_50] : memref<18x18x4xf32, #tpu.memory_space<vmem>>, vector<16x16x4xf32>
    %30 = tpu.concatenate %21, %22, %23, %24, %25, %26, %27, %28, %29 in 2 : vector<16x16x4xf32>, vector<16x16x4xf32>, vector<16x16x4xf32>, vector<16x16x4xf32>, vector<16x16x4xf32>, vector<16x16x4xf32>, vector<16x16x4xf32>, vector<16x16x4xf32>, vector<16x16x4xf32> -> vector<16x16x36xf32>
    %31 = vector.shape_cast %30 : vector<16x16x36xf32> to vector<256x36xf32>
    %32 = vector.extract_strided_slice %2 {offsets = [0, 0], sizes = [4, 36], strides = [1, 1]} : vector<4x40xf32> to vector<4x36xf32>
    %cst_51 = arith.constant dense<0.000000e+00> : vector<256x4xf32>
    %33 = tpu.matmul %31, %32, %cst_51 {dimension_numbers = #tpu.dot_dimension_numbers<[1], [1], [0], [0], [0, 0, 1, 0], [], []>} : vector<256x36xf32>, vector<4x36xf32>, vector<256x4xf32> -> vector<256x4xf32>
    %34 = vector.broadcast %0 : vector<1x4xf32> to vector<256x4xf32>
    %35 = arith.mulf %33, %34 : vector<256x4xf32>
    %36 = vector.broadcast %1 : vector<1x4xf32> to vector<256x4xf32>
    %37 = arith.addf %35, %36 : vector<256x4xf32>
    %cst_52 = arith.constant 0.000000e+00 : f32
    %38 = vector.broadcast %cst_52 : f32 to vector<256x4xf32>
    %39 = arith.maximumf %37, %38 : vector<256x4xf32>
    %40 = vector.shape_cast %39 : vector<256x4xf32> to vector<16x16x4xf32>
    %c1_53 = arith.constant 1 : index
    %c1_54 = arith.constant 1 : index
    %c0_55 = arith.constant 0 : index
    %41 = vector.load %arg6[%c1_53, %c1_54, %c0_55] : memref<18x18x4xf32, #tpu.memory_space<vmem>>, vector<16x16x4xf32>
    tpu.vector_store %arg6[%c1_53, %c1_54, %c0_55], %40 {strides = array<i32>} : memref<18x18x4xf32, #tpu.memory_space<vmem>>, vector<16x16x4xf32>,
    %c0_56 = arith.constant 0 : index
    %c0_57 = arith.constant 0 : index
    %c0_58 = arith.constant 0 : index
    %42 = vector.load %arg6[%c0_56, %c0_57, %c0_58] : memref<18x18x4xf32, #tpu.memory_space<vmem>>, vector<16x16x4xf32>
    %c0_59 = arith.constant 0 : index
    %c1_60 = arith.constant 1 : index
    %c0_61 = arith.constant 0 : index
    %43 = vector.load %arg6[%c0_59, %c1_60, %c0_61] : memref<18x18x4xf32, #tpu.memory_space<vmem>>, vector<16x16x4xf32>
    %c0_62 = arith.constant 0 : index
    %c2_63 = arith.constant 2 : index
    %c0_64 = arith.constant 0 : index
    %44 = vector.load %arg6[%c0_62, %c2_63, %c0_64] : memref<18x18x4xf32, #tpu.memory_space<vmem>>, vector<16x16x4xf32>
    %c1_65 = arith.constant 1 : index
    %c0_66 = arith.constant 0 : index
    %c0_67 = arith.constant 0 : index
    %45 = vector.load %arg6[%c1_65, %c0_66, %c0_67] : memref<18x18x4xf32, #tpu.memory_space<vmem>>, vector<16x16x4xf32>
    %c1_68 = arith.constant 1 : index
    %c1_69 = arith.constant 1 : index
    %c0_70 = arith.constant 0 : index
    %46 = vector.load %arg6[%c1_68, %c1_69, %c0_70] : memref<18x18x4xf32, #tpu.memory_space<vmem>>, vector<16x16x4xf32>
    %c1_71 = arith.constant 1 : index
    %c2_72 = arith.constant 2 : index
    %c0_73 = arith.constant 0 : index
    %47 = vector.load %arg6[%c1_71, %c2_72, %c0_73] : memref<18x18x4xf32, #tpu.memory_space<vmem>>, vector<16x16x4xf32>
    %c2_74 = arith.constant 2 : index
    %c0_75 = arith.constant 0 : index
    %c0_76 = arith.constant 0 : index
    %48 = vector.load %arg6[%c2_74, %c0_75, %c0_76] : memref<18x18x4xf32, #tpu.memory_space<vmem>>, vector<16x16x4xf32>
    %c2_77 = arith.constant 2 : index
    %c1_78 = arith.constant 1 : index
    %c0_79 = arith.constant 0 : index
    %49 = vector.load %arg6[%c2_77, %c1_78, %c0_79] : memref<18x18x4xf32, #tpu.memory_space<vmem>>, vector<16x16x4xf32>
    %c2_80 = arith.constant 2 : index
    %c2_81 = arith.constant 2 : index
    %c0_82 = arith.constant 0 : index
    %50 = vector.load %arg6[%c2_80, %c2_81, %c0_82] : memref<18x18x4xf32, #tpu.memory_space<vmem>>, vector<16x16x4xf32>
    %51 = vector.shape_cast %12 : vector<256x4xf32> to vector<16x16x4xf32>
    %52 = tpu.concatenate %42, %43, %44, %45, %46, %47, %48, %49, %50, %51 in 2 : vector<16x16x4xf32>, vector<16x16x4xf32>, vector<16x16x4xf32>, vector<16x16x4xf32>, vector<16x16x4xf32>, vector<16x16x4xf32>, vector<16x16x4xf32>, vector<16x16x4xf32>, vector<16x16x4xf32>, vector<16x16x4xf32> -> vector<16x16x40xf32>
    %53 = vector.shape_cast %52 : vector<16x16x40xf32> to vector<256x40xf32>
    %cst_83 = arith.constant dense<0.000000e+00> : vector<4x256xf32>
    %54 = tpu.matmul %2, %53, %cst_83 {dimension_numbers = #tpu.dot_dimension_numbers<[1], [1], [0], [0], [0, 0, 1, 0], [], []>} : vector<4x40xf32>, vector<256x40xf32>, vector<4x256xf32> -> vector<4x256xf32>
    %c0_84 = arith.constant 0 : index
    %c0_85 = arith.constant 0 : index
    %c0_86 = arith.constant 0 : index
    %55 = vector.load %arg5[%c0_84, %c0_85, %c0_86] : memref<1x4x256xf32, #tpu.memory_space<vmem>>, vector<1x4x256xf32>
    %56 = vector.shape_cast %55 : vector<1x4x256xf32> to vector<4x256xf32>
    %57 = vector.shape_cast %54 : vector<4x256xf32> to vector<1x4x256xf32>
    tpu.vector_store %arg5[%c0_84, %c0_85, %c0_86], %57 {strides = array<i32>} : memref<1x4x256xf32, #tpu.memory_space<vmem>>, vector<1x4x256xf32>,
    return
  }
  func.func @transform_0(%arg0: i32) -> (i32, i32, i32) {
    %c0_i32 = arith.constant 0 : i32
    %c0_i32_0 = arith.constant 0 : i32
    %c0_i32_1 = arith.constant 0 : i32
    return %arg0, %c0_i32, %c0_i32_0 : i32, i32, i32
  }
  func.func @transform_1(%arg0: i32) -> (i32, i32) {
    %c0_i32 = arith.constant 0 : i32
    %c0_i32_0 = arith.constant 0 : i32
    %c0_i32_1 = arith.constant 0 : i32
    return %c0_i32, %c0_i32_0 : i32, i32
  }
  func.func @transform_2(%arg0: i32) -> (i32, i32) {
    %c0_i32 = arith.constant 0 : i32
    %c0_i32_0 = arith.constant 0 : i32
    %c0_i32_1 = arith.constant 0 : i32
    return %c0_i32, %c0_i32_0 : i32, i32
  }
  func.func @transform_3(%arg0: i32) -> (i32, i32) {
    %c0_i32 = arith.constant 0 : i32
    %c0_i32_0 = arith.constant 0 : i32
    %c0_i32_1 = arith.constant 0 : i32
    return %c0_i32, %c0_i32_0 : i32, i32
  }
  func.func @transform_4(%arg0: i32) -> (i32, i32, i32) {
    %c0_i32 = arith.constant 0 : i32
    %c0_i32_0 = arith.constant 0 : i32
    %c0_i32_1 = arith.constant 0 : i32
    return %arg0, %c0_i32, %c0_i32_0 : i32, i32, i32
  }
}

</mosaic_0001>

<llo_original>
// kernel: upsample_block_forward.1
$region0: #{upsample_block_forward.1}
  #allocation0 [shape = 'u32[]', space=smem, size = 0x4, offset = 0x4, fixed_abs, tag = 'smem constant byte address 0x4 - core index']
  #allocation1 [shape = 'u32[144,128]{1,0:T(1,128)}', space=vmem, size = 0x12000, scoped, tag = 'internal scratch']
  #allocation2 [shape = 'f32[18,18,4]{2,1,0:T(8,128)}', space=vmem, size = 0x36000, scoped, tag = 'scratch operand']
  %s0 = inlined_call_operand.vmem [shape: f32[2,256,4], index: 0, kind: input, shape index: {}]
  %s1 = inlined_call_operand.vmem [shape: f32[4,40], index: 1, kind: input, shape index: {}]
  %s2 = inlined_call_operand.vmem [shape: f32[1,4], index: 2, kind: input, shape index: {}]
  %s3 = inlined_call_operand.vmem [shape: f32[1,4], index: 3, kind: input, shape index: {}]
  %s4 = inlined_call_operand.vmem [shape: f32[2,4,256], index: 4, kind: output, shape index: {}]
  %s5 = sld [smem:[#allocation0]]
  $region49: #{upsample_block_forward.1} parent=0
    _
  %s7 = ssub.s32 1, %s5
  %s8 = scalar_select 0, %s7, %s5
  loop: start=0, step=1, limit=4
  $region2: #{upsample_block_forward.1} parent=0 // loop_pre_header
    _
  $region3: #{upsample_block_forward.1} parent=0 // loop_header
    %s10 = sphi 0, %s14
    %p11 = scmp.ge.s32.totalorder %s10, 4
    %s20 = sphi 0, %s22
    %s23 = sphi 0, %s20
    %s24 = sphi 0, %s23
    %s40 = sphi 0, %s24
    %s44 = sphi 0, %s44
    %s46 = sphi 0, %s44
    %s47 = sphi 0, %s46
    %s61 = sphi 0, %s47
    %s65 = sphi 0, %s65
    %s67 = sphi 0, %s65
    %s68 = sphi 0, %s67
    %s82 = sphi 0, %s68
    %s86 = sphi 0, %s86
    %s88 = sphi 0, %s86
    %s89 = sphi 0, %s88
    %s103 = sphi 0, %s89
    %s109 = sphi 0, %s111
    %s112 = sphi 0, %s109
    %s113 = sphi 0, %s112
    %s129 = sphi 0, %s113
  $region4: #{upsample_block_forward.1} parent=0 // loop_header_branch
    %13 = sbr.rel (%p11) target = $region8
  $region5: #{upsample_block_forward.1} parent=0 // loop_body
    %s15 = ssub.s32 %s10, 1
    %s16 = ssub.s32 %s10, 2
    %s17 = sadd.s32 %s10, 1
    %s18 = ssub.s32 %s10, %s17
    %p19 = scmp.eq.s32.totalorder %s18, 0
    %s21 = sadd.s32 %s20, 1
    %s22 = scalar_select %p19, %s20, %s21
    %p25 = pneg %p19
    %p26 = scmp.eq.s32.totalorder %s10, 1
    %p27 = por %p25, %p26
    %p28 = scmp.ne.s32.totalorder %s20, %s23
    %p29 = scmp.eq.s32.totalorder %s10, 0
    %p30 = por %p28, %p29
    %p31 = scmp.ne.s32.totalorder %s20, %s23
    %p32 = scmp.eq.s32.totalorder %s15, 1
    %p33 = por %p31, %p32
    %p34 = scmp.ne.s32.totalorder %s23, %s24
    %p35 = scmp.eq.s32.totalorder %s15, 0
    %p36 = por %p34, %p35
    %p37 = scmp.ne.s32.totalorder %s23, %s24
    %p38 = scmp.eq.s32.totalorder %s16, 1
    %p39 = por %p37, %p38
    %p41 = scmp.ne.s32.totalorder %s24, %s40
    %p42 = scmp.eq.s32.totalorder %s16, 0
    %p43 = por %p41, %p42
    %s45 = sadd.s32 %s44, 1
    %p48 = scmp.eq.s32.totalorder %s10, 1
    %p49 = scmp.ne.s32.totalorder %s44, %s46
    %p50 = scmp.eq.s32.totalorder %s10, 0
    %p51 = por %p49, %p50
    %p52 = scmp.ne.s32.totalorder %s44, %s46
    %p53 = scmp.eq.s32.totalorder %s15, 1
    %p54 = por %p52, %p53
    %p55 = scmp.ne.s32.totalorder %s46, %s47
    %p56 = scmp.eq.s32.totalorder %s15, 0
    %p57 = por %p55, %p56
    %p58 = scmp.ne.s32.totalorder %s46, %s47
    %p59 = scmp.eq.s32.totalorder %s16, 1
    %p60 = por %p58, %p59
    %p62 = scmp.ne.s32.totalorder %s47, %s61
    %p63 = scmp.eq.s32.totalorder %s16, 0
    %p64 = por %p62, %p63
    %s66 = sadd.s32 %s65, 1
    %p69 = scmp.eq.s32.totalorder %s10, 1
    %p70 = scmp.ne.s32.totalorder %s65, %s67
    %p71 = scmp.eq.s32.totalorder %s10, 0
    %p72 = por %p70, %p71
    %p73 = scmp.ne.s32.totalorder %s65, %s67
    %p74 = scmp.eq.s32.totalorder %s15, 1
    %p75 = por %p73, %p74
    %p76 = scmp.ne.s32.totalorder %s67, %s68
    %p77 = scmp.eq.s32.totalorder %s15, 0
    %p78 = por %p76, %p77
    %p79 = scmp.ne.s32.totalorder %s67, %s68
    %p80 = scmp.eq.s32.totalorder %s16, 1
    %p81 = por %p79, %p80
    %p83 = scmp.ne.s32.totalorder %s68, %s82
    %p84 = scmp.eq.s32.totalorder %s16, 0
    %p85 = por %p83, %p84
    %s87 = sadd.s32 %s86, 1
    %p90 = scmp.eq.s32.totalorder %s10, 1
    %p91 = scmp.ne.s32.totalorder %s86, %s88
    %p92 = scmp.eq.s32.totalorder %s10, 0
    %p93 = por %p91, %p92
    %p94 = scmp.ne.s32.totalorder %s86, %s88
    %p95 = scmp.eq.s32.totalorder %s15, 1
    %p96 = por %p94, %p95
    %p97 = scmp.ne.s32.totalorder %s88, %s89
    %p98 = scmp.eq.s32.totalorder %s15, 0
    %p99 = por %p97, %p98
    %p100 = scmp.ne.s32.totalorder %s88, %s89
    %p101 = scmp.eq.s32.totalorder %s16, 1
    %p102 = por %p100, %p101
    %p104 = scmp.ne.s32.totalorder %s89, %s103
    %p105 = scmp.eq.s32.totalorder %s16, 0
    %p106 = por %p104, %p105
    %s107 = ssub.s32 %s10, %s17
    %p108 = scmp.eq.s32.totalorder %s107, 0
    %s110 = sadd.s32 %s109, 1
    %s111 = scalar_select %p108, %s109, %s110
    %p114 = pneg %p108
    %p115 = scmp.eq.s32.totalorder %s10, 1
    %p116 = por %p114, %p115
    %p117 = scmp.ne.s32.totalorder %s109, %s112
    %p118 = scmp.eq.s32.totalorder %s10, 0
    %p119 = por %p117, %p118
    %p120 = scmp.ne.s32.totalorder %s109, %s112
    %p121 = scmp.eq.s32.totalorder %s15, 1
    %p122 = por %p120, %p121
    %p123 = scmp.ne.s32.totalorder %s112, %s113
    %p124 = scmp.eq.s32.totalorder %s15, 0
    %p125 = por %p123, %p124
    %p126 = scmp.ne.s32.totalorder %s112, %s113
    %p127 = scmp.eq.s32.totalorder %s16, 1
    %p128 = por %p126, %p127
    %p130 = scmp.ne.s32.totalorder %s113, %s129
    %p131 = scmp.eq.s32.totalorder %s16, 0
    %p132 = por %p130, %p131
    %p133 = scmp.le.s32.totalorder 1, %s10
    %p134 = scmp.lt.s32.totalorder %s10, 3
    %p135 = pnand %p133, %p134
    %p136 = pneg %p135
    // Predicated region
    $region9: #{upsample_block_forward.1} parent=5 // pred_check
      _
    $region10: #{upsample_block_forward.1} parent=5 // pred_check_branch
      %138 = sbr.rel (%p135) target = $region12
    $region11: #{upsample_block_forward.1} parent=5 // pred_region
      %s139 = ssub.s32 %s10, 1
      // Predicated region
      $region13: #{upsample_block_forward.1} parent=11 // pred_check
        %p140 = pneg %p57
      $region14: #{upsample_block_forward.1} parent=11 // pred_check_branch
        %142 = sbr.rel (%p140) target = $region16
      $region15: #{upsample_block_forward.1} parent=11 // pred_region
        _
      $region16: #{upsample_block_forward.1} parent=11 // pred_fallthru
        _
      // Predicated region
      $region17: #{upsample_block_forward.1} parent=11 // pred_check
        %p143 = pneg %p78
      $region18: #{upsample_block_forward.1} parent=11 // pred_check_branch
        %145 = sbr.rel (%p143) target = $region20
      $region19: #{upsample_block_forward.1} parent=11 // pred_region
        _
      $region20: #{upsample_block_forward.1} parent=11 // pred_fallthru
        _
      // Predicated region
      $region21: #{upsample_block_forward.1} parent=11 // pred_check
        %p146 = pneg %p99
      $region22: #{upsample_block_forward.1} parent=11 // pred_check_branch
        %148 = sbr.rel (%p146) target = $region24
      $region23: #{upsample_block_forward.1} parent=11 // pred_region
        _
      $region24: #{upsample_block_forward.1} parent=11 // pred_fallthru
        _
    $region12: #{upsample_block_forward.1} parent=5 // pred_fallthru
      _
    %p149 = scmp.lt.s32.totalorder %s10, 2
    // Predicated region
    $region25: #{upsample_block_forward.1} parent=5 // pred_check
      %p150 = pneg %p149
    $region26: #{upsample_block_forward.1} parent=5 // pred_check_branch
      %152 = sbr.rel (%p150) target = $region28
    $region27: #{upsample_block_forward.1} parent=5 // pred_region
      // Predicated region
      $region29: #{upsample_block_forward.1} parent=27 // pred_check
        %p153 = pneg %p30
      $region30: #{upsample_block_forward.1} parent=27 // pred_check_branch
        %155 = sbr.rel (%p153) target = $region32
      $region31: #{upsample_block_forward.1} parent=27 // pred_region
        %p156 = scmp.lt.s32.totalorder %s10, 1
        %s157 = scalar_select %p156, %s10, 1
        %s158 = smul.addr %s157, 32
        %s159 = smul.addr %s158, 8
        %s160 = scalar_lea.vmem %s0, %s159
      $region32: #{upsample_block_forward.1} parent=27 // pred_fallthru
        _
    $region28: #{upsample_block_forward.1} parent=5 // pred_fallthru
      _
    %p161 = scmp.le.s32.totalorder 1, %s10
    %p162 = scmp.lt.s32.totalorder %s10, 3
    %p163 = pnand %p161, %p162
    %p164 = pneg %p163
    // Predicated region
    $region33: #{upsample_block_forward.1} parent=5 // pred_check
      _
    $region34: #{upsample_block_forward.1} parent=5 // pred_check_branch
      %166 = sbr.rel (%p163) target = $region36
    $region35: #{upsample_block_forward.1} parent=5 // pred_region
      %s167 = ssub.s32 %s10, 1
      %p168 = scmp.lt.s32.totalorder %s15, 1
      %s169 = scalar_select %p168, %s15, 1
      %s170 = smul.addr %s169, 32
      %s171 = smul.addr %s170, 8
      %s172 = scalar_lea.vmem %s0, %s171
      %p173 = pneg %p36
      %p174 = pneg %p33
      %p175 = pneg %p57
      %p176 = pneg %p54
      %p177 = pneg %p78
      %p178 = pneg %p75
      %p179 = pneg %p99
      %p180 = pneg %p96
      %p181 = pneg %p125
      %p182 = pneg %p122
      %p183 = scmp.lt.s32.totalorder %s15, 1
      %s184 = scalar_select %p183, %s15, 1
      %s185 = smul.addr %s184, 2
      %s186 = smul.addr %s185, 4
      %s187 = scalar_lea.vmem %s4, %s186
      %p188 = scmp.lt.s32.totalorder %s15, 1
      %s189 = scalar_select %p188, %s15, 1
      %s190 = smul.addr %s189, 32
      %s191 = smul.addr %s190, 8
      %s192 = scalar_lea.vmem %s0, %s191
      %p193 = scmp.lt.s32.totalorder %s15, 1
      %s194 = scalar_select %p193, %s15, 1
      %s195 = smul.addr %s194, 2
      %s196 = smul.addr %s195, 4
      %s197 = scalar_lea.vmem %s4, %s196
      %v198 = vld [vmem:[%s2] sm:$0x1]
      %v199 = vld [vmem:[%s3] sm:$0x1]
      %v200 = vld [vmem:[%s1] sm:$0xf]
      %vm201 = vcmask 31744
      %202 = vst.msk [vmem:[#allocation2] sm:$0xff] %vm201, 0.0
      %203 = vst.msk [vmem:[#allocation2 + $0x8] sm:$0xff] %vm201, 0.0
      %vm204 = vcmask 25600
      %205 = vst.msk [vmem:[#allocation2 + $0x10] sm:$0x3] %vm204, 0.0
      %s206 = scalar_lea.vmem [#allocation2], 408
      %207 = vst.msk [vmem:[%s206] sm:$0xff] %vm201, 0.0
      %208 = vst.msk [vmem:[%s206 + $0x8] sm:$0xff] %vm201, 0.0
      %209 = vst.msk [vmem:[%s206 + $0x10] sm:$0x3] %vm204, 0.0
      %vm210 = vcmask 24576
      %211 = vst.msk [vmem:[#allocation2] sm:$0x1] %vm210, 0.0
      %212 = vst.msk [vmem:[#allocation2 + $0x18] sm:$0x1] %vm210, 0.0
      %213 = vst.msk [vmem:[#allocation2 + $0x30] sm:$0x1] %vm210, 0.0
      %214 = vst.msk [vmem:[#allocation2 + $0x48] sm:$0x1] %vm210, 0.0
      %215 = vst.msk [vmem:[#allocation2 + $0x60] sm:$0x1] %vm210, 0.0
      %216 = vst.msk [vmem:[#allocation2 + $0x78] sm:$0x1] %vm210, 0.0
      %217 = vst.msk [vmem:[#allocation2 + $0x90] sm:$0x1] %vm210, 0.0
      %218 = vst.msk [vmem:[#allocation2 + $0xa8] sm:$0x1] %vm210, 0.0
      %219 = vst.msk [vmem:[#allocation2 + $0xc0] sm:$0x1] %vm210, 0.0
      %220 = vst.msk [vmem:[#allocation2 + $0xd8] sm:$0x1] %vm210, 0.0
      %221 = vst.msk [vmem:[#allocation2 + $0xf0] sm:$0x1] %vm210, 0.0
      %222 = vst.msk [vmem:[#allocation2 + $0x108] sm:$0x1] %vm210, 0.0
      %223 = vst.msk [vmem:[#allocation2 + $0x120] sm:$0x1] %vm210, 0.0
      %224 = vst.msk [vmem:[#allocation2 + $0x138] sm:$0x1] %vm210, 0.0
      %225 = vst.msk [vmem:[#allocation2 + $0x150] sm:$0x1] %vm210, 0.0
      %226 = vst.msk [vmem:[#allocation2 + $0x168] sm:$0x1] %vm210, 0.0
      %227 = vst.msk [vmem:[#allocation2 + $0x180] sm:$0x1] %vm210, 0.0
      %228 = vst.msk [vmem:[#allocation2 + $0x198] sm:$0x1] %vm210, 0.0
      %229 = vst.msk [vmem:[#allocation2 + $0x11] sm:$0x1] %vm210, 0.0
      %230 = vst.msk [vmem:[#allocation2 + $0x29] sm:$0x1] %vm210, 0.0
      %231 = vst.msk [vmem:[#allocation2 + $0x41] sm:$0x1] %vm210, 0.0
      %232 = vst.msk [vmem:[#allocation2 + $0x59] sm:$0x1] %vm210, 0.0
      %233 = vst.msk [vmem:[#allocation2 + $0x71] sm:$0x1] %vm210, 0.0
      %234 = vst.msk [vmem:[#allocation2 + $0x89] sm:$0x1] %vm210, 0.0
      %235 = vst.msk [vmem:[#allocation2 + $0xa1] sm:$0x1] %vm210, 0.0
      %236 = vst.msk [vmem:[#allocation2 + $0xb9] sm:$0x1] %vm210, 0.0
      %237 = vst.msk [vmem:[#allocation2 + $0xd1] sm:$0x1] %vm210, 0.0
      %238 = vst.msk [vmem:[#allocation2 + $0xe9] sm:$0x1] %vm210, 0.0
      %239 = vst.msk [vmem:[#allocation2 + $0x101] sm:$0x1] %vm210, 0.0
      %240 = vst.msk [vmem:[#allocation2 + $0x119] sm:$0x1] %vm210, 0.0
      %241 = vst.msk [vmem:[#allocation2 + $0x131] sm:$0x1] %vm210, 0.0
      %242 = vst.msk [vmem:[#allocation2 + $0x149] sm:$0x1] %vm210, 0.0
      %243 = vst.msk [vmem:[#allocation2 + $0x161] sm:$0x1] %vm210, 0.0
      %244 = vst.msk [vmem:[#allocation2 + $0x179] sm:$0x1] %vm210, 0.0
      %245 = vst.msk [vmem:[#allocation2 + $0x191] sm:$0x1] %vm210, 0.0
      %246 = vst.msk [vmem:[#allocation2 + $0x1a9] sm:$0x1] %vm210, 0.0
      %v247 = vld [vmem:[%s192] sm:$0xff]
      %v248 = vld [vmem:[%s192 + $0x8] sm:$0xff]
      %v249 = vld [vmem:[%s192 + $0x10] sm:$0xff]
      %v250 = vld [vmem:[%s192 + $0x18] sm:$0xff]
      %v251 = vld [vmem:[%s192 + $0x20] sm:$0xff]
      %v252 = vld [vmem:[%s192 + $0x28] sm:$0xff]
      %v253 = vld [vmem:[%s192 + $0x30] sm:$0xff]
      %v254 = vld [vmem:[%s192 + $0x38] sm:$0xff]
      %v255 = vld [vmem:[%s192 + $0x40] sm:$0xff]
      %v256 = vld [vmem:[%s192 + $0x48] sm:$0xff]
      %v257 = vld [vmem:[%s192 + $0x50] sm:$0xff]
      %v258 = vld [vmem:[%s192 + $0x58] sm:$0xff]
      %v259 = vld [vmem:[%s192 + $0x60] sm:$0xff]
      %v260 = vld [vmem:[%s192 + $0x68] sm:$0xff]
      %v261 = vld [vmem:[%s192 + $0x70] sm:$0xff]
      %v262 = vld [vmem:[%s192 + $0x78] sm:$0xff]
      %v263 = vld [vmem:[%s192 + $0x80] sm:$0xff]
      %v264 = vld [vmem:[%s192 + $0x88] sm:$0xff]
      %v265 = vld [vmem:[%s192 + $0x90] sm:$0xff]
      %v266 = vld [vmem:[%s192 + $0x98] sm:$0xff]
      %v267 = vld [vmem:[%s192 + $0xa0] sm:$0xff]
      %v268 = vld [vmem:[%s192 + $0xa8] sm:$0xff]
      %v269 = vld [vmem:[%s192 + $0xb0] sm:$0xff]
      %v270 = vld [vmem:[%s192 + $0xb8] sm:$0xff]
      %v271 = vld [vmem:[%s192 + $0xc0] sm:$0xff]
      %v272 = vld [vmem:[%s192 + $0xc8] sm:$0xff]
      %v273 = vld [vmem:[%s192 + $0xd0] sm:$0xff]
      %v274 = vld [vmem:[%s192 + $0xd8] sm:$0xff]
      %v275 = vld [vmem:[%s192 + $0xe0] sm:$0xff]
      %v276 = vld [vmem:[%s192 + $0xe8] sm:$0xff]
      %v277 = vld [vmem:[%s192 + $0xf0] sm:$0xff]
      %v278 = vld [vmem:[%s192 + $0xf8] sm:$0xff]
      %v280 = vlaneseq
      %v281 = vshrl.u32 %v280, 7
      %v282 = vsub.s32 0, %v281
      %v283 = vrot.slane %v198, %v282
      %v285 = vmul.f32 %v247, %v283
      %v286 = vmul.f32 %v248, %v283
      %v287 = vmul.f32 %v249, %v283
      %v288 = vmul.f32 %v250, %v283
      %v289 = vmul.f32 %v251, %v283
      %v290 = vmul.f32 %v252, %v283
      %v291 = vmul.f32 %v253, %v283
      %v292 = vmul.f32 %v254, %v283
      %v293 = vmul.f32 %v255, %v283
      %v294 = vmul.f32 %v256, %v283
      %v295 = vmul.f32 %v257, %v283
      %v296 = vmul.f32 %v258, %v283
      %v297 = vmul.f32 %v259, %v283
      %v298 = vmul.f32 %v260, %v283
      %v299 = vmul.f32 %v261, %v283
      %v300 = vmul.f32 %v262, %v283
      %v301 = vmul.f32 %v263, %v283
      %v302 = vmul.f32 %v264, %v283
      %v303 = vmul.f32 %v265, %v283
      %v304 = vmul.f32 %v266, %v283
      %v305 = vmul.f32 %v267, %v283
      %v306 = vmul.f32 %v268, %v283
      %v307 = vmul.f32 %v269, %v283
      %v308 = vmul.f32 %v270, %v283
      %v309 = vmul.f32 %v271, %v283
      %v310 = vmul.f32 %v272, %v283
      %v311 = vmul.f32 %v273, %v283
      %v312 = vmul.f32 %v274, %v283
      %v313 = vmul.f32 %v275, %v283
      %v314 = vmul.f32 %v276, %v283
      %v315 = vmul.f32 %v277, %v283
      %v316 = vmul.f32 %v278, %v283
      %v318 = vlaneseq
      %v319 = vshrl.u32 %v318, 7
      %v320 = vsub.s32 0, %v319
      %v321 = vrot.slane %v199, %v320
      %v323 = vadd.f32 %v285, %v321
      %v324 = vadd.f32 %v286, %v321
      %v325 = vadd.f32 %v287, %v321
      %v326 = vadd.f32 %v288, %v321
      %v327 = vadd.f32 %v289, %v321
      %v328 = vadd.f32 %v290, %v321
      %v329 = vadd.f32 %v291, %v321
      %v330 = vadd.f32 %v292, %v321
      %v331 = vadd.f32 %v293, %v321
      %v332 = vadd.f32 %v294, %v321
      %v333 = vadd.f32 %v295, %v321
      %v334 = vadd.f32 %v296, %v321
      %v335 = vadd.f32 %v297, %v321
      %v336 = vadd.f32 %v298, %v321
      %v337 = vadd.f32 %v299, %v321
      %v338 = vadd.f32 %v300, %v321
      %v339 = vadd.f32 %v301, %v321
      %v340 = vadd.f32 %v302, %v321
      %v341 = vadd.f32 %v303, %v321
      %v342 = vadd.f32 %v304, %v321
      %v343 = vadd.f32 %v305, %v321
      %v344 = vadd.f32 %v306, %v321
      %v345 = vadd.f32 %v307, %v321
      %v346 = vadd.f32 %v308, %v321
      %v347 = vadd.f32 %v309, %v321
      %v348 = vadd.f32 %v310, %v321
      %v349 = vadd.f32 %v311, %v321
      %v350 = vadd.f32 %v312, %v321
      %v351 = vadd.f32 %v313, %v321
      %v352 = vadd.f32 %v314, %v321
      %v353 = vadd.f32 %v315, %v321
      %v354 = vadd.f32 %v316, %v321
      %v355 = vmax.f32 %v323, 0.0
      %v356 = vmax.f32 %v324, 0.0
      %v357 = vmax.f32 %v325, 0.0
      %v358 = vmax.f32 %v326, 0.0
      %v359 = vmax.f32 %v327, 0.0
      %v360 = vmax.f32 %v328, 0.0
      %v361 = vmax.f32 %v329, 0.0
      %v362 = vmax.f32 %v330, 0.0
      %v363 = vmax.f32 %v331, 0.0
      %v364 = vmax.f32 %v332, 0.0
      %v365 = vmax.f32 %v333, 0.0
      %v366 = vmax.f32 %v334, 0.0
      %v367 = vmax.f32 %v335, 0.0
      %v368 = vmax.f32 %v336, 0.0
      %v369 = vmax.f32 %v337, 0.0
      %v370 = vmax.f32 %v338, 0.0
      %v371 = vmax.f32 %v339, 0.0
      %v372 = vmax.f32 %v340, 0.0
      %v373 = vmax.f32 %v341, 0.0
      %v374 = vmax.f32 %v342, 0.0
      %v375 = vmax.f32 %v343, 0.0
      %v376 = vmax.f32 %v344, 0.0
      %v377 = vmax.f32 %v345, 0.0
      %v378 = vmax.f32 %v346, 0.0
      %v379 = vmax.f32 %v347, 0.0
      %v380 = vmax.f32 %v348, 0.0
      %v381 = vmax.f32 %v349, 0.0
      %v382 = vmax.f32 %v350, 0.0
      %v383 = vmax.f32 %v351, 0.0
      %v384 = vmax.f32 %v352, 0.0
      %v385 = vmax.f32 %v353, 0.0
      %v386 = vmax.f32 %v354, 0.0
      %s387 = scalar_lea.vmem [#allocation2], 24
      %388 = vst.msk [vmem:[%s387 + $0x1] sm:$0xff] %vm201, %v355
      %389 = vst.msk [vmem:[%s387 + $0x9] sm:$0xff] %vm201, %v356
      %390 = vst.msk [vmem:[%s387 + $0x19] sm:$0xff] %vm201, %v357
      %391 = vst.msk [vmem:[%s387 + $0x21] sm:$0xff] %vm201, %v358
      %392 = vst.msk [vmem:[%s387 + $0x31] sm:$0xff] %vm201, %v359
      %393 = vst.msk [vmem:[%s387 + $0x39] sm:$0xff] %vm201, %v360
      %394 = vst.msk [vmem:[%s387 + $0x49] sm:$0xff] %vm201, %v361
      %395 = vst.msk [vmem:[%s387 + $0x51] sm:$0xff] %vm201, %v362
      %396 = vst.msk [vmem:[%s387 + $0x61] sm:$0xff] %vm201, %v363
      %397 = vst.msk [vmem:[%s387 + $0x69] sm:$0xff] %vm201, %v364
      %398 = vst.msk [vmem:[%s387 + $0x79] sm:$0xff] %vm201, %v365
      %399 = vst.msk [vmem:[%s387 + $0x81] sm:$0xff] %vm201, %v366
      %400 = vst.msk [vmem:[%s387 + $0x91] sm:$0xff] %vm201, %v367
      %401 = vst.msk [vmem:[%s387 + $0x99] sm:$0xff] %vm201, %v368
      %402 = vst.msk [vmem:[%s387 + $0xa9] sm:$0xff] %vm201, %v369
      %403 = vst.msk [vmem:[%s387 + $0xb1] sm:$0xff] %vm201, %v370
      %404 = vst.msk [vmem:[%s387 + $0xc1] sm:$0xff] %vm201, %v371
      %405 = vst.msk [vmem:[%s387 + $0xc9] sm:$0xff] %vm201, %v372
      %406 = vst.msk [vmem:[%s387 + $0xd9] sm:$0xff] %vm201, %v373
      %407 = vst.msk [vmem:[%s387 + $0xe1] sm:$0xff] %vm201, %v374
      %408 = vst.msk [vmem:[%s387 + $0xf1] sm:$0xff] %vm201, %v375
      %409 = vst.msk [vmem:[%s387 + $0xf9] sm:$0xff] %vm201, %v376
      %410 = vst.msk [vmem:[%s387 + $0x109] sm:$0xff] %vm201, %v377
      %411 = vst.msk [vmem:[%s387 + $0x111] sm:$0xff] %vm201, %v378
      %412 = vst.msk [vmem:[%s387 + $0x121] sm:$0xff] %vm201, %v379
      %413 = vst.msk [vmem:[%s387 + $0x129] sm:$0xff] %vm201, %v380
      %414 = vst.msk [vmem:[%s387 + $0x139] sm:$0xff] %vm201, %v381
      %415 = vst.msk [vmem:[%s387 + $0x141] sm:$0xff] %vm201, %v382
      %416 = vst.msk [vmem:[%s387 + $0x151] sm:$0xff] %vm201, %v383
      %417 = vst.msk [vmem:[%s387 + $0x159] sm:$0xff] %vm201, %v384
      %418 = vst.msk [vmem:[%s387 + $0x169] sm:$0xff] %vm201, %v385
      %419 = vst.msk [vmem:[%s387 + $0x171] sm:$0xff] %vm201, %v386
      %v420 = vld [vmem:[#allocation2] sm:$0xff]
      %v421 = vld [vmem:[#allocation2 + $0x8] sm:$0xff]
      %v422 = vld [vmem:[#allocation2 + $0x18] sm:$0xff]
      %v423 = vld [vmem:[#allocation2 + $0x20] sm:$0xff]
      %v424 = vld [vmem:[#allocation2 + $0x30] sm:$0xff]
      %v425 = vld [vmem:[#allocation2 + $0x38] sm:$0xff]
      %v426 = vld [vmem:[#allocation2 + $0x48] sm:$0xff]
      %v427 = vld [vmem:[#allocation2 + $0x50] sm:$0xff]
      %v428 = vld [vmem:[#allocation2 + $0x60] sm:$0xff]
      %v429 = vld [vmem:[#allocation2 + $0x68] sm:$0xff]
      %v430 = vld [vmem:[#allocation2 + $0x78] sm:$0xff]
      %v431 = vld [vmem:[#allocation2 + $0x80] sm:$0xff]
      %v432 = vld [vmem:[#allocation2 + $0x90] sm:$0xff]
      %v433 = vld [vmem:[#allocation2 + $0x98] sm:$0xff]
      %v434 = vld [vmem:[#allocation2 + $0xa8] sm:$0xff]
      %v435 = vld [vmem:[#allocation2 + $0xb0] sm:$0xff]
      %v436 = vld [vmem:[#allocation2 + $0xc0] sm:$0xff]
      %v437 = vld [vmem:[#allocation2 + $0xc8] sm:$0xff]
      %v438 = vld [vmem:[#allocation2 + $0xd8] sm:$0xff]
      %v439 = vld [vmem:[#allocation2 + $0xe0] sm:$0xff]
      %v440 = vld [vmem:[#allocation2 + $0xf0] sm:$0xff]
      %v441 = vld [vmem:[#allocation2 + $0xf8] sm:$0xff]
      %v442 = vld [vmem:[#allocation2 + $0x108] sm:$0xff]
      %v443 = vld [vmem:[#allocation2 + $0x110] sm:$0xff]
      %v444 = vld [vmem:[#allocation2 + $0x120] sm:$0xff]
      %v445 = vld [vmem:[#allocation2 + $0x128] sm:$0xff]
      %v446 = vld [vmem:[#allocation2 + $0x138] sm:$0xff]
      %v447 = vld [vmem:[#allocation2 + $0x140] sm:$0xff]
      %v448 = vld [vmem:[#allocation2 + $0x150] sm:$0xff]
      %v449 = vld [vmem:[#allocation2 + $0x158] sm:$0xff]
      %v450 = vld [vmem:[#allocation2 + $0x168] sm:$0xff]
      %v451 = vld [vmem:[#allocation2 + $0x170] sm:$0xff]
      %v452 = vld [vmem:[#allocation2 + $0x1] sm:$0xff]
      %v453 = vld [vmem:[#allocation2 + $0x9] sm:$0xff]
      %v454 = vld [vmem:[#allocation2 + $0x19] sm:$0xff]
      %v455 = vld [vmem:[#allocation2 + $0x21] sm:$0xff]
      %v456 = vld [vmem:[#allocation2 + $0x31] sm:$0xff]
      %v457 = vld [vmem:[#allocation2 + $0x39] sm:$0xff]
      %v458 = vld [vmem:[#allocation2 + $0x49] sm:$0xff]
      %v459 = vld [vmem:[#allocation2 + $0x51] sm:$0xff]
      %v460 = vld [vmem:[#allocation2 + $0x61] sm:$0xff]
      %v461 = vld [vmem:[#allocation2 + $0x69] sm:$0xff]
      %v462 = vld [vmem:[#allocation2 + $0x79] sm:$0xff]
      %v463 = vld [vmem:[#allocation2 + $0x81] sm:$0xff]
      %v464 = vld [vmem:[#allocation2 + $0x91] sm:$0xff]
      %v465 = vld [vmem:[#allocation2 + $0x99] sm:$0xff]
      %v466 = vld [vmem:[#allocation2 + $0xa9] sm:$0xff]
      %v467 = vld [vmem:[#allocation2 + $0xb1] sm:$0xff]
      %v468 = vld [vmem:[#allocation2 + $0xc1] sm:$0xff]
      %v469 = vld [vmem:[#allocation2 + $0xc9] sm:$0xff]
      %v470 = vld [vmem:[#allocation2 + $0xd9] sm:$0xff]
      %v471 = vld [vmem:[#allocation2 + $0xe1] sm:$0xff]
      %v472 = vld [vmem:[#allocation2 + $0xf1] sm:$0xff]
      %v473 = vld [vmem:[#allocation2 + $0xf9] sm:$0xff]
      %v474 = vld [vmem:[#allocation2 + $0x109] sm:$0xff]
      %v475 = vld [vmem:[#allocation2 + $0x111] sm:$0xff]
      %v476 = vld [vmem:[#allocation2 + $0x121] sm:$0xff]
      %v477 = vld [vmem:[#allocation2 + $0x129] sm:$0xff]
      %v478 = vld [vmem:[#allocation2 + $0x139] sm:$0xff]
      %v479 = vld [vmem:[#allocation2 + $0x141] sm:$0xff]
      %v480 = vld [vmem:[#allocation2 + $0x151] sm:$0xff]
      %v481 = vld [vmem:[#allocation2 + $0x159] sm:$0xff]
      %v482 = vld [vmem:[#allocation2 + $0x169] sm:$0xff]
      %v483 = vld [vmem:[#allocation2 + $0x171] sm:$0xff]
      %v484 = vld [vmem:[#allocation2 + $0x2] sm:$0xff]
      %v485 = vld [vmem:[#allocation2 + $0xa] sm:$0xff]
      %v486 = vld [vmem:[#allocation2 + $0x1a] sm:$0xff]
      %v487 = vld [vmem:[#allocation2 + $0x22] sm:$0xff]
      %v488 = vld [vmem:[#allocation2 + $0x32] sm:$0xff]
      %v489 = vld [vmem:[#allocation2 + $0x3a] sm:$0xff]
      %v490 = vld [vmem:[#allocation2 + $0x4a] sm:$0xff]
      %v491 = vld [vmem:[#allocation2 + $0x52] sm:$0xff]
      %v492 = vld [vmem:[#allocation2 + $0x62] sm:$0xff]
      %v493 = vld [vmem:[#allocation2 + $0x6a] sm:$0xff]
      %v494 = vld [vmem:[#allocation2 + $0x7a] sm:$0xff]
      %v495 = vld [vmem:[#allocation2 + $0x82] sm:$0xff]
      %v496 = vld [vmem:[#allocation2 + $0x92] sm:$0xff]
      %v497 = vld [vmem:[#allocation2 + $0x9a] sm:$0xff]
      %v498 = vld [vmem:[#allocation2 + $0xaa] sm:$0xff]
      %v499 = vld [vmem:[#allocation2 + $0xb2] sm:$0xff]
      %v500 = vld [vmem:[#allocation2 + $0xc2] sm:$0xff]
      %v501 = vld [vmem:[#allocation2 + $0xca] sm:$0xff]
      %v502 = vld [vmem:[#allocation2 + $0xda] sm:$0xff]
      %v503 = vld [vmem:[#allocation2 + $0xe2] sm:$0xff]
      %v504 = vld [vmem:[#allocation2 + $0xf2] sm:$0xff]
      %v505 = vld [vmem:[#allocation2 + $0xfa] sm:$0xff]
      %v506 = vld [vmem:[#allocation2 + $0x10a] sm:$0xff]
      %v507 = vld [vmem:[#allocation2 + $0x112] sm:$0xff]
      %v508 = vld [vmem:[#allocation2 + $0x122] sm:$0xff]
      %v509 = vld [vmem:[#allocation2 + $0x12a] sm:$0xff]
      %v510 = vld [vmem:[#allocation2 + $0x13a] sm:$0xff]
      %v511 = vld [vmem:[#allocation2 + $0x142] sm:$0xff]
      %v512 = vld [vmem:[#allocation2 + $0x152] sm:$0xff]
      %v513 = vld [vmem:[#allocation2 + $0x15a] sm:$0xff]
      %v514 = vld [vmem:[#allocation2 + $0x16a] sm:$0xff]
      %v515 = vld [vmem:[#allocation2 + $0x172] sm:$0xff]
      %v516 = vld [vmem:[%s387] sm:$0xff]
      %v517 = vld [vmem:[%s387 + $0x8] sm:$0xff]
      %v518 = vld [vmem:[%s387 + $0x18] sm:$0xff]
      %v519 = vld [vmem:[%s387 + $0x20] sm:$0xff]
      %v520 = vld [vmem:[%s387 + $0x30] sm:$0xff]
      %v521 = vld [vmem:[%s387 + $0x38] sm:$0xff]
      %v522 = vld [vmem:[%s387 + $0x48] sm:$0xff]
      %v523 = vld [vmem:[%s387 + $0x50] sm:$0xff]
      %v524 = vld [vmem:[%s387 + $0x60] sm:$0xff]
      %v525 = vld [vmem:[%s387 + $0x68] sm:$0xff]
      %v526 = vld [vmem:[%s387 + $0x78] sm:$0xff]
      %v527 = vld [vmem:[%s387 + $0x80] sm:$0xff]
      %v528 = vld [vmem:[%s387 + $0x90] sm:$0xff]
      %v529 = vld [vmem:[%s387 + $0x98] sm:$0xff]
      %v530 = vld [vmem:[%s387 + $0xa8] sm:$0xff]
      %v531 = vld [vmem:[%s387 + $0xb0] sm:$0xff]
      %v532 = vld [vmem:[%s387 + $0xc0] sm:$0xff]
      %v533 = vld [vmem:[%s387 + $0xc8] sm:$0xff]
      %v534 = vld [vmem:[%s387 + $0xd8] sm:$0xff]
      %v535 = vld [vmem:[%s387 + $0xe0] sm:$0xff]
      %v536 = vld [vmem:[%s387 + $0xf0] sm:$0xff]
      %v537 = vld [vmem:[%s387 + $0xf8] sm:$0xff]
      %v538 = vld [vmem:[%s387 + $0x108] sm:$0xff]
      %v539 = vld [vmem:[%s387 + $0x110] sm:$0xff]
      %v540 = vld [vmem:[%s387 + $0x120] sm:$0xff]
      %v541 = vld [vmem:[%s387 + $0x128] sm:$0xff]
      %v542 = vld [vmem:[%s387 + $0x138] sm:$0xff]
      %v543 = vld [vmem:[%s387 + $0x140] sm:$0xff]
      %v544 = vld [vmem:[%s387 + $0x150] sm:$0xff]
      %v545 = vld [vmem:[%s387 + $0x158] sm:$0xff]
      %v546 = vld [vmem:[%s387 + $0x168] sm:$0xff]
      %v547 = vld [vmem:[%s387 + $0x170] sm:$0xff]
      %v548 = vld [vmem:[%s387 + $0x1] sm:$0xff]
      %v549 = vld [vmem:[%s387 + $0x9] sm:$0xff]
      %v550 = vld [vmem:[%s387 + $0x19] sm:$0xff]
      %v551 = vld [vmem:[%s387 + $0x21] sm:$0xff]
      %v552 = vld [vmem:[%s387 + $0x31] sm:$0xff]
      %v553 = vld [vmem:[%s387 + $0x39] sm:$0xff]
      %v554 = vld [vmem:[%s387 + $0x49] sm:$0xff]
      %v555 = vld [vmem:[%s387 + $0x51] sm:$0xff]
      %v556 = vld [vmem:[%s387 + $0x61] sm:$0xff]
      %v557 = vld [vmem:[%s387 + $0x69] sm:$0xff]
      %v558 = vld [vmem:[%s387 + $0x79] sm:$0xff]
      %v559 = vld [vmem:[%s387 + $0x81] sm:$0xff]
      %v560 = vld [vmem:[%s387 + $0x91] sm:$0xff]
      %v561 = vld [vmem:[%s387 + $0x99] sm:$0xff]
      %v562 = vld [vmem:[%s387 + $0xa9] sm:$0xff]
      %v563 = vld [vmem:[%s387 + $0xb1] sm:$0xff]
      %v564 = vld [vmem:[%s387 + $0xc1] sm:$0xff]
      %v565 = vld [vmem:[%s387 + $0xc9] sm:$0xff]
      %v566 = vld [vmem:[%s387 + $0xd9] sm:$0xff]
      %v567 = vld [vmem:[%s387 + $0xe1] sm:$0xff]
      %v568 = vld [vmem:[%s387 + $0xf1] sm:$0xff]
      %v569 = vld [vmem:[%s387 + $0xf9] sm:$0xff]
      %v570 = vld [vmem:[%s387 + $0x109] sm:$0xff]
      %v571 = vld [vmem:[%s387 + $0x111] sm:$0xff]
      %v572 = vld [vmem:[%s387 + $0x121] sm:$0xff]
      %v573 = vld [vmem:[%s387 + $0x129] sm:$0xff]
      %v574 = vld [vmem:[%s387 + $0x139] sm:$0xff]
      %v575 = vld [vmem:[%s387 + $0x141] sm:$0xff]
      %v576 = vld [vmem:[%s387 + $0x151] sm:$0xff]
      %v577 = vld [vmem:[%s387 + $0x159] sm:$0xff]
      %v578 = vld [vmem:[%s387 + $0x169] sm:$0xff]
      %v579 = vld [vmem:[%s387 + $0x171] sm:$0xff]
      %v580 = vld [vmem:[%s387 + $0x2] sm:$0xff]
      %v581 = vld [vmem:[%s387 + $0xa] sm:$0xff]
      %v582 = vld [vmem:[%s387 + $0x1a] sm:$0xff]
      %v583 = vld [vmem:[%s387 + $0x22] sm:$0xff]
      %v584 = vld [vmem:[%s387 + $0x32] sm:$0xff]
      %v585 = vld [vmem:[%s387 + $0x3a] sm:$0xff]
      %v586 = vld [vmem:[%s387 + $0x4a] sm:$0xff]
      %v587 = vld [vmem:[%s387 + $0x52] sm:$0xff]
      %v588 = vld [vmem:[%s387 + $0x62] sm:$0xff]
      %v589 = vld [vmem:[%s387 + $0x6a] sm:$0xff]
      %v590 = vld [vmem:[%s387 + $0x7a] sm:$0xff]
      %v591 = vld [vmem:[%s387 + $0x82] sm:$0xff]
      %v592 = vld [vmem:[%s387 + $0x92] sm:$0xff]
      %v593 = vld [vmem:[%s387 + $0x9a] sm:$0xff]
      %v594 = vld [vmem:[%s387 + $0xaa] sm:$0xff]
      %v595 = vld [vmem:[%s387 + $0xb2] sm:$0xff]
      %v596 = vld [vmem:[%s387 + $0xc2] sm:$0xff]
      %v597 = vld [vmem:[%s387 + $0xca] sm:$0xff]
      %v598 = vld [vmem:[%s387 + $0xda] sm:$0xff]
      %v599 = vld [vmem:[%s387 + $0xe2] sm:$0xff]
      %v600 = vld [vmem:[%s387 + $0xf2] sm:$0xff]
      %v601 = vld [vmem:[%s387 + $0xfa] sm:$0xff]
      %v602 = vld [vmem:[%s387 + $0x10a] sm:$0xff]
      %v603 = vld [vmem:[%s387 + $0x112] sm:$0xff]
      %v604 = vld [vmem:[%s387 + $0x122] sm:$0xff]
      %v605 = vld [vmem:[%s387 + $0x12a] sm:$0xff]
      %v606 = vld [vmem:[%s387 + $0x13a] sm:$0xff]
      %v607 = vld [vmem:[%s387 + $0x142] sm:$0xff]
      %v608 = vld [vmem:[%s387 + $0x152] sm:$0xff]
      %v609 = vld [vmem:[%s387 + $0x15a] sm:$0xff]
      %v610 = vld [vmem:[%s387 + $0x16a] sm:$0xff]
      %v611 = vld [vmem:[%s387 + $0x172] sm:$0xff]
      %s612 = scalar_lea.vmem [#allocation2], 48
      %v613 = vld [vmem:[%s612] sm:$0xff]
      %v614 = vld [vmem:[%s612 + $0x8] sm:$0xff]
      %v615 = vld [vmem:[%s612 + $0x18] sm:$0xff]
      %v616 = vld [vmem:[%s612 + $0x20] sm:$0xff]
      %v617 = vld [vmem:[%s612 + $0x30] sm:$0xff]
      %v618 = vld [vmem:[%s612 + $0x38] sm:$0xff]
      %v619 = vld [vmem:[%s612 + $0x48] sm:$0xff]
      %v620 = vld [vmem:[%s612 + $0x50] sm:$0xff]
      %v621 = vld [vmem:[%s612 + $0x60] sm:$0xff]
      %v622 = vld [vmem:[%s612 + $0x68] sm:$0xff]
      %v623 = vld [vmem:[%s612 + $0x78] sm:$0xff]
      %v624 = vld [vmem:[%s612 + $0x80] sm:$0xff]
      %v625 = vld [vmem:[%s612 + $0x90] sm:$0xff]
      %v626 = vld [vmem:[%s612 + $0x98] sm:$0xff]
      %v627 = vld [vmem:[%s612 + $0xa8] sm:$0xff]
      %v628 = vld [vmem:[%s612 + $0xb0] sm:$0xff]
      %v629 = vld [vmem:[%s612 + $0xc0] sm:$0xff]
      %v630 = vld [vmem:[%s612 + $0xc8] sm:$0xff]
      %v631 = vld [vmem:[%s612 + $0xd8] sm:$0xff]
      %v632 = vld [vmem:[%s612 + $0xe0] sm:$0xff]
      %v633 = vld [vmem:[%s612 + $0xf0] sm:$0xff]
      %v634 = vld [vmem:[%s612 + $0xf8] sm:$0xff]
      %v635 = vld [vmem:[%s612 + $0x108] sm:$0xff]
      %v636 = vld [vmem:[%s612 + $0x110] sm:$0xff]
      %v637 = vld [vmem:[%s612 + $0x120] sm:$0xff]
      %v638 = vld [vmem:[%s612 + $0x128] sm:$0xff]
      %v639 = vld [vmem:[%s612 + $0x138] sm:$0xff]
      %v640 = vld [vmem:[%s612 + $0x140] sm:$0xff]
      %v641 = vld [vmem:[%s612 + $0x150] sm:$0xff]
      %v642 = vld [vmem:[%s612 + $0x158] sm:$0xff]
      %v643 = vld [vmem:[%s612 + $0x168] sm:$0xff]
      %v644 = vld [vmem:[%s612 + $0x170] sm:$0xff]
      %v645 = vld [vmem:[%s612 + $0x1] sm:$0xff]
      %v646 = vld [vmem:[%s612 + $0x9] sm:$0xff]
      %v647 = vld [vmem:[%s612 + $0x19] sm:$0xff]
      %v648 = vld [vmem:[%s612 + $0x21] sm:$0xff]
      %v649 = vld [vmem:[%s612 + $0x31] sm:$0xff]
      %v650 = vld [vmem:[%s612 + $0x39] sm:$0xff]
      %v651 = vld [vmem:[%s612 + $0x49] sm:$0xff]
      %v652 = vld [vmem:[%s612 + $0x51] sm:$0xff]
      %v653 = vld [vmem:[%s612 + $0x61] sm:$0xff]
      %v654 = vld [vmem:[%s612 + $0x69] sm:$0xff]
      %v655 = vld [vmem:[%s612 + $0x79] sm:$0xff]
      %v656 = vld [vmem:[%s612 + $0x81] sm:$0xff]
      %v657 = vld [vmem:[%s612 + $0x91] sm:$0xff]
      %v658 = vld [vmem:[%s612 + $0x99] sm:$0xff]
      %v659 = vld [vmem:[%s612 + $0xa9] sm:$0xff]
      %v660 = vld [vmem:[%s612 + $0xb1] sm:$0xff]
      %v661 = vld [vmem:[%s612 + $0xc1] sm:$0xff]
      %v662 = vld [vmem:[%s612 + $0xc9] sm:$0xff]
      %v663 = vld [vmem:[%s612 + $0xd9] sm:$0xff]
      %v664 = vld [vmem:[%s612 + $0xe1] sm:$0xff]
      %v665 = vld [vmem:[%s612 + $0xf1] sm:$0xff]
      %v666 = vld [vmem:[%s612 + $0xf9] sm:$0xff]
      %v667 = vld [vmem:[%s612 + $0x109] sm:$0xff]
      %v668 = vld [vmem:[%s612 + $0x111] sm:$0xff]
      %v669 = vld [vmem:[%s612 + $0x121] sm:$0xff]
      %v670 = vld [vmem:[%s612 + $0x129] sm:$0xff]
      %v671 = vld [vmem:[%s612 + $0x139] sm:$0xff]
      %v672 = vld [vmem:[%s612 + $0x141] sm:$0xff]
      %v673 = vld [vmem:[%s612 + $0x151] sm:$0xff]
      %v674 = vld [vmem:[%s612 + $0x159] sm:$0xff]
      %v675 = vld [vmem:[%s612 + $0x169] sm:$0xff]
      %v676 = vld [vmem:[%s612 + $0x171] sm:$0xff]
      %v677 = vld [vmem:[%s612 + $0x2] sm:$0xff]
      %v678 = vld [vmem:[%s612 + $0xa] sm:$0xff]
      %v679 = vld [vmem:[%s612 + $0x1a] sm:$0xff]
      %v680 = vld [vmem:[%s612 + $0x22] sm:$0xff]
      %v681 = vld [vmem:[%s612 + $0x32] sm:$0xff]
      %v682 = vld [vmem:[%s612 + $0x3a] sm:$0xff]
      %v683 = vld [vmem:[%s612 + $0x4a] sm:$0xff]
      %v684 = vld [vmem:[%s612 + $0x52] sm:$0xff]
      %v685 = vld [vmem:[%s612 + $0x62] sm:$0xff]
      %v686 = vld [vmem:[%s612 + $0x6a] sm:$0xff]
      %v687 = vld [vmem:[%s612 + $0x7a] sm:$0xff]
      %v688 = vld [vmem:[%s612 + $0x82] sm:$0xff]
      %v689 = vld [vmem:[%s612 + $0x92] sm:$0xff]
      %v690 = vld [vmem:[%s612 + $0x9a] sm:$0xff]
      %v691 = vld [vmem:[%s612 + $0xaa] sm:$0xff]
      %v692 = vld [vmem:[%s612 + $0xb2] sm:$0xff]
      %v693 = vld [vmem:[%s612 + $0xc2] sm:$0xff]
      %v694 = vld [vmem:[%s612 + $0xca] sm:$0xff]
      %v695 = vld [vmem:[%s612 + $0xda] sm:$0xff]
      %v696 = vld [vmem:[%s612 + $0xe2] sm:$0xff]
      %v697 = vld [vmem:[%s612 + $0xf2] sm:$0xff]
      %v698 = vld [vmem:[%s612 + $0xfa] sm:$0xff]
      %v699 = vld [vmem:[%s612 + $0x10a] sm:$0xff]
      %v700 = vld [vmem:[%s612 + $0x112] sm:$0xff]
      %v701 = vld [vmem:[%s612 + $0x122] sm:$0xff]
      %v702 = vld [vmem:[%s612 + $0x12a] sm:$0xff]
      %v703 = vld [vmem:[%s612 + $0x13a] sm:$0xff]
      %v704 = vld [vmem:[%s612 + $0x142] sm:$0xff]
      %v705 = vld [vmem:[%s612 + $0x152] sm:$0xff]
      %v706 = vld [vmem:[%s612 + $0x15a] sm:$0xff]
      %v707 = vld [vmem:[%s612 + $0x16a] sm:$0xff]
      %v708 = vld [vmem:[%s612 + $0x172] sm:$0xff]
      %741 = vrot.lane.b32.xlu0 %v452, 4
      %v742 = vpop.permute.xlu0 %741
      %743 = vrot.lane.b32.xlu0 %v453, 4
      %v744 = vpop.permute.xlu0 %743
      %745 = vrot.lane.b32.xlu0 %v454, 4
      %v746 = vpop.permute.xlu0 %745
      %747 = vrot.lane.b32.xlu0 %v455, 4
      %v748 = vpop.permute.xlu0 %747
      %749 = vrot.lane.b32.xlu0 %v456, 4
      %v750 = vpop.permute.xlu0 %749
      %751 = vrot.lane.b32.xlu0 %v457, 4
      %v752 = vpop.permute.xlu0 %751
      %753 = vrot.lane.b32.xlu0 %v458, 4
      %v754 = vpop.permute.xlu0 %753
      %755 = vrot.lane.b32.xlu0 %v459, 4
      %v756 = vpop.permute.xlu0 %755
      %757 = vrot.lane.b32.xlu0 %v460, 4
      %v758 = vpop.permute.xlu0 %757
      %759 = vrot.lane.b32.xlu0 %v461, 4
      %v760 = vpop.permute.xlu0 %759
      %761 = vrot.lane.b32.xlu0 %v462, 4
      %v762 = vpop.permute.xlu0 %761
      %763 = vrot.lane.b32.xlu0 %v463, 4
      %v764 = vpop.permute.xlu0 %763
      %765 = vrot.lane.b32.xlu0 %v464, 4
      %v766 = vpop.permute.xlu0 %765
      %767 = vrot.lane.b32.xlu0 %v465, 4
      %v768 = vpop.permute.xlu0 %767
      %769 = vrot.lane.b32.xlu0 %v466, 4
      %v770 = vpop.permute.xlu0 %769
      %771 = vrot.lane.b32.xlu0 %v467, 4
      %v772 = vpop.permute.xlu0 %771
      %773 = vrot.lane.b32.xlu0 %v468, 4
      %v774 = vpop.permute.xlu0 %773
      %775 = vrot.lane.b32.xlu0 %v469, 4
      %v776 = vpop.permute.xlu0 %775
      %777 = vrot.lane.b32.xlu0 %v470, 4
      %v778 = vpop.permute.xlu0 %777
      %779 = vrot.lane.b32.xlu0 %v471, 4
      %v780 = vpop.permute.xlu0 %779
      %781 = vrot.lane.b32.xlu0 %v472, 4
      %v782 = vpop.permute.xlu0 %781
      %783 = vrot.lane.b32.xlu0 %v473, 4
      %v784 = vpop.permute.xlu0 %783
      %785 = vrot.lane.b32.xlu0 %v474, 4
      %v786 = vpop.permute.xlu0 %785
      %787 = vrot.lane.b32.xlu0 %v475, 4
      %v788 = vpop.permute.xlu0 %787
      %789 = vrot.lane.b32.xlu0 %v476, 4
      %v790 = vpop.permute.xlu0 %789
      %791 = vrot.lane.b32.xlu0 %v477, 4
      %v792 = vpop.permute.xlu0 %791
      %793 = vrot.lane.b32.xlu0 %v478, 4
      %v794 = vpop.permute.xlu0 %793
      %795 = vrot.lane.b32.xlu0 %v479, 4
      %v796 = vpop.permute.xlu0 %795
      %797 = vrot.lane.b32.xlu0 %v480, 4
      %v798 = vpop.permute.xlu0 %797
      %799 = vrot.lane.b32.xlu0 %v481, 4
      %v800 = vpop.permute.xlu0 %799
      %801 = vrot.lane.b32.xlu0 %v482, 4
      %v802 = vpop.permute.xlu0 %801
      %803 = vrot.lane.b32.xlu0 %v483, 4
      %v804 = vpop.permute.xlu0 %803
      %869 = vrot.lane.b32.xlu0 %v484, 8
      %v870 = vpop.permute.xlu0 %869
      %871 = vrot.lane.b32.xlu0 %v485, 8
      %v872 = vpop.permute.xlu0 %871
      %873 = vrot.lane.b32.xlu0 %v486, 8
      %v874 = vpop.permute.xlu0 %873
      %875 = vrot.lane.b32.xlu0 %v487, 8
      %v876 = vpop.permute.xlu0 %875
      %877 = vrot.lane.b32.xlu0 %v488, 8
      %v878 = vpop.permute.xlu0 %877
      %879 = vrot.lane.b32.xlu0 %v489, 8
      %v880 = vpop.permute.xlu0 %879
      %881 = vrot.lane.b32.xlu0 %v490, 8
      %v882 = vpop.permute.xlu0 %881
      %883 = vrot.lane.b32.xlu0 %v491, 8
      %v884 = vpop.permute.xlu0 %883
      %885 = vrot.lane.b32.xlu0 %v492, 8
      %v886 = vpop.permute.xlu0 %885
      %887 = vrot.lane.b32.xlu0 %v493, 8
      %v888 = vpop.permute.xlu0 %887
      %889 = vrot.lane.b32.xlu0 %v494, 8
      %v890 = vpop.permute.xlu0 %889
      %891 = vrot.lane.b32.xlu0 %v495, 8
      %v892 = vpop.permute.xlu0 %891
      %893 = vrot.lane.b32.xlu0 %v496, 8
      %v894 = vpop.permute.xlu0 %893
      %895 = vrot.lane.b32.xlu0 %v497, 8
      %v896 = vpop.permute.xlu0 %895
      %897 = vrot.lane.b32.xlu0 %v498, 8
      %v898 = vpop.permute.xlu0 %897
      %899 = vrot.lane.b32.xlu0 %v499, 8
      %v900 = vpop.permute.xlu0 %899
      %901 = vrot.lane.b32.xlu0 %v500, 8
      %v902 = vpop.permute.xlu0 %901
      %903 = vrot.lane.b32.xlu0 %v501, 8
      %v904 = vpop.permute.xlu0 %903
      %905 = vrot.lane.b32.xlu0 %v502, 8
      %v906 = vpop.permute.xlu0 %905
      %907 = vrot.lane.b32.xlu0 %v503, 8
      %v908 = vpop.permute.xlu0 %907
      %909 = vrot.lane.b32.xlu0 %v504, 8
      %v910 = vpop.permute.xlu0 %909
      %911 = vrot.lane.b32.xlu0 %v505, 8
      %v912 = vpop.permute.xlu0 %911
      %913 = vrot.lane.b32.xlu0 %v506, 8
      %v914 = vpop.permute.xlu0 %913
      %915 = vrot.lane.b32.xlu0 %v507, 8
      %v916 = vpop.permute.xlu0 %915
      %917 = vrot.lane.b32.xlu0 %v508, 8
      %v918 = vpop.permute.xlu0 %917
      %919 = vrot.lane.b32.xlu0 %v509, 8
      %v920 = vpop.permute.xlu0 %919
      %921 = vrot.lane.b32.xlu0 %v510, 8
      %v922 = vpop.permute.xlu0 %921
      %923 = vrot.lane.b32.xlu0 %v511, 8
      %v924 = vpop.permute.xlu0 %923
      %925 = vrot.lane.b32.xlu0 %v512, 8
      %v926 = vpop.permute.xlu0 %925
      %927 = vrot.lane.b32.xlu0 %v513, 8
      %v928 = vpop.permute.xlu0 %927
      %929 = vrot.lane.b32.xlu0 %v514, 8
      %v930 = vpop.permute.xlu0 %929
      %931 = vrot.lane.b32.xlu0 %v515, 8
      %v932 = vpop.permute.xlu0 %931
      %997 = vrot.lane.b32.xlu0 %v516, 12
      %v998 = vpop.permute.xlu0 %997
      %999 = vrot.lane.b32.xlu0 %v517, 12
      %v1000 = vpop.permute.xlu0 %999
      %1001 = vrot.lane.b32.xlu0 %v518, 12
      %v1002 = vpop.permute.xlu0 %1001
      %1003 = vrot.lane.b32.xlu0 %v519, 12
      %v1004 = vpop.permute.xlu0 %1003
      %1005 = vrot.lane.b32.xlu0 %v520, 12
      %v1006 = vpop.permute.xlu0 %1005
      %1007 = vrot.lane.b32.xlu0 %v521, 12
      %v1008 = vpop.permute.xlu0 %1007
      %1009 = vrot.lane.b32.xlu0 %v522, 12
      %v1010 = vpop.permute.xlu0 %1009
      %1011 = vrot.lane.b32.xlu0 %v523, 12
      %v1012 = vpop.permute.xlu0 %1011
      %1013 = vrot.lane.b32.xlu0 %v524, 12
      %v1014 = vpop.permute.xlu0 %1013
      %1015 = vrot.lane.b32.xlu0 %v525, 12
      %v1016 = vpop.permute.xlu0 %1015
      %1017 = vrot.lane.b32.xlu0 %v526, 12
      %v1018 = vpop.permute.xlu0 %1017
      %1019 = vrot.lane.b32.xlu0 %v527, 12
      %v1020 = vpop.permute.xlu0 %1019
      %1021 = vrot.lane.b32.xlu0 %v528, 12
      %v1022 = vpop.permute.xlu0 %1021
      %1023 = vrot.lane.b32.xlu0 %v529, 12
      %v1024 = vpop.permute.xlu0 %1023
      %1025 = vrot.lane.b32.xlu0 %v530, 12
      %v1026 = vpop.permute.xlu0 %1025
      %1027 = vrot.lane.b32.xlu0 %v531, 12
      %v1028 = vpop.permute.xlu0 %1027
      %1029 = vrot.lane.b32.xlu0 %v532, 12
      %v1030 = vpop.permute.xlu0 %1029
      %1031 = vrot.lane.b32.xlu0 %v533, 12
      %v1032 = vpop.permute.xlu0 %1031
      %1033 = vrot.lane.b32.xlu0 %v534, 12
      %v1034 = vpop.permute.xlu0 %1033
      %1035 = vrot.lane.b32.xlu0 %v535, 12
      %v1036 = vpop.permute.xlu0 %1035
      %1037 = vrot.lane.b32.xlu0 %v536, 12
      %v1038 = vpop.permute.xlu0 %1037
      %1039 = vrot.lane.b32.xlu0 %v537, 12
      %v1040 = vpop.permute.xlu0 %1039
      %1041 = vrot.lane.b32.xlu0 %v538, 12
      %v1042 = vpop.permute.xlu0 %1041
      %1043 = vrot.lane.b32.xlu0 %v539, 12
      %v1044 = vpop.permute.xlu0 %1043
      %1045 = vrot.lane.b32.xlu0 %v540, 12
      %v1046 = vpop.permute.xlu0 %1045
      %1047 = vrot.lane.b32.xlu0 %v541, 12
      %v1048 = vpop.permute.xlu0 %1047
      %1049 = vrot.lane.b32.xlu0 %v542, 12
      %v1050 = vpop.permute.xlu0 %1049
      %1051 = vrot.lane.b32.xlu0 %v543, 12
      %v1052 = vpop.permute.xlu0 %1051
      %1053 = vrot.lane.b32.xlu0 %v544, 12
      %v1054 = vpop.permute.xlu0 %1053
      %1055 = vrot.lane.b32.xlu0 %v545, 12
      %v1056 = vpop.permute.xlu0 %1055
      %1057 = vrot.lane.b32.xlu0 %v546, 12
      %v1058 = vpop.permute.xlu0 %1057
      %1059 = vrot.lane.b32.xlu0 %v547, 12
      %v1060 = vpop.permute.xlu0 %1059
      %1125 = vrot.lane.b32.xlu0 %v548, 16
      %v1126 = vpop.permute.xlu0 %1125
      %1127 = vrot.lane.b32.xlu0 %v549, 16
      %v1128 = vpop.permute.xlu0 %1127
      %1129 = vrot.lane.b32.xlu0 %v550, 16
      %v1130 = vpop.permute.xlu0 %1129
      %1131 = vrot.lane.b32.xlu0 %v551, 16
      %v1132 = vpop.permute.xlu0 %1131
      %1133 = vrot.lane.b32.xlu0 %v552, 16
      %v1134 = vpop.permute.xlu0 %1133
      %1135 = vrot.lane.b32.xlu0 %v553, 16
      %v1136 = vpop.permute.xlu0 %1135
      %1137 = vrot.lane.b32.xlu0 %v554, 16
      %v1138 = vpop.permute.xlu0 %1137
      %1139 = vrot.lane.b32.xlu0 %v555, 16
      %v1140 = vpop.permute.xlu0 %1139
      %1141 = vrot.lane.b32.xlu0 %v556, 16
      %v1142 = vpop.permute.xlu0 %1141
      %1143 = vrot.lane.b32.xlu0 %v557, 16
      %v1144 = vpop.permute.xlu0 %1143
      %1145 = vrot.lane.b32.xlu0 %v558, 16
      %v1146 = vpop.permute.xlu0 %1145
      %1147 = vrot.lane.b32.xlu0 %v559, 16
      %v1148 = vpop.permute.xlu0 %1147
      %1149 = vrot.lane.b32.xlu0 %v560, 16
      %v1150 = vpop.permute.xlu0 %1149
      %1151 = vrot.lane.b32.xlu0 %v561, 16
      %v1152 = vpop.permute.xlu0 %1151
      %1153 = vrot.lane.b32.xlu0 %v562, 16
      %v1154 = vpop.permute.xlu0 %1153
      %1155 = vrot.lane.b32.xlu0 %v563, 16
      %v1156 = vpop.permute.xlu0 %1155
      %1157 = vrot.lane.b32.xlu0 %v564, 16
      %v1158 = vpop.permute.xlu0 %1157
      %1159 = vrot.lane.b32.xlu0 %v565, 16
      %v1160 = vpop.permute.xlu0 %1159
      %1161 = vrot.lane.b32.xlu0 %v566, 16
      %v1162 = vpop.permute.xlu0 %1161
      %1163 = vrot.lane.b32.xlu0 %v567, 16
      %v1164 = vpop.permute.xlu0 %1163
      %1165 = vrot.lane.b32.xlu0 %v568, 16
      %v1166 = vpop.permute.xlu0 %1165
      %1167 = vrot.lane.b32.xlu0 %v569, 16
      %v1168 = vpop.permute.xlu0 %1167
      %1169 = vrot.lane.b32.xlu0 %v570, 16
      %v1170 = vpop.permute.xlu0 %1169
      %1171 = vrot.lane.b32.xlu0 %v571, 16
      %v1172 = vpop.permute.xlu0 %1171
      %1173 = vrot.lane.b32.xlu0 %v572, 16
      %v1174 = vpop.permute.xlu0 %1173
      %1175 = vrot.lane.b32.xlu0 %v573, 16
      %v1176 = vpop.permute.xlu0 %1175
      %1177 = vrot.lane.b32.xlu0 %v574, 16
      %v1178 = vpop.permute.xlu0 %1177
      %1179 = vrot.lane.b32.xlu0 %v575, 16
      %v1180 = vpop.permute.xlu0 %1179
      %1181 = vrot.lane.b32.xlu0 %v576, 16
      %v1182 = vpop.permute.xlu0 %1181
      %1183 = vrot.lane.b32.xlu0 %v577, 16
      %v1184 = vpop.permute.xlu0 %1183
      %1185 = vrot.lane.b32.xlu0 %v578, 16
      %v1186 = vpop.permute.xlu0 %1185
      %1187 = vrot.lane.b32.xlu0 %v579, 16
      %v1188 = vpop.permute.xlu0 %1187
      %1253 = vrot.lane.b32.xlu0 %v580, 20
      %v1254 = vpop.permute.xlu0 %1253
      %1255 = vrot.lane.b32.xlu0 %v581, 20
      %v1256 = vpop.permute.xlu0 %1255
      %1257 = vrot.lane.b32.xlu0 %v582, 20
      %v1258 = vpop.permute.xlu0 %1257
      %1259 = vrot.lane.b32.xlu0 %v583, 20
      %v1260 = vpop.permute.xlu0 %1259
      %1261 = vrot.lane.b32.xlu0 %v584, 20
      %v1262 = vpop.permute.xlu0 %1261
      %1263 = vrot.lane.b32.xlu0 %v585, 20
      %v1264 = vpop.permute.xlu0 %1263
      %1265 = vrot.lane.b32.xlu0 %v586, 20
      %v1266 = vpop.permute.xlu0 %1265
      %1267 = vrot.lane.b32.xlu0 %v587, 20
      %v1268 = vpop.permute.xlu0 %1267
      %1269 = vrot.lane.b32.xlu0 %v588, 20
      %v1270 = vpop.permute.xlu0 %1269
      %1271 = vrot.lane.b32.xlu0 %v589, 20
      %v1272 = vpop.permute.xlu0 %1271
      %1273 = vrot.lane.b32.xlu0 %v590, 20
      %v1274 = vpop.permute.xlu0 %1273
      %1275 = vrot.lane.b32.xlu0 %v591, 20
      %v1276 = vpop.permute.xlu0 %1275
      %1277 = vrot.lane.b32.xlu0 %v592, 20
      %v1278 = vpop.permute.xlu0 %1277
      %1279 = vrot.lane.b32.xlu0 %v593, 20
      %v1280 = vpop.permute.xlu0 %1279
      %1281 = vrot.lane.b32.xlu0 %v594, 20
      %v1282 = vpop.permute.xlu0 %1281
      %1283 = vrot.lane.b32.xlu0 %v595, 20
      %v1284 = vpop.permute.xlu0 %1283
      %1285 = vrot.lane.b32.xlu0 %v596, 20
      %v1286 = vpop.permute.xlu0 %1285
      %1287 = vrot.lane.b32.xlu0 %v597, 20
      %v1288 = vpop.permute.xlu0 %1287
      %1289 = vrot.lane.b32.xlu0 %v598, 20
      %v1290 = vpop.permute.xlu0 %1289
      %1291 = vrot.lane.b32.xlu0 %v599, 20
      %v1292 = vpop.permute.xlu0 %1291
      %1293 = vrot.lane.b32.xlu0 %v600, 20
      %v1294 = vpop.permute.xlu0 %1293
      %1295 = vrot.lane.b32.xlu0 %v601, 20
      %v1296 = vpop.permute.xlu0 %1295
      %1297 = vrot.lane.b32.xlu0 %v602, 20
      %v1298 = vpop.permute.xlu0 %1297
      %1299 = vrot.lane.b32.xlu0 %v603, 20
      %v1300 = vpop.permute.xlu0 %1299
      %1301 = vrot.lane.b32.xlu0 %v604, 20
      %v1302 = vpop.permute.xlu0 %1301
      %1303 = vrot.lane.b32.xlu0 %v605, 20
      %v1304 = vpop.permute.xlu0 %1303
      %1305 = vrot.lane.b32.xlu0 %v606, 20
      %v1306 = vpop.permute.xlu0 %1305
      %1307 = vrot.lane.b32.xlu0 %v607, 20
      %v1308 = vpop.permute.xlu0 %1307
      %1309 = vrot.lane.b32.xlu0 %v608, 20
      %v1310 = vpop.permute.xlu0 %1309
      %1311 = vrot.lane.b32.xlu0 %v609, 20
      %v1312 = vpop.permute.xlu0 %1311
      %1313 = vrot.lane.b32.xlu0 %v610, 20
      %v1314 = vpop.permute.xlu0 %1313
      %1315 = vrot.lane.b32.xlu0 %v611, 20
      %v1316 = vpop.permute.xlu0 %1315
      %1381 = vrot.lane.b32.xlu0 %v613, 24
      %v1382 = vpop.permute.xlu0 %1381
      %1383 = vrot.lane.b32.xlu0 %v614, 24
      %v1384 = vpop.permute.xlu0 %1383
      %1385 = vrot.lane.b32.xlu0 %v615, 24
      %v1386 = vpop.permute.xlu0 %1385
      %1387 = vrot.lane.b32.xlu0 %v616, 24
      %v1388 = vpop.permute.xlu0 %1387
      %1389 = vrot.lane.b32.xlu0 %v617, 24
      %v1390 = vpop.permute.xlu0 %1389
      %1391 = vrot.lane.b32.xlu0 %v618, 24
      %v1392 = vpop.permute.xlu0 %1391
      %1393 = vrot.lane.b32.xlu0 %v619, 24
      %v1394 = vpop.permute.xlu0 %1393
      %1395 = vrot.lane.b32.xlu0 %v620, 24
      %v1396 = vpop.permute.xlu0 %1395
      %1397 = vrot.lane.b32.xlu0 %v621, 24
      %v1398 = vpop.permute.xlu0 %1397
      %1399 = vrot.lane.b32.xlu0 %v622, 24
      %v1400 = vpop.permute.xlu0 %1399
      %1401 = vrot.lane.b32.xlu0 %v623, 24
      %v1402 = vpop.permute.xlu0 %1401
      %1403 = vrot.lane.b32.xlu0 %v624, 24
      %v1404 = vpop.permute.xlu0 %1403
      %1405 = vrot.lane.b32.xlu0 %v625, 24
      %v1406 = vpop.permute.xlu0 %1405
      %1407 = vrot.lane.b32.xlu0 %v626, 24
      %v1408 = vpop.permute.xlu0 %1407
      %1409 = vrot.lane.b32.xlu0 %v627, 24
      %v1410 = vpop.permute.xlu0 %1409
      %1411 = vrot.lane.b32.xlu0 %v628, 24
      %v1412 = vpop.permute.xlu0 %1411
      %1413 = vrot.lane.b32.xlu0 %v629, 24
      %v1414 = vpop.permute.xlu0 %1413
      %1415 = vrot.lane.b32.xlu0 %v630, 24
      %v1416 = vpop.permute.xlu0 %1415
      %1417 = vrot.lane.b32.xlu0 %v631, 24
      %v1418 = vpop.permute.xlu0 %1417
      %1419 = vrot.lane.b32.xlu0 %v632, 24
      %v1420 = vpop.permute.xlu0 %1419
      %1421 = vrot.lane.b32.xlu0 %v633, 24
      %v1422 = vpop.permute.xlu0 %1421
      %1423 = vrot.lane.b32.xlu0 %v634, 24
      %v1424 = vpop.permute.xlu0 %1423
      %1425 = vrot.lane.b32.xlu0 %v635, 24
      %v1426 = vpop.permute.xlu0 %1425
      %1427 = vrot.lane.b32.xlu0 %v636, 24
      %v1428 = vpop.permute.xlu0 %1427
      %1429 = vrot.lane.b32.xlu0 %v637, 24
      %v1430 = vpop.permute.xlu0 %1429
      %1431 = vrot.lane.b32.xlu0 %v638, 24
      %v1432 = vpop.permute.xlu0 %1431
      %1433 = vrot.lane.b32.xlu0 %v639, 24
      %v1434 = vpop.permute.xlu0 %1433
      %1435 = vrot.lane.b32.xlu0 %v640, 24
      %v1436 = vpop.permute.xlu0 %1435
      %1437 = vrot.lane.b32.xlu0 %v641, 24
      %v1438 = vpop.permute.xlu0 %1437
      %1439 = vrot.lane.b32.xlu0 %v642, 24
      %v1440 = vpop.permute.xlu0 %1439
      %1441 = vrot.lane.b32.xlu0 %v643, 24
      %v1442 = vpop.permute.xlu0 %1441
      %1443 = vrot.lane.b32.xlu0 %v644, 24
      %v1444 = vpop.permute.xlu0 %1443
      %1509 = vrot.lane.b32.xlu0 %v645, 28
      %v1510 = vpop.permute.xlu0 %1509
      %1511 = vrot.lane.b32.xlu0 %v646, 28
      %v1512 = vpop.permute.xlu0 %1511
      %1513 = vrot.lane.b32.xlu0 %v647, 28
      %v1514 = vpop.permute.xlu0 %1513
      %1515 = vrot.lane.b32.xlu0 %v648, 28
      %v1516 = vpop.permute.xlu0 %1515
      %1517 = vrot.lane.b32.xlu0 %v649, 28
      %v1518 = vpop.permute.xlu0 %1517
      %1519 = vrot.lane.b32.xlu0 %v650, 28
      %v1520 = vpop.permute.xlu0 %1519
      %1521 = vrot.lane.b32.xlu0 %v651, 28
      %v1522 = vpop.permute.xlu0 %1521
      %1523 = vrot.lane.b32.xlu0 %v652, 28
      %v1524 = vpop.permute.xlu0 %1523
      %1525 = vrot.lane.b32.xlu0 %v653, 28
      %v1526 = vpop.permute.xlu0 %1525
      %1527 = vrot.lane.b32.xlu0 %v654, 28
      %v1528 = vpop.permute.xlu0 %1527
      %1529 = vrot.lane.b32.xlu0 %v655, 28
      %v1530 = vpop.permute.xlu0 %1529
      %1531 = vrot.lane.b32.xlu0 %v656, 28
      %v1532 = vpop.permute.xlu0 %1531
      %1533 = vrot.lane.b32.xlu0 %v657, 28
      %v1534 = vpop.permute.xlu0 %1533
      %1535 = vrot.lane.b32.xlu0 %v658, 28
      %v1536 = vpop.permute.xlu0 %1535
      %1537 = vrot.lane.b32.xlu0 %v659, 28
      %v1538 = vpop.permute.xlu0 %1537
      %1539 = vrot.lane.b32.xlu0 %v660, 28
      %v1540 = vpop.permute.xlu0 %1539
      %1541 = vrot.lane.b32.xlu0 %v661, 28
      %v1542 = vpop.permute.xlu0 %1541
      %1543 = vrot.lane.b32.xlu0 %v662, 28
      %v1544 = vpop.permute.xlu0 %1543
      %1545 = vrot.lane.b32.xlu0 %v663, 28
      %v1546 = vpop.permute.xlu0 %1545
      %1547 = vrot.lane.b32.xlu0 %v664, 28
      %v1548 = vpop.permute.xlu0 %1547
      %1549 = vrot.lane.b32.xlu0 %v665, 28
      %v1550 = vpop.permute.xlu0 %1549
      %1551 = vrot.lane.b32.xlu0 %v666, 28
      %v1552 = vpop.permute.xlu0 %1551
      %1553 = vrot.lane.b32.xlu0 %v667, 28
      %v1554 = vpop.permute.xlu0 %1553
      %1555 = vrot.lane.b32.xlu0 %v668, 28
      %v1556 = vpop.permute.xlu0 %1555
      %1557 = vrot.lane.b32.xlu0 %v669, 28
      %v1558 = vpop.permute.xlu0 %1557
      %1559 = vrot.lane.b32.xlu0 %v670, 28
      %v1560 = vpop.permute.xlu0 %1559
      %1561 = vrot.lane.b32.xlu0 %v671, 28
      %v1562 = vpop.permute.xlu0 %1561
      %1563 = vrot.lane.b32.xlu0 %v672, 28
      %v1564 = vpop.permute.xlu0 %1563
      %1565 = vrot.lane.b32.xlu0 %v673, 28
      %v1566 = vpop.permute.xlu0 %1565
      %1567 = vrot.lane.b32.xlu0 %v674, 28
      %v1568 = vpop.permute.xlu0 %1567
      %1569 = vrot.lane.b32.xlu0 %v675, 28
      %v1570 = vpop.permute.xlu0 %1569
      %1571 = vrot.lane.b32.xlu0 %v676, 28
      %v1572 = vpop.permute.xlu0 %1571
      %1637 = vrot.lane.b32.xlu0 %v677, 32
      %v1638 = vpop.permute.xlu0 %1637
      %1639 = vrot.lane.b32.xlu0 %v678, 32
      %v1640 = vpop.permute.xlu0 %1639
      %1641 = vrot.lane.b32.xlu0 %v679, 32
      %v1642 = vpop.permute.xlu0 %1641
      %1643 = vrot.lane.b32.xlu0 %v680, 32
      %v1644 = vpop.permute.xlu0 %1643
      %1645 = vrot.lane.b32.xlu0 %v681, 32
      %v1646 = vpop.permute.xlu0 %1645
      %1647 = vrot.lane.b32.xlu0 %v682, 32
      %v1648 = vpop.permute.xlu0 %1647
      %1649 = vrot.lane.b32.xlu0 %v683, 32
      %v1650 = vpop.permute.xlu0 %1649
      %1651 = vrot.lane.b32.xlu0 %v684, 32
      %v1652 = vpop.permute.xlu0 %1651
      %1653 = vrot.lane.b32.xlu0 %v685, 32
      %v1654 = vpop.permute.xlu0 %1653
      %1655 = vrot.lane.b32.xlu0 %v686, 32
      %v1656 = vpop.permute.xlu0 %1655
      %1657 = vrot.lane.b32.xlu0 %v687, 32
      %v1658 = vpop.permute.xlu0 %1657
      %1659 = vrot.lane.b32.xlu0 %v688, 32
      %v1660 = vpop.permute.xlu0 %1659
      %1661 = vrot.lane.b32.xlu0 %v689, 32
      %v1662 = vpop.permute.xlu0 %1661
      %1663 = vrot.lane.b32.xlu0 %v690, 32
      %v1664 = vpop.permute.xlu0 %1663
      %1665 = vrot.lane.b32.xlu0 %v691, 32
      %v1666 = vpop.permute.xlu0 %1665
      %1667 = vrot.lane.b32.xlu0 %v692, 32
      %v1668 = vpop.permute.xlu0 %1667
      %1669 = vrot.lane.b32.xlu0 %v693, 32
      %v1670 = vpop.permute.xlu0 %1669
      %1671 = vrot.lane.b32.xlu0 %v694, 32
      %v1672 = vpop.permute.xlu0 %1671
      %1673 = vrot.lane.b32.xlu0 %v695, 32
      %v1674 = vpop.permute.xlu0 %1673
      %1675 = vrot.lane.b32.xlu0 %v696, 32
      %v1676 = vpop.permute.xlu0 %1675
      %1677 = vrot.lane.b32.xlu0 %v697, 32
      %v1678 = vpop.permute.xlu0 %1677
      %1679 = vrot.lane.b32.xlu0 %v698, 32
      %v1680 = vpop.permute.xlu0 %1679
      %1681 = vrot.lane.b32.xlu0 %v699, 32
      %v1682 = vpop.permute.xlu0 %1681
      %1683 = vrot.lane.b32.xlu0 %v700, 32
      %v1684 = vpop.permute.xlu0 %1683
      %1685 = vrot.lane.b32.xlu0 %v701, 32
      %v1686 = vpop.permute.xlu0 %1685
      %1687 = vrot.lane.b32.xlu0 %v702, 32
      %v1688 = vpop.permute.xlu0 %1687
      %1689 = vrot.lane.b32.xlu0 %v703, 32
      %v1690 = vpop.permute.xlu0 %1689
      %1691 = vrot.lane.b32.xlu0 %v704, 32
      %v1692 = vpop.permute.xlu0 %1691
      %1693 = vrot.lane.b32.xlu0 %v705, 32
      %v1694 = vpop.permute.xlu0 %1693
      %1695 = vrot.lane.b32.xlu0 %v706, 32
      %v1696 = vpop.permute.xlu0 %1695
      %1697 = vrot.lane.b32.xlu0 %v707, 32
      %v1698 = vpop.permute.xlu0 %1697
      %1699 = vrot.lane.b32.xlu0 %v708, 32
      %v1700 = vpop.permute.xlu0 %1699
      %v1733 = vsel %vm201, %v420, %v742
      %v1734 = vsel %vm201, %v421, %v744
      %v1735 = vsel %vm201, %v422, %v746
      %v1736 = vsel %vm201, %v423, %v748
      %v1737 = vsel %vm201, %v424, %v750
      %v1738 = vsel %vm201, %v425, %v752
      %v1739 = vsel %vm201, %v426, %v754
      %v1740 = vsel %vm201, %v427, %v756
      %v1741 = vsel %vm201, %v428, %v758
      %v1742 = vsel %vm201, %v429, %v760
      %v1743 = vsel %vm201, %v430, %v762
      %v1744 = vsel %vm201, %v431, %v764
      %v1745 = vsel %vm201, %v432, %v766
      %v1746 = vsel %vm201, %v433, %v768
      %v1747 = vsel %vm201, %v434, %v770
      %v1748 = vsel %vm201, %v435, %v772
      %v1749 = vsel %vm201, %v436, %v774
      %v1750 = vsel %vm201, %v437, %v776
      %v1751 = vsel %vm201, %v438, %v778
      %v1752 = vsel %vm201, %v439, %v780
      %v1753 = vsel %vm201, %v440, %v782
      %v1754 = vsel %vm201, %v441, %v784
      %v1755 = vsel %vm201, %v442, %v786
      %v1756 = vsel %vm201, %v443, %v788
      %v1757 = vsel %vm201, %v444, %v790
      %v1758 = vsel %vm201, %v445, %v792
      %v1759 = vsel %vm201, %v446, %v794
      %v1760 = vsel %vm201, %v447, %v796
      %v1761 = vsel %vm201, %v448, %v798
      %v1762 = vsel %vm201, %v449, %v800
      %v1763 = vsel %vm201, %v450, %v802
      %v1764 = vsel %vm201, %v451, %v804
      %vm1765 = vcmask 64512
      %v1766 = vsel %vm1765, %v1733, %v870
      %v1767 = vsel %vm1765, %v1734, %v872
      %v1768 = vsel %vm1765, %v1735, %v874
      %v1769 = vsel %vm1765, %v1736, %v876
      %v1770 = vsel %vm1765, %v1737, %v878
      %v1771 = vsel %vm1765, %v1738, %v880
      %v1772 = vsel %vm1765, %v1739, %v882
      %v1773 = vsel %vm1765, %v1740, %v884
      %v1774 = vsel %vm1765, %v1741, %v886
      %v1775 = vsel %vm1765, %v1742, %v888
      %v1776 = vsel %vm1765, %v1743, %v890
      %v1777 = vsel %vm1765, %v1744, %v892
      %v1778 = vsel %vm1765, %v1745, %v894
      %v1779 = vsel %vm1765, %v1746, %v896
      %v1780 = vsel %vm1765, %v1747, %v898
      %v1781 = vsel %vm1765, %v1748, %v900
      %v1782 = vsel %vm1765, %v1749, %v902
      %v1783 = vsel %vm1765, %v1750, %v904
      %v1784 = vsel %vm1765, %v1751, %v906
      %v1785 = vsel %vm1765, %v1752, %v908
      %v1786 = vsel %vm1765, %v1753, %v910
      %v1787 = vsel %vm1765, %v1754, %v912
      %v1788 = vsel %vm1765, %v1755, %v914
      %v1789 = vsel %vm1765, %v1756, %v916
      %v1790 = vsel %vm1765, %v1757, %v918
      %v1791 = vsel %vm1765, %v1758, %v920
      %v1792 = vsel %vm1765, %v1759, %v922
      %v1793 = vsel %vm1765, %v1760, %v924
      %v1794 = vsel %vm1765, %v1761, %v926
      %v1795 = vsel %vm1765, %v1762, %v928
      %v1796 = vsel %vm1765, %v1763, %v930
      %v1797 = vsel %vm1765, %v1764, %v932
      %vm1798 = vcmask 97280
      %v1799 = vsel %vm1798, %v1766, %v998
      %v1800 = vsel %vm1798, %v1767, %v1000
      %v1801 = vsel %vm1798, %v1768, %v1002
      %v1802 = vsel %vm1798, %v1769, %v1004
      %v1803 = vsel %vm1798, %v1770, %v1006
      %v1804 = vsel %vm1798, %v1771, %v1008
      %v1805 = vsel %vm1798, %v1772, %v1010
      %v1806 = vsel %vm1798, %v1773, %v1012
      %v1807 = vsel %vm1798, %v1774, %v1014
      %v1808 = vsel %vm1798, %v1775, %v1016
      %v1809 = vsel %vm1798, %v1776, %v1018
      %v1810 = vsel %vm1798, %v1777, %v1020
      %v1811 = vsel %vm1798, %v1778, %v1022
      %v1812 = vsel %vm1798, %v1779, %v1024
      %v1813 = vsel %vm1798, %v1780, %v1026
      %v1814 = vsel %vm1798, %v1781, %v1028
      %v1815 = vsel %vm1798, %v1782, %v1030
      %v1816 = vsel %vm1798, %v1783, %v1032
      %v1817 = vsel %vm1798, %v1784, %v1034
      %v1818 = vsel %vm1798, %v1785, %v1036
      %v1819 = vsel %vm1798, %v1786, %v1038
      %v1820 = vsel %vm1798, %v1787, %v1040
      %v1821 = vsel %vm1798, %v1788, %v1042
      %v1822 = vsel %vm1798, %v1789, %v1044
      %v1823 = vsel %vm1798, %v1790, %v1046
      %v1824 = vsel %vm1798, %v1791, %v1048
      %v1825 = vsel %vm1798, %v1792, %v1050
      %v1826 = vsel %vm1798, %v1793, %v1052
      %v1827 = vsel %vm1798, %v1794, %v1054
      %v1828 = vsel %vm1798, %v1795, %v1056
      %v1829 = vsel %vm1798, %v1796, %v1058
      %v1830 = vsel %vm1798, %v1797, %v1060
      %vm1831 = vcmask 130048
      %v1832 = vsel %vm1831, %v1799, %v1126
      %v1833 = vsel %vm1831, %v1800, %v1128
      %v1834 = vsel %vm1831, %v1801, %v1130
      %v1835 = vsel %vm1831, %v1802, %v1132
      %v1836 = vsel %vm1831, %v1803, %v1134
      %v1837 = vsel %vm1831, %v1804, %v1136
      %v1838 = vsel %vm1831, %v1805, %v1138
      %v1839 = vsel %vm1831, %v1806, %v1140
      %v1840 = vsel %vm1831, %v1807, %v1142
      %v1841 = vsel %vm1831, %v1808, %v1144
      %v1842 = vsel %vm1831, %v1809, %v1146
      %v1843 = vsel %vm1831, %v1810, %v1148
      %v1844 = vsel %vm1831, %v1811, %v1150
      %v1845 = vsel %vm1831, %v1812, %v1152
      %v1846 = vsel %vm1831, %v1813, %v1154
      %v1847 = vsel %vm1831, %v1814, %v1156
      %v1848 = vsel %vm1831, %v1815, %v1158
      %v1849 = vsel %vm1831, %v1816, %v1160
      %v1850 = vsel %vm1831, %v1817, %v1162
      %v1851 = vsel %vm1831, %v1818, %v1164
      %v1852 = vsel %vm1831, %v1819, %v1166
      %v1853 = vsel %vm1831, %v1820, %v1168
      %v1854 = vsel %vm1831, %v1821, %v1170
      %v1855 = vsel %vm1831, %v1822, %v1172
      %v1856 = vsel %vm1831, %v1823, %v1174
      %v1857 = vsel %vm1831, %v1824, %v1176
      %v1858 = vsel %vm1831, %v1825, %v1178
      %v1859 = vsel %vm1831, %v1826, %v1180
      %v1860 = vsel %vm1831, %v1827, %v1182
      %v1861 = vsel %vm1831, %v1828, %v1184
      %v1862 = vsel %vm1831, %v1829, %v1186
      %v1863 = vsel %vm1831, %v1830, %v1188
      %vm1864 = vcmask 162816
      %v1865 = vsel %vm1864, %v1832, %v1254
      %v1866 = vsel %vm1864, %v1833, %v1256
      %v1867 = vsel %vm1864, %v1834, %v1258
      %v1868 = vsel %vm1864, %v1835, %v1260
      %v1869 = vsel %vm1864, %v1836, %v1262
      %v1870 = vsel %vm1864, %v1837, %v1264
      %v1871 = vsel %vm1864, %v1838, %v1266
      %v1872 = vsel %vm1864, %v1839, %v1268
      %v1873 = vsel %vm1864, %v1840, %v1270
      %v1874 = vsel %vm1864, %v1841, %v1272
      %v1875 = vsel %vm1864, %v1842, %v1274
      %v1876 = vsel %vm1864, %v1843, %v1276
      %v1877 = vsel %vm1864, %v1844, %v1278
      %v1878 = vsel %vm1864, %v1845, %v1280
      %v1879 = vsel %vm1864, %v1846, %v1282
      %v1880 = vsel %vm1864, %v1847, %v1284
      %v1881 = vsel %vm1864, %v1848, %v1286
      %v1882 = vsel %vm1864, %v1849, %v1288
      %v1883 = vsel %vm1864, %v1850, %v1290
      %v1884 = vsel %vm1864, %v1851, %v1292
      %v1885 = vsel %vm1864, %v1852, %v1294
      %v1886 = vsel %vm1864, %v1853, %v1296
      %v1887 = vsel %vm1864, %v1854, %v1298
      %v1888 = vsel %vm1864, %v1855, %v1300
      %v1889 = vsel %vm1864, %v1856, %v1302
      %v1890 = vsel %vm1864, %v1857, %v1304
      %v1891 = vsel %vm1864, %v1858, %v1306
      %v1892 = vsel %vm1864, %v1859, %v1308
      %v1893 = vsel %vm1864, %v1860, %v1310
      %v1894 = vsel %vm1864, %v1861, %v1312
      %v1895 = vsel %vm1864, %v1862, %v1314
      %v1896 = vsel %vm1864, %v1863, %v1316
      %vm1897 = vcmask 195584
      %v1898 = vsel %vm1897, %v1865, %v1382
      %v1899 = vsel %vm1897, %v1866, %v1384
      %v1900 = vsel %vm1897, %v1867, %v1386
      %v1901 = vsel %vm1897, %v1868, %v1388
      %v1902 = vsel %vm1897, %v1869, %v1390
      %v1903 = vsel %vm1897, %v1870, %v1392
      %v1904 = vsel %vm1897, %v1871, %v1394
      %v1905 = vsel %vm1897, %v1872, %v1396
      %v1906 = vsel %vm1897, %v1873, %v1398
      %v1907 = vsel %vm1897, %v1874, %v1400
      %v1908 = vsel %vm1897, %v1875, %v1402
      %v1909 = vsel %vm1897, %v1876, %v1404
      %v1910 = vsel %vm1897, %v1877, %v1406
      %v1911 = vsel %vm1897, %v1878, %v1408
      %v1912 = vsel %vm1897, %v1879, %v1410
      %v1913 = vsel %vm1897, %v1880, %v1412
      %v1914 = vsel %vm1897, %v1881, %v1414
      %v1915 = vsel %vm1897, %v1882, %v1416
      %v1916 = vsel %vm1897, %v1883, %v1418
      %v1917 = vsel %vm1897, %v1884, %v1420
      %v1918 = vsel %vm1897, %v1885, %v1422
      %v1919 = vsel %vm1897, %v1886, %v1424
      %v1920 = vsel %vm1897, %v1887, %v1426
      %v1921 = vsel %vm1897, %v1888, %v1428
      %v1922 = vsel %vm1897, %v1889, %v1430
      %v1923 = vsel %vm1897, %v1890, %v1432
      %v1924 = vsel %vm1897, %v1891, %v1434
      %v1925 = vsel %vm1897, %v1892, %v1436
      %v1926 = vsel %vm1897, %v1893, %v1438
      %v1927 = vsel %vm1897, %v1894, %v1440
      %v1928 = vsel %vm1897, %v1895, %v1442
      %v1929 = vsel %vm1897, %v1896, %v1444
      %vm1930 = vcmask 228352
      %v1931 = vsel %vm1930, %v1898, %v1510
      %v1932 = vsel %vm1930, %v1899, %v1512
      %v1933 = vsel %vm1930, %v1900, %v1514
      %v1934 = vsel %vm1930, %v1901, %v1516
      %v1935 = vsel %vm1930, %v1902, %v1518
      %v1936 = vsel %vm1930, %v1903, %v1520
      %v1937 = vsel %vm1930, %v1904, %v1522
      %v1938 = vsel %vm1930, %v1905, %v1524
      %v1939 = vsel %vm1930, %v1906, %v1526
      %v1940 = vsel %vm1930, %v1907, %v1528
      %v1941 = vsel %vm1930, %v1908, %v1530
      %v1942 = vsel %vm1930, %v1909, %v1532
      %v1943 = vsel %vm1930, %v1910, %v1534
      %v1944 = vsel %vm1930, %v1911, %v1536
      %v1945 = vsel %vm1930, %v1912, %v1538
      %v1946 = vsel %vm1930, %v1913, %v1540
      %v1947 = vsel %vm1930, %v1914, %v1542
      %v1948 = vsel %vm1930, %v1915, %v1544
      %v1949 = vsel %vm1930, %v1916, %v1546
      %v1950 = vsel %vm1930, %v1917, %v1548
      %v1951 = vsel %vm1930, %v1918, %v1550
      %v1952 = vsel %vm1930, %v1919, %v1552
      %v1953 = vsel %vm1930, %v1920, %v1554
      %v1954 = vsel %vm1930, %v1921, %v1556
      %v1955 = vsel %vm1930, %v1922, %v1558
      %v1956 = vsel %vm1930, %v1923, %v1560
      %v1957 = vsel %vm1930, %v1924, %v1562
      %v1958 = vsel %vm1930, %v1925, %v1564
      %v1959 = vsel %vm1930, %v1926, %v1566
      %v1960 = vsel %vm1930, %v1927, %v1568
      %v1961 = vsel %vm1930, %v1928, %v1570
      %v1962 = vsel %vm1930, %v1929, %v1572
      %vm1963 = vcmask 261120
      %v1964 = vsel %vm1963, %v1931, %v1638
      %v1965 = vsel %vm1963, %v1932, %v1640
      %v1966 = vsel %vm1963, %v1933, %v1642
      %v1967 = vsel %vm1963, %v1934, %v1644
      %v1968 = vsel %vm1963, %v1935, %v1646
      %v1969 = vsel %vm1963, %v1936, %v1648
      %v1970 = vsel %vm1963, %v1937, %v1650
      %v1971 = vsel %vm1963, %v1938, %v1652
      %v1972 = vsel %vm1963, %v1939, %v1654
      %v1973 = vsel %vm1963, %v1940, %v1656
      %v1974 = vsel %vm1963, %v1941, %v1658
      %v1975 = vsel %vm1963, %v1942, %v1660
      %v1976 = vsel %vm1963, %v1943, %v1662
      %v1977 = vsel %vm1963, %v1944, %v1664
      %v1978 = vsel %vm1963, %v1945, %v1666
      %v1979 = vsel %vm1963, %v1946, %v1668
      %v1980 = vsel %vm1963, %v1947, %v1670
      %v1981 = vsel %vm1963, %v1948, %v1672
      %v1982 = vsel %vm1963, %v1949, %v1674
      %v1983 = vsel %vm1963, %v1950, %v1676
      %v1984 = vsel %vm1963, %v1951, %v1678
      %v1985 = vsel %vm1963, %v1952, %v1680
      %v1986 = vsel %vm1963, %v1953, %v1682
      %v1987 = vsel %vm1963, %v1954, %v1684
      %v1988 = vsel %vm1963, %v1955, %v1686
      %v1989 = vsel %vm1963, %v1956, %v1688
      %v1990 = vsel %vm1963, %v1957, %v1690
      %v1991 = vsel %vm1963, %v1958, %v1692
      %v1992 = vsel %vm1963, %v1959, %v1694
      %v1993 = vsel %vm1963, %v1960, %v1696
      %v1994 = vsel %vm1963, %v1961, %v1698
      %v1995 = vsel %vm1963, %v1962, %v1700
      %vm1996 = vcmask 293888
      %v1998 = vsel %vm1996, %v1964, 0
      %v2001 = vsel %vm1996, %v1965, 0
      %v2004 = vsel %vm1996, %v1966, 0
      %v2007 = vsel %vm1996, %v1967, 0
      %v2010 = vsel %vm1996, %v1968, 0
      %v2013 = vsel %vm1996, %v1969, 0
      %v2016 = vsel %vm1996, %v1970, 0
      %v2019 = vsel %vm1996, %v1971, 0
      %v2022 = vsel %vm1996, %v1972, 0
      %v2025 = vsel %vm1996, %v1973, 0
      %v2028 = vsel %vm1996, %v1974, 0
      %v2031 = vsel %vm1996, %v1975, 0
      %v2034 = vsel %vm1996, %v1976, 0
      %v2037 = vsel %vm1996, %v1977, 0
      %v2040 = vsel %vm1996, %v1978, 0
      %v2043 = vsel %vm1996, %v1979, 0
      %v2046 = vsel %vm1996, %v1980, 0
      %v2049 = vsel %vm1996, %v1981, 0
      %v2052 = vsel %vm1996, %v1982, 0
      %v2055 = vsel %vm1996, %v1983, 0
      %v2058 = vsel %vm1996, %v1984, 0
      %v2061 = vsel %vm1996, %v1985, 0
      %v2064 = vsel %vm1996, %v1986, 0
      %v2067 = vsel %vm1996, %v1987, 0
      %v2070 = vsel %vm1996, %v1988, 0
      %v2073 = vsel %vm1996, %v1989, 0
      %v2076 = vsel %vm1996, %v1990, 0
      %v2079 = vsel %vm1996, %v1991, 0
      %v2082 = vsel %vm1996, %v1992, 0
      %v2085 = vsel %vm1996, %v1993, 0
      %v2088 = vsel %vm1996, %v1994, 0
      %v2091 = vsel %vm1996, %v1995, 0
      %v2094 = vsel %vm1996, %v200, 0
      %2096 = vmatprep.subr.mxu0 0.0
      %2097 = vmatpush1.xpose.msra.mxu0 0.0
      %2098 = vmatprep.subr.mxu0 0.0
      %2099 = vmatpush1.xpose.msra.mxu0 0.0
      %2100 = vmatprep.subr.mxu0 0.0
      %2101 = vmatpush1.xpose.msra.mxu0 0.0
      %2102 = vmatprep.subr.mxu0 0.0
      %2103 = vmatpush1.xpose.msra.mxu0 0.0
      %2104 = vmatprep.subr.mxu0 0.0
      %2105 = vmatpush1.xpose.msra.mxu0 0.0
      %2106 = vmatprep.subr.mxu0 0.0
      %2107 = vmatpush1.xpose.msra.mxu0 0.0
      %2108 = vmatprep.subr.mxu0 0.0
      %2109 = vmatpush1.xpose.msra.mxu0 0.0
      %2110 = vmatprep.subr.mxu0 0.0
      %2111 = vmatpush1.xpose.msra.mxu0 0.0
      %2112 = vmatprep.subr.mxu0 0.0
      %2113 = vmatpush1.xpose.msra.mxu0 0.0
      %2114 = vmatprep.subr.mxu0 0.0
      %2115 = vmatpush1.xpose.msra.mxu0 0.0
      %2116 = vmatprep.subr.mxu0 0.0
      %2117 = vmatpush1.xpose.msra.mxu0 0.0
      %2118 = vmatprep.subr.mxu0 0.0
      %2119 = vmatpush1.xpose.msra.mxu0 0.0
      %2120 = vmatprep.subr.mxu0 0.0
      %2121 = vmatpush1.xpose.msra.mxu0 0.0
      %2122 = vmatprep.subr.mxu0 0.0
      %2123 = vmatpush1.xpose.msra.mxu0 0.0
      %2124 = vmatprep.subr.mxu0 0.0
      %2125 = vmatpush1.xpose.msra.mxu0 0.0
      %2126 = vmatprep.subr.mxu0 0.0
      %2127 = vmatpush1.xpose.msra.mxu0 %v2094
      %2128 = vmatprep.subr.mxu0 0.0
      %2129 = vmatpush2.xpose.msra.mxu0 0.0
      %2130 = vmatprep.subr.mxu0 0.0
      %2131 = vmatpush2.xpose.msra.mxu0 0.0
      %2132 = vmatprep.subr.mxu0 0.0
      %2133 = vmatpush2.xpose.msra.mxu0 0.0
      %2134 = vmatprep.subr.mxu0 0.0
      %2135 = vmatpush2.xpose.msra.mxu0 0.0
      %2136 = vmatprep.subr.mxu0 0.0
      %2137 = vmatpush2.xpose.msra.mxu0 0.0
      %2138 = vmatprep.subr.mxu0 0.0
      %2139 = vmatpush2.xpose.msra.mxu0 0.0
      %2140 = vmatprep.subr.mxu0 0.0
      %2141 = vmatpush2.xpose.msra.mxu0 0.0
      %2142 = vmatprep.subr.mxu0 0.0
      %2143 = vmatpush2.xpose.msra.mxu0 0.0
      %2144 = vmatprep.subr.mxu0 0.0
      %2145 = vmatpush2.xpose.msra.mxu0 0.0
      %2146 = vmatprep.subr.mxu0 0.0
      %2147 = vmatpush2.xpose.msra.mxu0 0.0
      %2148 = vmatprep.subr.mxu0 0.0
      %2149 = vmatpush2.xpose.msra.mxu0 0.0
      %2150 = vmatprep.subr.mxu0 0.0
      %2151 = vmatpush2.xpose.msra.mxu0 0.0
      %2152 = vmatprep.subr.mxu0 0.0
      %2153 = vmatpush2.xpose.msra.mxu0 0.0
      %2154 = vmatprep.subr.mxu0 0.0
      %2155 = vmatpush2.xpose.msra.mxu0 0.0
      %2156 = vmatprep.subr.mxu0 0.0
      %2157 = vmatpush2.xpose.msra.mxu0 0.0
      %2158 = vmatprep.subr.mxu0 0.0
      %2159 = vmatpush2.xpose.msra.mxu0 0.0
      %2160 = vmatprep.mubr.f32.mxu0 0.0
      %2161 = vmatmul.mubr.f32.gmra.mxu0 %v1998
      %v2162 = vpop.f32.mrf.mxu0
      %v2163 = vadd.f32 0.0, %v2162
      %v2164 = vpop.f32.mrf.mxu0
      %2165 = vmatprep.mubr.f32.mxu0 0.0
      %2166 = vmatmul.mubr.f32.gmra.mxu0 %v2001
      %v2167 = vpop.f32.mrf.mxu0
      %v2168 = vadd.f32 0.0, %v2167
      %v2169 = vpop.f32.mrf.mxu0
      %2170 = vmatprep.mubr.f32.mxu0 0.0
      %2171 = vmatmul.mubr.f32.gmra.mxu0 %v2004
      %v2172 = vpop.f32.mrf.mxu0
      %v2173 = vadd.f32 0.0, %v2172
      %v2174 = vpop.f32.mrf.mxu0
      %2175 = vmatprep.mubr.f32.mxu0 0.0
      %2176 = vmatmul.mubr.f32.gmra.mxu0 %v2007
      %v2177 = vpop.f32.mrf.mxu0
      %v2178 = vadd.f32 0.0, %v2177
      %v2179 = vpop.f32.mrf.mxu0
      %2180 = vmatprep.mubr.f32.mxu0 0.0
      %2181 = vmatmul.mubr.f32.gmra.mxu0 %v2010
      %v2182 = vpop.f32.mrf.mxu0
      %v2183 = vadd.f32 0.0, %v2182
      %v2184 = vpop.f32.mrf.mxu0
      %2185 = vmatprep.mubr.f32.mxu0 0.0
      %2186 = vmatmul.mubr.f32.gmra.mxu0 %v2013
      %v2187 = vpop.f32.mrf.mxu0
      %v2188 = vadd.f32 0.0, %v2187
      %v2189 = vpop.f32.mrf.mxu0
      %2190 = vmatprep.mubr.f32.mxu0 0.0
      %2191 = vmatmul.mubr.f32.gmra.mxu0 %v2016
      %v2192 = vpop.f32.mrf.mxu0
      %v2193 = vadd.f32 0.0, %v2192
      %v2194 = vpop.f32.mrf.mxu0
      %2195 = vmatprep.mubr.f32.mxu0 0.0
      %2196 = vmatmul.mubr.f32.gmra.mxu0 %v2019
      %v2197 = vpop.f32.mrf.mxu0
      %v2198 = vadd.f32 0.0, %v2197
      %v2199 = vpop.f32.mrf.mxu0
      %2200 = vmatprep.mubr.f32.mxu0 0.0
      %2201 = vmatmul.mubr.f32.gmra.mxu0 %v2022
      %v2202 = vpop.f32.mrf.mxu0
      %v2203 = vadd.f32 0.0, %v2202
      %v2204 = vpop.f32.mrf.mxu0
      %2205 = vmatprep.mubr.f32.mxu0 0.0
      %2206 = vmatmul.mubr.f32.gmra.mxu0 %v2025
      %v2207 = vpop.f32.mrf.mxu0
      %v2208 = vadd.f32 0.0, %v2207
      %v2209 = vpop.f32.mrf.mxu0
      %2210 = vmatprep.mubr.f32.mxu0 0.0
      %2211 = vmatmul.mubr.f32.gmra.mxu0 %v2028
      %v2212 = vpop.f32.mrf.mxu0
      %v2213 = vadd.f32 0.0, %v2212
      %v2214 = vpop.f32.mrf.mxu0
      %2215 = vmatprep.mubr.f32.mxu0 0.0
      %2216 = vmatmul.mubr.f32.gmra.mxu0 %v2031
      %v2217 = vpop.f32.mrf.mxu0
      %v2218 = vadd.f32 0.0, %v2217
      %v2219 = vpop.f32.mrf.mxu0
      %2220 = vmatprep.mubr.f32.mxu0 0.0
      %2221 = vmatmul.mubr.f32.gmra.mxu0 %v2034
      %v2222 = vpop.f32.mrf.mxu0
      %v2223 = vadd.f32 0.0, %v2222
      %v2224 = vpop.f32.mrf.mxu0
      %2225 = vmatprep.mubr.f32.mxu0 0.0
      %2226 = vmatmul.mubr.f32.gmra.mxu0 %v2037
      %v2227 = vpop.f32.mrf.mxu0
      %v2228 = vadd.f32 0.0, %v2227
      %v2229 = vpop.f32.mrf.mxu0
      %2230 = vmatprep.mubr.f32.mxu0 0.0
      %2231 = vmatmul.mubr.f32.gmra.mxu0 %v2040
      %v2232 = vpop.f32.mrf.mxu0
      %v2233 = vadd.f32 0.0, %v2232
      %v2234 = vpop.f32.mrf.mxu0
      %2235 = vmatprep.mubr.f32.mxu0 0.0
      %2236 = vmatmul.mubr.f32.gmra.mxu0 %v2043
      %v2237 = vpop.f32.mrf.mxu0
      %v2238 = vadd.f32 0.0, %v2237
      %v2239 = vpop.f32.mrf.mxu0
      %2240 = vmatprep.mubr.f32.mxu0 0.0
      %2241 = vmatmul.mubr.f32.gmra.mxu0 %v2046
      %v2242 = vpop.f32.mrf.mxu0
      %v2243 = vadd.f32 0.0, %v2242
      %v2244 = vpop.f32.mrf.mxu0
      %2245 = vmatprep.mubr.f32.mxu0 0.0
      %2246 = vmatmul.mubr.f32.gmra.mxu0 %v2049
      %v2247 = vpop.f32.mrf.mxu0
      %v2248 = vadd.f32 0.0, %v2247
      %v2249 = vpop.f32.mrf.mxu0
      %2250 = vmatprep.mubr.f32.mxu0 0.0
      %2251 = vmatmul.mubr.f32.gmra.mxu0 %v2052
      %v2252 = vpop.f32.mrf.mxu0
      %v2253 = vadd.f32 0.0, %v2252
      %v2254 = vpop.f32.mrf.mxu0
      %2255 = vmatprep.mubr.f32.mxu0 0.0
      %2256 = vmatmul.mubr.f32.gmra.mxu0 %v2055
      %v2257 = vpop.f32.mrf.mxu0
      %v2258 = vadd.f32 0.0, %v2257
      %v2259 = vpop.f32.mrf.mxu0
      %2260 = vmatprep.mubr.f32.mxu0 0.0
      %2261 = vmatmul.mubr.f32.gmra.mxu0 %v2058
      %v2262 = vpop.f32.mrf.mxu0
      %v2263 = vadd.f32 0.0, %v2262
      %v2264 = vpop.f32.mrf.mxu0
      %2265 = vmatprep.mubr.f32.mxu0 0.0
      %2266 = vmatmul.mubr.f32.gmra.mxu0 %v2061
      %v2267 = vpop.f32.mrf.mxu0
      %v2268 = vadd.f32 0.0, %v2267
      %v2269 = vpop.f32.mrf.mxu0
      %2270 = vmatprep.mubr.f32.mxu0 0.0
      %2271 = vmatmul.mubr.f32.gmra.mxu0 %v2064
      %v2272 = vpop.f32.mrf.mxu0
      %v2273 = vadd.f32 0.0, %v2272
      %v2274 = vpop.f32.mrf.mxu0
      %2275 = vmatprep.mubr.f32.mxu0 0.0
      %2276 = vmatmul.mubr.f32.gmra.mxu0 %v2067
      %v2277 = vpop.f32.mrf.mxu0
      %v2278 = vadd.f32 0.0, %v2277
      %v2279 = vpop.f32.mrf.mxu0
      %2280 = vmatprep.mubr.f32.mxu0 0.0
      %2281 = vmatmul.mubr.f32.gmra.mxu0 %v2070
      %v2282 = vpop.f32.mrf.mxu0
      %v2283 = vadd.f32 0.0, %v2282
      %v2284 = vpop.f32.mrf.mxu0
      %2285 = vmatprep.mubr.f32.mxu0 0.0
      %2286 = vmatmul.mubr.f32.gmra.mxu0 %v2073
      %v2287 = vpop.f32.mrf.mxu0
      %v2288 = vadd.f32 0.0, %v2287
      %v2289 = vpop.f32.mrf.mxu0
      %2290 = vmatprep.mubr.f32.mxu0 0.0
      %2291 = vmatmul.mubr.f32.gmra.mxu0 %v2076
      %v2292 = vpop.f32.mrf.mxu0
      %v2293 = vadd.f32 0.0, %v2292
      %v2294 = vpop.f32.mrf.mxu0
      %2295 = vmatprep.mubr.f32.mxu0 0.0
      %2296 = vmatmul.mubr.f32.gmra.mxu0 %v2079
      %v2297 = vpop.f32.mrf.mxu0
      %v2298 = vadd.f32 0.0, %v2297
      %v2299 = vpop.f32.mrf.mxu0
      %2300 = vmatprep.mubr.f32.mxu0 0.0
      %2301 = vmatmul.mubr.f32.gmra.mxu0 %v2082
      %v2302 = vpop.f32.mrf.mxu0
      %v2303 = vadd.f32 0.0, %v2302
      %v2304 = vpop.f32.mrf.mxu0
      %2305 = vmatprep.mubr.f32.mxu0 0.0
      %2306 = vmatmul.mubr.f32.gmra.mxu0 %v2085
      %v2307 = vpop.f32.mrf.mxu0
      %v2308 = vadd.f32 0.0, %v2307
      %v2309 = vpop.f32.mrf.mxu0
      %2310 = vmatprep.mubr.f32.mxu0 0.0
      %2311 = vmatmul.mubr.f32.gmra.mxu0 %v2088
      %v2312 = vpop.f32.mrf.mxu0
      %v2313 = vadd.f32 0.0, %v2312
      %v2314 = vpop.f32.mrf.mxu0
      %2315 = vmatprep.mubr.f32.mxu0 0.0
      %2316 = vmatmul.mubr.f32.gmra.mxu0 %v2091
      %v2317 = vpop.f32.mrf.mxu0
      %v2318 = vadd.f32 0.0, %v2317
      %v2319 = vpop.f32.mrf.mxu0
      %2320 = vdwg.mxu0
      %v2321 = vmul.f32 %v2163, %v283
      %v2322 = vmul.f32 %v2168, %v283
      %v2323 = vmul.f32 %v2173, %v283
      %v2324 = vmul.f32 %v2178, %v283
      %v2325 = vmul.f32 %v2183, %v283
      %v2326 = vmul.f32 %v2188, %v283
      %v2327 = vmul.f32 %v2193, %v283
      %v2328 = vmul.f32 %v2198, %v283
      %v2329 = vmul.f32 %v2203, %v283
      %v2330 = vmul.f32 %v2208, %v283
      %v2331 = vmul.f32 %v2213, %v283
      %v2332 = vmul.f32 %v2218, %v283
      %v2333 = vmul.f32 %v2223, %v283
      %v2334 = vmul.f32 %v2228, %v283
      %v2335 = vmul.f32 %v2233, %v283
      %v2336 = vmul.f32 %v2238, %v283
      %v2337 = vmul.f32 %v2243, %v283
      %v2338 = vmul.f32 %v2248, %v283
      %v2339 = vmul.f32 %v2253, %v283
      %v2340 = vmul.f32 %v2258, %v283
      %v2341 = vmul.f32 %v2263, %v283
      %v2342 = vmul.f32 %v2268, %v283
      %v2343 = vmul.f32 %v2273, %v283
      %v2344 = vmul.f32 %v2278, %v283
      %v2345 = vmul.f32 %v2283, %v283
      %v2346 = vmul.f32 %v2288, %v283
      %v2347 = vmul.f32 %v2293, %v283
      %v2348 = vmul.f32 %v2298, %v283
      %v2349 = vmul.f32 %v2303, %v283
      %v2350 = vmul.f32 %v2308, %v283
      %v2351 = vmul.f32 %v2313, %v283
      %v2352 = vmul.f32 %v2318, %v283
      %v2353 = vadd.f32 %v2321, %v321
      %v2354 = vadd.f32 %v2322, %v321
      %v2355 = vadd.f32 %v2323, %v321
      %v2356 = vadd.f32 %v2324, %v321
      %v2357 = vadd.f32 %v2325, %v321
      %v2358 = vadd.f32 %v2326, %v321
      %v2359 = vadd.f32 %v2327, %v321
      %v2360 = vadd.f32 %v2328, %v321
      %v2361 = vadd.f32 %v2329, %v321
      %v2362 = vadd.f32 %v2330, %v321
      %v2363 = vadd.f32 %v2331, %v321
      %v2364 = vadd.f32 %v2332, %v321
      %v2365 = vadd.f32 %v2333, %v321
      %v2366 = vadd.f32 %v2334, %v321
      %v2367 = vadd.f32 %v2335, %v321
      %v2368 = vadd.f32 %v2336, %v321
      %v2369 = vadd.f32 %v2337, %v321
      %v2370 = vadd.f32 %v2338, %v321
      %v2371 = vadd.f32 %v2339, %v321
      %v2372 = vadd.f32 %v2340, %v321
      %v2373 = vadd.f32 %v2341, %v321
      %v2374 = vadd.f32 %v2342, %v321
      %v2375 = vadd.f32 %v2343, %v321
      %v2376 = vadd.f32 %v2344, %v321
      %v2377 = vadd.f32 %v2345, %v321
      %v2378 = vadd.f32 %v2346, %v321
      %v2379 = vadd.f32 %v2347, %v321
      %v2380 = vadd.f32 %v2348, %v321
      %v2381 = vadd.f32 %v2349, %v321
      %v2382 = vadd.f32 %v2350, %v321
      %v2383 = vadd.f32 %v2351, %v321
      %v2384 = vadd.f32 %v2352, %v321
      %v2385 = vmax.f32 %v2353, 0.0
      %v2386 = vmax.f32 %v2354, 0.0
      %v2387 = vmax.f32 %v2355, 0.0
      %v2388 = vmax.f32 %v2356, 0.0
      %v2389 = vmax.f32 %v2357, 0.0
      %v2390 = vmax.f32 %v2358, 0.0
      %v2391 = vmax.f32 %v2359, 0.0
      %v2392 = vmax.f32 %v2360, 0.0
      %v2393 = vmax.f32 %v2361, 0.0
      %v2394 = vmax.f32 %v2362, 0.0
      %v2395 = vmax.f32 %v2363, 0.0
      %v2396 = vmax.f32 %v2364, 0.0
      %v2397 = vmax.f32 %v2365, 0.0
      %v2398 = vmax.f32 %v2366, 0.0
      %v2399 = vmax.f32 %v2367, 0.0
      %v2400 = vmax.f32 %v2368, 0.0
      %v2401 = vmax.f32 %v2369, 0.0
      %v2402 = vmax.f32 %v2370, 0.0
      %v2403 = vmax.f32 %v2371, 0.0
      %v2404 = vmax.f32 %v2372, 0.0
      %v2405 = vmax.f32 %v2373, 0.0
      %v2406 = vmax.f32 %v2374, 0.0
      %v2407 = vmax.f32 %v2375, 0.0
      %v2408 = vmax.f32 %v2376, 0.0
      %v2409 = vmax.f32 %v2377, 0.0
      %v2410 = vmax.f32 %v2378, 0.0
      %v2411 = vmax.f32 %v2379, 0.0
      %v2412 = vmax.f32 %v2380, 0.0
      %v2413 = vmax.f32 %v2381, 0.0
      %v2414 = vmax.f32 %v2382, 0.0
      %v2415 = vmax.f32 %v2383, 0.0
      %v2416 = vmax.f32 %v2384, 0.0
      %2417 = vst.msk [vmem:[%s387 + $0x1] sm:$0xff] %vm201, %v2385
      %2418 = vst.msk [vmem:[%s387 + $0x9] sm:$0xff] %vm201, %v2386
      %2419 = vst.msk [vmem:[%s387 + $0x19] sm:$0xff] %vm201, %v2387
      %2420 = vst.msk [vmem:[%s387 + $0x21] sm:$0xff] %vm201, %v2388
      %2421 = vst.msk [vmem:[%s387 + $0x31] sm:$0xff] %vm201, %v2389
      %2422 = vst.msk [vmem:[%s387 + $0x39] sm:$0xff] %vm201, %v2390
      %2423 = vst.msk [vmem:[%s387 + $0x49] sm:$0xff] %vm201, %v2391
      %2424 = vst.msk [vmem:[%s387 + $0x51] sm:$0xff] %vm201, %v2392
      %2425 = vst.msk [vmem:[%s387 + $0x61] sm:$0xff] %vm201, %v2393
      %2426 = vst.msk [vmem:[%s387 + $0x69] sm:$0xff] %vm201, %v2394
      %2427 = vst.msk [vmem:[%s387 + $0x79] sm:$0xff] %vm201, %v2395
      %2428 = vst.msk [vmem:[%s387 + $0x81] sm:$0xff] %vm201, %v2396
      %2429 = vst.msk [vmem:[%s387 + $0x91] sm:$0xff] %vm201, %v2397
      %2430 = vst.msk [vmem:[%s387 + $0x99] sm:$0xff] %vm201, %v2398
      %2431 = vst.msk [vmem:[%s387 + $0xa9] sm:$0xff] %vm201, %v2399
      %2432 = vst.msk [vmem:[%s387 + $0xb1] sm:$0xff] %vm201, %v2400
      %2433 = vst.msk [vmem:[%s387 + $0xc1] sm:$0xff] %vm201, %v2401
      %2434 = vst.msk [vmem:[%s387 + $0xc9] sm:$0xff] %vm201, %v2402
      %2435 = vst.msk [vmem:[%s387 + $0xd9] sm:$0xff] %vm201, %v2403
      %2436 = vst.msk [vmem:[%s387 + $0xe1] sm:$0xff] %vm201, %v2404
      %2437 = vst.msk [vmem:[%s387 + $0xf1] sm:$0xff] %vm201, %v2405
      %2438 = vst.msk [vmem:[%s387 + $0xf9] sm:$0xff] %vm201, %v2406
      %2439 = vst.msk [vmem:[%s387 + $0x109] sm:$0xff] %vm201, %v2407
      %2440 = vst.msk [vmem:[%s387 + $0x111] sm:$0xff] %vm201, %v2408
      %2441 = vst.msk [vmem:[%s387 + $0x121] sm:$0xff] %vm201, %v2409
      %2442 = vst.msk [vmem:[%s387 + $0x129] sm:$0xff] %vm201, %v2410
      %2443 = vst.msk [vmem:[%s387 + $0x139] sm:$0xff] %vm201, %v2411
      %2444 = vst.msk [vmem:[%s387 + $0x141] sm:$0xff] %vm201, %v2412
      %2445 = vst.msk [vmem:[%s387 + $0x151] sm:$0xff] %vm201, %v2413
      %2446 = vst.msk [vmem:[%s387 + $0x159] sm:$0xff] %vm201, %v2414
      %2447 = vst.msk [vmem:[%s387 + $0x169] sm:$0xff] %vm201, %v2415
      %2448 = vst.msk [vmem:[%s387 + $0x171] sm:$0xff] %vm201, %v2416
      %v2449 = vld [vmem:[#allocation2] sm:$0xff]
      %v2450 = vld [vmem:[#allocation2 + $0x8] sm:$0xff]
      %v2451 = vld [vmem:[#allocation2 + $0x18] sm:$0xff]
      %v2452 = vld [vmem:[#allocation2 + $0x20] sm:$0xff]
      %v2453 = vld [vmem:[#allocation2 + $0x30] sm:$0xff]
      %v2454 = vld [vmem:[#allocation2 + $0x38] sm:$0xff]
      %v2455 = vld [vmem:[#allocation2 + $0x48] sm:$0xff]
      %v2456 = vld [vmem:[#allocation2 + $0x50] sm:$0xff]
      %v2457 = vld [vmem:[#allocation2 + $0x60] sm:$0xff]
      %v2458 = vld [vmem:[#allocation2 + $0x68] sm:$0xff]
      %v2459 = vld [vmem:[#allocation2 + $0x78] sm:$0xff]
      %v2460 = vld [vmem:[#allocation2 + $0x80] sm:$0xff]
      %v2461 = vld [vmem:[#allocation2 + $0x90] sm:$0xff]
      %v2462 = vld [vmem:[#allocation2 + $0x98] sm:$0xff]
      %v2463 = vld [vmem:[#allocation2 + $0xa8] sm:$0xff]
      %v2464 = vld [vmem:[#allocation2 + $0xb0] sm:$0xff]
      %v2465 = vld [vmem:[#allocation2 + $0xc0] sm:$0xff]
      %v2466 = vld [vmem:[#allocation2 + $0xc8] sm:$0xff]
      %v2467 = vld [vmem:[#allocation2 + $0xd8] sm:$0xff]
      %v2468 = vld [vmem:[#allocation2 + $0xe0] sm:$0xff]
      %v2469 = vld [vmem:[#allocation2 + $0xf0] sm:$0xff]
      %v2470 = vld [vmem:[#allocation2 + $0xf8] sm:$0xff]
      %v2471 = vld [vmem:[#allocation2 + $0x108] sm:$0xff]
      %v2472 = vld [vmem:[#allocation2 + $0x110] sm:$0xff]
      %v2473 = vld [vmem:[#allocation2 + $0x120] sm:$0xff]
      %v2474 = vld [vmem:[#allocation2 + $0x128] sm:$0xff]
      %v2475 = vld [vmem:[#allocation2 + $0x138] sm:$0xff]
      %v2476 = vld [vmem:[#allocation2 + $0x140] sm:$0xff]
      %v2477 = vld [vmem:[#allocation2 + $0x150] sm:$0xff]
      %v2478 = vld [vmem:[#allocation2 + $0x158] sm:$0xff]
      %v2479 = vld [vmem:[#allocation2 + $0x168] sm:$0xff]
      %v2480 = vld [vmem:[#allocation2 + $0x170] sm:$0xff]
      %v2481 = vld [vmem:[#allocation2 + $0x1] sm:$0xff]
      %v2482 = vld [vmem:[#allocation2 + $0x9] sm:$0xff]
      %v2483 = vld [vmem:[#allocation2 + $0x19] sm:$0xff]
      %v2484 = vld [vmem:[#allocation2 + $0x21] sm:$0xff]
      %v2485 = vld [vmem:[#allocation2 + $0x31] sm:$0xff]
      %v2486 = vld [vmem:[#allocation2 + $0x39] sm:$0xff]
      %v2487 = vld [vmem:[#allocation2 + $0x49] sm:$0xff]
      %v2488 = vld [vmem:[#allocation2 + $0x51] sm:$0xff]
      %v2489 = vld [vmem:[#allocation2 + $0x61] sm:$0xff]
      %v2490 = vld [vmem:[#allocation2 + $0x69] sm:$0xff]
      %v2491 = vld [vmem:[#allocation2 + $0x79] sm:$0xff]
      %v2492 = vld [vmem:[#allocation2 + $0x81] sm:$0xff]
      %v2493 = vld [vmem:[#allocation2 + $0x91] sm:$0xff]
      %v2494 = vld [vmem:[#allocation2 + $0x99] sm:$0xff]
      %v2495 = vld [vmem:[#allocation2 + $0xa9] sm:$0xff]
      %v2496 = vld [vmem:[#allocation2 + $0xb1] sm:$0xff]
      %v2497 = vld [vmem:[#allocation2 + $0xc1] sm:$0xff]
      %v2498 = vld [vmem:[#allocation2 + $0xc9] sm:$0xff]
      %v2499 = vld [vmem:[#allocation2 + $0xd9] sm:$0xff]
      %v2500 = vld [vmem:[#allocation2 + $0xe1] sm:$0xff]
      %v2501 = vld [vmem:[#allocation2 + $0xf1] sm:$0xff]
      %v2502 = vld [vmem:[#allocation2 + $0xf9] sm:$0xff]
      %v2503 = vld [vmem:[#allocation2 + $0x109] sm:$0xff]
      %v2504 = vld [vmem:[#allocation2 + $0x111] sm:$0xff]
      %v2505 = vld [vmem:[#allocation2 + $0x121] sm:$0xff]
      %v2506 = vld [vmem:[#allocation2 + $0x129] sm:$0xff]
      %v2507 = vld [vmem:[#allocation2 + $0x139] sm:$0xff]
      %v2508 = vld [vmem:[#allocation2 + $0x141] sm:$0xff]
      %v2509 = vld [vmem:[#allocation2 + $0x151] sm:$0xff]
      %v2510 = vld [vmem:[#allocation2 + $0x159] sm:$0xff]
      %v2511 = vld [vmem:[#allocation2 + $0x169] sm:$0xff]
      %v2512 = vld [vmem:[#allocation2 + $0x171] sm:$0xff]
      %v2513 = vld [vmem:[#allocation2 + $0x2] sm:$0xff]
      %v2514 = vld [vmem:[#allocation2 + $0xa] sm:$0xff]
      %v2515 = vld [vmem:[#allocation2 + $0x1a] sm:$0xff]
      %v2516 = vld [vmem:[#allocation2 + $0x22] sm:$0xff]
      %v2517 = vld [vmem:[#allocation2 + $0x32] sm:$0xff]
      %v2518 = vld [vmem:[#allocation2 + $0x3a] sm:$0xff]
      %v2519 = vld [vmem:[#allocation2 + $0x4a] sm:$0xff]
      %v2520 = vld [vmem:[#allocation2 + $0x52] sm:$0xff]
      %v2521 = vld [vmem:[#allocation2 + $0x62] sm:$0xff]
      %v2522 = vld [vmem:[#allocation2 + $0x6a] sm:$0xff]
      %v2523 = vld [vmem:[#allocation2 + $0x7a] sm:$0xff]
      %v2524 = vld [vmem:[#allocation2 + $0x82] sm:$0xff]
      %v2525 = vld [vmem:[#allocation2 + $0x92] sm:$0xff]
      %v2526 = vld [vmem:[#allocation2 + $0x9a] sm:$0xff]
      %v2527 = vld [vmem:[#allocation2 + $0xaa] sm:$0xff]
      %v2528 = vld [vmem:[#allocation2 + $0xb2] sm:$0xff]
      %v2529 = vld [vmem:[#allocation2 + $0xc2] sm:$0xff]
      %v2530 = vld [vmem:[#allocation2 + $0xca] sm:$0xff]
      %v2531 = vld [vmem:[#allocation2 + $0xda] sm:$0xff]
      %v2532 = vld [vmem:[#allocation2 + $0xe2] sm:$0xff]
      %v2533 = vld [vmem:[#allocation2 + $0xf2] sm:$0xff]
      %v2534 = vld [vmem:[#allocation2 + $0xfa] sm:$0xff]
      %v2535 = vld [vmem:[#allocation2 + $0x10a] sm:$0xff]
      %v2536 = vld [vmem:[#allocation2 + $0x112] sm:$0xff]
      %v2537 = vld [vmem:[#allocation2 + $0x122] sm:$0xff]
      %v2538 = vld [vmem:[#allocation2 + $0x12a] sm:$0xff]
      %v2539 = vld [vmem:[#allocation2 + $0x13a] sm:$0xff]
      %v2540 = vld [vmem:[#allocation2 + $0x142] sm:$0xff]
      %v2541 = vld [vmem:[#allocation2 + $0x152] sm:$0xff]
      %v2542 = vld [vmem:[#allocation2 + $0x15a] sm:$0xff]
      %v2543 = vld [vmem:[#allocation2 + $0x16a] sm:$0xff]
      %v2544 = vld [vmem:[#allocation2 + $0x172] sm:$0xff]
      %v2545 = vld [vmem:[%s387] sm:$0xff]
      %v2546 = vld [vmem:[%s387 + $0x8] sm:$0xff]
      %v2547 = vld [vmem:[%s387 + $0x18] sm:$0xff]
      %v2548 = vld [vmem:[%s387 + $0x20] sm:$0xff]
      %v2549 = vld [vmem:[%s387 + $0x30] sm:$0xff]
      %v2550 = vld [vmem:[%s387 + $0x38] sm:$0xff]
      %v2551 = vld [vmem:[%s387 + $0x48] sm:$0xff]
      %v2552 = vld [vmem:[%s387 + $0x50] sm:$0xff]
      %v2553 = vld [vmem:[%s387 + $0x60] sm:$0xff]
      %v2554 = vld [vmem:[%s387 + $0x68] sm:$0xff]
      %v2555 = vld [vmem:[%s387 + $0x78] sm:$0xff]
      %v2556 = vld [vmem:[%s387 + $0x80] sm:$0xff]
      %v2557 = vld [vmem:[%s387 + $0x90] sm:$0xff]
      %v2558 = vld [vmem:[%s387 + $0x98] sm:$0xff]
      %v2559 = vld [vmem:[%s387 + $0xa8] sm:$0xff]
      %v2560 = vld [vmem:[%s387 + $0xb0] sm:$0xff]
      %v2561 = vld [vmem:[%s387 + $0xc0] sm:$0xff]
      %v2562 = vld [vmem:[%s387 + $0xc8] sm:$0xff]
      %v2563 = vld [vmem:[%s387 + $0xd8] sm:$0xff]
      %v2564 = vld [vmem:[%s387 + $0xe0] sm:$0xff]
      %v2565 = vld [vmem:[%s387 + $0xf0] sm:$0xff]
      %v2566 = vld [vmem:[%s387 + $0xf8] sm:$0xff]
      %v2567 = vld [vmem:[%s387 + $0x108] sm:$0xff]
      %v2568 = vld [vmem:[%s387 + $0x110] sm:$0xff]
      %v2569 = vld [vmem:[%s387 + $0x120] sm:$0xff]
      %v2570 = vld [vmem:[%s387 + $0x128] sm:$0xff]
      %v2571 = vld [vmem:[%s387 + $0x138] sm:$0xff]
      %v2572 = vld [vmem:[%s387 + $0x140] sm:$0xff]
      %v2573 = vld [vmem:[%s387 + $0x150] sm:$0xff]
      %v2574 = vld [vmem:[%s387 + $0x158] sm:$0xff]
      %v2575 = vld [vmem:[%s387 + $0x168] sm:$0xff]
      %v2576 = vld [vmem:[%s387 + $0x170] sm:$0xff]
      %v2577 = vld [vmem:[%s387 + $0x1] sm:$0xff]
      %v2578 = vld [vmem:[%s387 + $0x9] sm:$0xff]
      %v2579 = vld [vmem:[%s387 + $0x19] sm:$0xff]
      %v2580 = vld [vmem:[%s387 + $0x21] sm:$0xff]
      %v2581 = vld [vmem:[%s387 + $0x31] sm:$0xff]
      %v2582 = vld [vmem:[%s387 + $0x39] sm:$0xff]
      %v2583 = vld [vmem:[%s387 + $0x49] sm:$0xff]
      %v2584 = vld [vmem:[%s387 + $0x51] sm:$0xff]
      %v2585 = vld [vmem:[%s387 + $0x61] sm:$0xff]
      %v2586 = vld [vmem:[%s387 + $0x69] sm:$0xff]
      %v2587 = vld [vmem:[%s387 + $0x79] sm:$0xff]
      %v2588 = vld [vmem:[%s387 + $0x81] sm:$0xff]
      %v2589 = vld [vmem:[%s387 + $0x91] sm:$0xff]
      %v2590 = vld [vmem:[%s387 + $0x99] sm:$0xff]
      %v2591 = vld [vmem:[%s387 + $0xa9] sm:$0xff]
      %v2592 = vld [vmem:[%s387 + $0xb1] sm:$0xff]
      %v2593 = vld [vmem:[%s387 + $0xc1] sm:$0xff]
      %v2594 = vld [vmem:[%s387 + $0xc9] sm:$0xff]
      %v2595 = vld [vmem:[%s387 + $0xd9] sm:$0xff]
      %v2596 = vld [vmem:[%s387 + $0xe1] sm:$0xff]
      %v2597 = vld [vmem:[%s387 + $0xf1] sm:$0xff]
      %v2598 = vld [vmem:[%s387 + $0xf9] sm:$0xff]
      %v2599 = vld [vmem:[%s387 + $0x109] sm:$0xff]
      %v2600 = vld [vmem:[%s387 + $0x111] sm:$0xff]
      %v2601 = vld [vmem:[%s387 + $0x121] sm:$0xff]
      %v2602 = vld [vmem:[%s387 + $0x129] sm:$0xff]
      %v2603 = vld [vmem:[%s387 + $0x139] sm:$0xff]
      %v2604 = vld [vmem:[%s387 + $0x141] sm:$0xff]
      %v2605 = vld [vmem:[%s387 + $0x151] sm:$0xff]
      %v2606 = vld [vmem:[%s387 + $0x159] sm:$0xff]
      %v2607 = vld [vmem:[%s387 + $0x169] sm:$0xff]
      %v2608 = vld [vmem:[%s387 + $0x171] sm:$0xff]
      %v2609 = vld [vmem:[%s387 + $0x2] sm:$0xff]
      %v2610 = vld [vmem:[%s387 + $0xa] sm:$0xff]
      %v2611 = vld [vmem:[%s387 + $0x1a] sm:$0xff]
      %v2612 = vld [vmem:[%s387 + $0x22] sm:$0xff]
      %v2613 = vld [vmem:[%s387 + $0x32] sm:$0xff]
      %v2614 = vld [vmem:[%s387 + $0x3a] sm:$0xff]
      %v2615 = vld [vmem:[%s387 + $0x4a] sm:$0xff]
      %v2616 = vld [vmem:[%s387 + $0x52] sm:$0xff]
      %v2617 = vld [vmem:[%s387 + $0x62] sm:$0xff]
      %v2618 = vld [vmem:[%s387 + $0x6a] sm:$0xff]
      %v2619 = vld [vmem:[%s387 + $0x7a] sm:$0xff]
      %v2620 = vld [vmem:[%s387 + $0x82] sm:$0xff]
      %v2621 = vld [vmem:[%s387 + $0x92] sm:$0xff]
      %v2622 = vld [vmem:[%s387 + $0x9a] sm:$0xff]
      %v2623 = vld [vmem:[%s387 + $0xaa] sm:$0xff]
      %v2624 = vld [vmem:[%s387 + $0xb2] sm:$0xff]
      %v2625 = vld [vmem:[%s387 + $0xc2] sm:$0xff]
      %v2626 = vld [vmem:[%s387 + $0xca] sm:$0xff]
      %v2627 = vld [vmem:[%s387 + $0xda] sm:$0xff]
      %v2628 = vld [vmem:[%s387 + $0xe2] sm:$0xff]
      %v2629 = vld [vmem:[%s387 + $0xf2] sm:$0xff]
      %v2630 = vld [vmem:[%s387 + $0xfa] sm:$0xff]
      %v2631 = vld [vmem:[%s387 + $0x10a] sm:$0xff]
      %v2632 = vld [vmem:[%s387 + $0x112] sm:$0xff]
      %v2633 = vld [vmem:[%s387 + $0x122] sm:$0xff]
      %v2634 = vld [vmem:[%s387 + $0x12a] sm:$0xff]
      %v2635 = vld [vmem:[%s387 + $0x13a] sm:$0xff]
      %v2636 = vld [vmem:[%s387 + $0x142] sm:$0xff]
      %v2637 = vld [vmem:[%s387 + $0x152] sm:$0xff]
      %v2638 = vld [vmem:[%s387 + $0x15a] sm:$0xff]
      %v2639 = vld [vmem:[%s387 + $0x16a] sm:$0xff]
      %v2640 = vld [vmem:[%s387 + $0x172] sm:$0xff]
      %v2641 = vld [vmem:[%s612] sm:$0xff]
      %v2642 = vld [vmem:[%s612 + $0x8] sm:$0xff]
      %v2643 = vld [vmem:[%s612 + $0x18] sm:$0xff]
      %v2644 = vld [vmem:[%s612 + $0x20] sm:$0xff]
      %v2645 = vld [vmem:[%s612 + $0x30] sm:$0xff]
      %v2646 = vld [vmem:[%s612 + $0x38] sm:$0xff]
      %v2647 = vld [vmem:[%s612 + $0x48] sm:$0xff]
      %v2648 = vld [vmem:[%s612 + $0x50] sm:$0xff]
      %v2649 = vld [vmem:[%s612 + $0x60] sm:$0xff]
      %v2650 = vld [vmem:[%s612 + $0x68] sm:$0xff]
      %v2651 = vld [vmem:[%s612 + $0x78] sm:$0xff]
      %v2652 = vld [vmem:[%s612 + $0x80] sm:$0xff]
      %v2653 = vld [vmem:[%s612 + $0x90] sm:$0xff]
      %v2654 = vld [vmem:[%s612 + $0x98] sm:$0xff]
      %v2655 = vld [vmem:[%s612 + $0xa8] sm:$0xff]
      %v2656 = vld [vmem:[%s612 + $0xb0] sm:$0xff]
      %v2657 = vld [vmem:[%s612 + $0xc0] sm:$0xff]
      %v2658 = vld [vmem:[%s612 + $0xc8] sm:$0xff]
      %v2659 = vld [vmem:[%s612 + $0xd8] sm:$0xff]
      %v2660 = vld [vmem:[%s612 + $0xe0] sm:$0xff]
      %v2661 = vld [vmem:[%s612 + $0xf0] sm:$0xff]
      %v2662 = vld [vmem:[%s612 + $0xf8] sm:$0xff]
      %v2663 = vld [vmem:[%s612 + $0x108] sm:$0xff]
      %v2664 = vld [vmem:[%s612 + $0x110] sm:$0xff]
      %v2665 = vld [vmem:[%s612 + $0x120] sm:$0xff]
      %v2666 = vld [vmem:[%s612 + $0x128] sm:$0xff]
      %v2667 = vld [vmem:[%s612 + $0x138] sm:$0xff]
      %v2668 = vld [vmem:[%s612 + $0x140] sm:$0xff]
      %v2669 = vld [vmem:[%s612 + $0x150] sm:$0xff]
      %v2670 = vld [vmem:[%s612 + $0x158] sm:$0xff]
      %v2671 = vld [vmem:[%s612 + $0x168] sm:$0xff]
      %v2672 = vld [vmem:[%s612 + $0x170] sm:$0xff]
      %v2673 = vld [vmem:[%s612 + $0x1] sm:$0xff]
      %v2674 = vld [vmem:[%s612 + $0x9] sm:$0xff]
      %v2675 = vld [vmem:[%s612 + $0x19] sm:$0xff]
      %v2676 = vld [vmem:[%s612 + $0x21] sm:$0xff]
      %v2677 = vld [vmem:[%s612 + $0x31] sm:$0xff]
      %v2678 = vld [vmem:[%s612 + $0x39] sm:$0xff]
      %v2679 = vld [vmem:[%s612 + $0x49] sm:$0xff]
      %v2680 = vld [vmem:[%s612 + $0x51] sm:$0xff]
      %v2681 = vld [vmem:[%s612 + $0x61] sm:$0xff]
      %v2682 = vld [vmem:[%s612 + $0x69] sm:$0xff]
      %v2683 = vld [vmem:[%s612 + $0x79] sm:$0xff]
      %v2684 = vld [vmem:[%s612 + $0x81] sm:$0xff]
      %v2685 = vld [vmem:[%s612 + $0x91] sm:$0xff]
      %v2686 = vld [vmem:[%s612 + $0x99] sm:$0xff]
      %v2687 = vld [vmem:[%s612 + $0xa9] sm:$0xff]
      %v2688 = vld [vmem:[%s612 + $0xb1] sm:$0xff]
      %v2689 = vld [vmem:[%s612 + $0xc1] sm:$0xff]
      %v2690 = vld [vmem:[%s612 + $0xc9] sm:$0xff]
      %v2691 = vld [vmem:[%s612 + $0xd9] sm:$0xff]
      %v2692 = vld [vmem:[%s612 + $0xe1] sm:$0xff]
      %v2693 = vld [vmem:[%s612 + $0xf1] sm:$0xff]
      %v2694 = vld [vmem:[%s612 + $0xf9] sm:$0xff]
      %v2695 = vld [vmem:[%s612 + $0x109] sm:$0xff]
      %v2696 = vld [vmem:[%s612 + $0x111] sm:$0xff]
      %v2697 = vld [vmem:[%s612 + $0x121] sm:$0xff]
      %v2698 = vld [vmem:[%s612 + $0x129] sm:$0xff]
      %v2699 = vld [vmem:[%s612 + $0x139] sm:$0xff]
      %v2700 = vld [vmem:[%s612 + $0x141] sm:$0xff]
      %v2701 = vld [vmem:[%s612 + $0x151] sm:$0xff]
      %v2702 = vld [vmem:[%s612 + $0x159] sm:$0xff]
      %v2703 = vld [vmem:[%s612 + $0x169] sm:$0xff]
      %v2704 = vld [vmem:[%s612 + $0x171] sm:$0xff]
      %v2705 = vld [vmem:[%s612 + $0x2] sm:$0xff]
      %v2706 = vld [vmem:[%s612 + $0xa] sm:$0xff]
      %v2707 = vld [vmem:[%s612 + $0x1a] sm:$0xff]
      %v2708 = vld [vmem:[%s612 + $0x22] sm:$0xff]
      %v2709 = vld [vmem:[%s612 + $0x32] sm:$0xff]
      %v2710 = vld [vmem:[%s612 + $0x3a] sm:$0xff]
      %v2711 = vld [vmem:[%s612 + $0x4a] sm:$0xff]
      %v2712 = vld [vmem:[%s612 + $0x52] sm:$0xff]
      %v2713 = vld [vmem:[%s612 + $0x62] sm:$0xff]
      %v2714 = vld [vmem:[%s612 + $0x6a] sm:$0xff]
      %v2715 = vld [vmem:[%s612 + $0x7a] sm:$0xff]
      %v2716 = vld [vmem:[%s612 + $0x82] sm:$0xff]
      %v2717 = vld [vmem:[%s612 + $0x92] sm:$0xff]
      %v2718 = vld [vmem:[%s612 + $0x9a] sm:$0xff]
      %v2719 = vld [vmem:[%s612 + $0xaa] sm:$0xff]
      %v2720 = vld [vmem:[%s612 + $0xb2] sm:$0xff]
      %v2721 = vld [vmem:[%s612 + $0xc2] sm:$0xff]
      %v2722 = vld [vmem:[%s612 + $0xca] sm:$0xff]
      %v2723 = vld [vmem:[%s612 + $0xda] sm:$0xff]
      %v2724 = vld [vmem:[%s612 + $0xe2] sm:$0xff]
      %v2725 = vld [vmem:[%s612 + $0xf2] sm:$0xff]
      %v2726 = vld [vmem:[%s612 + $0xfa] sm:$0xff]
      %v2727 = vld [vmem:[%s612 + $0x10a] sm:$0xff]
      %v2728 = vld [vmem:[%s612 + $0x112] sm:$0xff]
      %v2729 = vld [vmem:[%s612 + $0x122] sm:$0xff]
      %v2730 = vld [vmem:[%s612 + $0x12a] sm:$0xff]
      %v2731 = vld [vmem:[%s612 + $0x13a] sm:$0xff]
      %v2732 = vld [vmem:[%s612 + $0x142] sm:$0xff]
      %v2733 = vld [vmem:[%s612 + $0x152] sm:$0xff]
      %v2734 = vld [vmem:[%s612 + $0x15a] sm:$0xff]
      %v2735 = vld [vmem:[%s612 + $0x16a] sm:$0xff]
      %v2736 = vld [vmem:[%s612 + $0x172] sm:$0xff]
      %2769 = vrot.lane.b32.xlu0 %v2481, 4
      %v2770 = vpop.permute.xlu0 %2769
      %2771 = vrot.lane.b32.xlu0 %v2482, 4
      %v2772 = vpop.permute.xlu0 %2771
      %2773 = vrot.lane.b32.xlu0 %v2483, 4
      %v2774 = vpop.permute.xlu0 %2773
      %2775 = vrot.lane.b32.xlu0 %v2484, 4
      %v2776 = vpop.permute.xlu0 %2775
      %2777 = vrot.lane.b32.xlu0 %v2485, 4
      %v2778 = vpop.permute.xlu0 %2777
      %2779 = vrot.lane.b32.xlu0 %v2486, 4
      %v2780 = vpop.permute.xlu0 %2779
      %2781 = vrot.lane.b32.xlu0 %v2487, 4
      %v2782 = vpop.permute.xlu0 %2781
      %2783 = vrot.lane.b32.xlu0 %v2488, 4
      %v2784 = vpop.permute.xlu0 %2783
      %2785 = vrot.lane.b32.xlu0 %v2489, 4
      %v2786 = vpop.permute.xlu0 %2785
      %2787 = vrot.lane.b32.xlu0 %v2490, 4
      %v2788 = vpop.permute.xlu0 %2787
      %2789 = vrot.lane.b32.xlu0 %v2491, 4
      %v2790 = vpop.permute.xlu0 %2789
      %2791 = vrot.lane.b32.xlu0 %v2492, 4
      %v2792 = vpop.permute.xlu0 %2791
      %2793 = vrot.lane.b32.xlu0 %v2493, 4
      %v2794 = vpop.permute.xlu0 %2793
      %2795 = vrot.lane.b32.xlu0 %v2494, 4
      %v2796 = vpop.permute.xlu0 %2795
      %2797 = vrot.lane.b32.xlu0 %v2495, 4
      %v2798 = vpop.permute.xlu0 %2797
      %2799 = vrot.lane.b32.xlu0 %v2496, 4
      %v2800 = vpop.permute.xlu0 %2799
      %2801 = vrot.lane.b32.xlu0 %v2497, 4
      %v2802 = vpop.permute.xlu0 %2801
      %2803 = vrot.lane.b32.xlu0 %v2498, 4
      %v2804 = vpop.permute.xlu0 %2803
      %2805 = vrot.lane.b32.xlu0 %v2499, 4
      %v2806 = vpop.permute.xlu0 %2805
      %2807 = vrot.lane.b32.xlu0 %v2500, 4
      %v2808 = vpop.permute.xlu0 %2807
      %2809 = vrot.lane.b32.xlu0 %v2501, 4
      %v2810 = vpop.permute.xlu0 %2809
      %2811 = vrot.lane.b32.xlu0 %v2502, 4
      %v2812 = vpop.permute.xlu0 %2811
      %2813 = vrot.lane.b32.xlu0 %v2503, 4
      %v2814 = vpop.permute.xlu0 %2813
      %2815 = vrot.lane.b32.xlu0 %v2504, 4
      %v2816 = vpop.permute.xlu0 %2815
      %2817 = vrot.lane.b32.xlu0 %v2505, 4
      %v2818 = vpop.permute.xlu0 %2817
      %2819 = vrot.lane.b32.xlu0 %v2506, 4
      %v2820 = vpop.permute.xlu0 %2819
      %2821 = vrot.lane.b32.xlu0 %v2507, 4
      %v2822 = vpop.permute.xlu0 %2821
      %2823 = vrot.lane.b32.xlu0 %v2508, 4
      %v2824 = vpop.permute.xlu0 %2823
      %2825 = vrot.lane.b32.xlu0 %v2509, 4
      %v2826 = vpop.permute.xlu0 %2825
      %2827 = vrot.lane.b32.xlu0 %v2510, 4
      %v2828 = vpop.permute.xlu0 %2827
      %2829 = vrot.lane.b32.xlu0 %v2511, 4
      %v2830 = vpop.permute.xlu0 %2829
      %2831 = vrot.lane.b32.xlu0 %v2512, 4
      %v2832 = vpop.permute.xlu0 %2831
      %2897 = vrot.lane.b32.xlu0 %v2513, 8
      %v2898 = vpop.permute.xlu0 %2897
      %2899 = vrot.lane.b32.xlu0 %v2514, 8
      %v2900 = vpop.permute.xlu0 %2899
      %2901 = vrot.lane.b32.xlu0 %v2515, 8
      %v2902 = vpop.permute.xlu0 %2901
      %2903 = vrot.lane.b32.xlu0 %v2516, 8
      %v2904 = vpop.permute.xlu0 %2903
      %2905 = vrot.lane.b32.xlu0 %v2517, 8
      %v2906 = vpop.permute.xlu0 %2905
      %2907 = vrot.lane.b32.xlu0 %v2518, 8
      %v2908 = vpop.permute.xlu0 %2907
      %2909 = vrot.lane.b32.xlu0 %v2519, 8
      %v2910 = vpop.permute.xlu0 %2909
      %2911 = vrot.lane.b32.xlu0 %v2520, 8
      %v2912 = vpop.permute.xlu0 %2911
      %2913 = vrot.lane.b32.xlu0 %v2521, 8
      %v2914 = vpop.permute.xlu0 %2913
      %2915 = vrot.lane.b32.xlu0 %v2522, 8
      %v2916 = vpop.permute.xlu0 %2915
      %2917 = vrot.lane.b32.xlu0 %v2523, 8
      %v2918 = vpop.permute.xlu0 %2917
      %2919 = vrot.lane.b32.xlu0 %v2524, 8
      %v2920 = vpop.permute.xlu0 %2919
      %2921 = vrot.lane.b32.xlu0 %v2525, 8
      %v2922 = vpop.permute.xlu0 %2921
      %2923 = vrot.lane.b32.xlu0 %v2526, 8
      %v2924 = vpop.permute.xlu0 %2923
      %2925 = vrot.lane.b32.xlu0 %v2527, 8
      %v2926 = vpop.permute.xlu0 %2925
      %2927 = vrot.lane.b32.xlu0 %v2528, 8
      %v2928 = vpop.permute.xlu0 %2927
      %2929 = vrot.lane.b32.xlu0 %v2529, 8
      %v2930 = vpop.permute.xlu0 %2929
      %2931 = vrot.lane.b32.xlu0 %v2530, 8
      %v2932 = vpop.permute.xlu0 %2931
      %2933 = vrot.lane.b32.xlu0 %v2531, 8
      %v2934 = vpop.permute.xlu0 %2933
      %2935 = vrot.lane.b32.xlu0 %v2532, 8
      %v2936 = vpop.permute.xlu0 %2935
      %2937 = vrot.lane.b32.xlu0 %v2533, 8
      %v2938 = vpop.permute.xlu0 %2937
      %2939 = vrot.lane.b32.xlu0 %v2534, 8
      %v2940 = vpop.permute.xlu0 %2939
      %2941 = vrot.lane.b32.xlu0 %v2535, 8
      %v2942 = vpop.permute.xlu0 %2941
      %2943 = vrot.lane.b32.xlu0 %v2536, 8
      %v2944 = vpop.permute.xlu0 %2943
      %2945 = vrot.lane.b32.xlu0 %v2537, 8
      %v2946 = vpop.permute.xlu0 %2945
      %2947 = vrot.lane.b32.xlu0 %v2538, 8
      %v2948 = vpop.permute.xlu0 %2947
      %2949 = vrot.lane.b32.xlu0 %v2539, 8
      %v2950 = vpop.permute.xlu0 %2949
      %2951 = vrot.lane.b32.xlu0 %v2540, 8
      %v2952 = vpop.permute.xlu0 %2951
      %2953 = vrot.lane.b32.xlu0 %v2541, 8
      %v2954 = vpop.permute.xlu0 %2953
      %2955 = vrot.lane.b32.xlu0 %v2542, 8
      %v2956 = vpop.permute.xlu0 %2955
      %2957 = vrot.lane.b32.xlu0 %v2543, 8
      %v2958 = vpop.permute.xlu0 %2957
      %2959 = vrot.lane.b32.xlu0 %v2544, 8
      %v2960 = vpop.permute.xlu0 %2959
      %3025 = vrot.lane.b32.xlu0 %v2545, 12
      %v3026 = vpop.permute.xlu0 %3025
      %3027 = vrot.lane.b32.xlu0 %v2546, 12
      %v3028 = vpop.permute.xlu0 %3027
      %3029 = vrot.lane.b32.xlu0 %v2547, 12
      %v3030 = vpop.permute.xlu0 %3029
      %3031 = vrot.lane.b32.xlu0 %v2548, 12
      %v3032 = vpop.permute.xlu0 %3031
      %3033 = vrot.lane.b32.xlu0 %v2549, 12
      %v3034 = vpop.permute.xlu0 %3033
      %3035 = vrot.lane.b32.xlu0 %v2550, 12
      %v3036 = vpop.permute.xlu0 %3035
      %3037 = vrot.lane.b32.xlu0 %v2551, 12
      %v3038 = vpop.permute.xlu0 %3037
      %3039 = vrot.lane.b32.xlu0 %v2552, 12
      %v3040 = vpop.permute.xlu0 %3039
      %3041 = vrot.lane.b32.xlu0 %v2553, 12
      %v3042 = vpop.permute.xlu0 %3041
      %3043 = vrot.lane.b32.xlu0 %v2554, 12
      %v3044 = vpop.permute.xlu0 %3043
      %3045 = vrot.lane.b32.xlu0 %v2555, 12
      %v3046 = vpop.permute.xlu0 %3045
      %3047 = vrot.lane.b32.xlu0 %v2556, 12
      %v3048 = vpop.permute.xlu0 %3047
      %3049 = vrot.lane.b32.xlu0 %v2557, 12
      %v3050 = vpop.permute.xlu0 %3049
      %3051 = vrot.lane.b32.xlu0 %v2558, 12
      %v3052 = vpop.permute.xlu0 %3051
      %3053 = vrot.lane.b32.xlu0 %v2559, 12
      %v3054 = vpop.permute.xlu0 %3053
      %3055 = vrot.lane.b32.xlu0 %v2560, 12
      %v3056 = vpop.permute.xlu0 %3055
      %3057 = vrot.lane.b32.xlu0 %v2561, 12
      %v3058 = vpop.permute.xlu0 %3057
      %3059 = vrot.lane.b32.xlu0 %v2562, 12
      %v3060 = vpop.permute.xlu0 %3059
      %3061 = vrot.lane.b32.xlu0 %v2563, 12
      %v3062 = vpop.permute.xlu0 %3061
      %3063 = vrot.lane.b32.xlu0 %v2564, 12
      %v3064 = vpop.permute.xlu0 %3063
      %3065 = vrot.lane.b32.xlu0 %v2565, 12
      %v3066 = vpop.permute.xlu0 %3065
      %3067 = vrot.lane.b32.xlu0 %v2566, 12
      %v3068 = vpop.permute.xlu0 %3067
      %3069 = vrot.lane.b32.xlu0 %v2567, 12
      %v3070 = vpop.permute.xlu0 %3069
      %3071 = vrot.lane.b32.xlu0 %v2568, 12
      %v3072 = vpop.permute.xlu0 %3071
      %3073 = vrot.lane.b32.xlu0 %v2569, 12
      %v3074 = vpop.permute.xlu0 %3073
      %3075 = vrot.lane.b32.xlu0 %v2570, 12
      %v3076 = vpop.permute.xlu0 %3075
      %3077 = vrot.lane.b32.xlu0 %v2571, 12
      %v3078 = vpop.permute.xlu0 %3077
      %3079 = vrot.lane.b32.xlu0 %v2572, 12
      %v3080 = vpop.permute.xlu0 %3079
      %3081 = vrot.lane.b32.xlu0 %v2573, 12
      %v3082 = vpop.permute.xlu0 %3081
      %3083 = vrot.lane.b32.xlu0 %v2574, 12
      %v3084 = vpop.permute.xlu0 %3083
      %3085 = vrot.lane.b32.xlu0 %v2575, 12
      %v3086 = vpop.permute.xlu0 %3085
      %3087 = vrot.lane.b32.xlu0 %v2576, 12
      %v3088 = vpop.permute.xlu0 %3087
      %3153 = vrot.lane.b32.xlu0 %v2577, 16
      %v3154 = vpop.permute.xlu0 %3153
      %3155 = vrot.lane.b32.xlu0 %v2578, 16
      %v3156 = vpop.permute.xlu0 %3155
      %3157 = vrot.lane.b32.xlu0 %v2579, 16
      %v3158 = vpop.permute.xlu0 %3157
      %3159 = vrot.lane.b32.xlu0 %v2580, 16
      %v3160 = vpop.permute.xlu0 %3159
      %3161 = vrot.lane.b32.xlu0 %v2581, 16
      %v3162 = vpop.permute.xlu0 %3161
      %3163 = vrot.lane.b32.xlu0 %v2582, 16
      %v3164 = vpop.permute.xlu0 %3163
      %3165 = vrot.lane.b32.xlu0 %v2583, 16
      %v3166 = vpop.permute.xlu0 %3165
      %3167 = vrot.lane.b32.xlu0 %v2584, 16
      %v3168 = vpop.permute.xlu0 %3167
      %3169 = vrot.lane.b32.xlu0 %v2585, 16
      %v3170 = vpop.permute.xlu0 %3169
      %3171 = vrot.lane.b32.xlu0 %v2586, 16
      %v3172 = vpop.permute.xlu0 %3171
      %3173 = vrot.lane.b32.xlu0 %v2587, 16
      %v3174 = vpop.permute.xlu0 %3173
      %3175 = vrot.lane.b32.xlu0 %v2588, 16
      %v3176 = vpop.permute.xlu0 %3175
      %3177 = vrot.lane.b32.xlu0 %v2589, 16
      %v3178 = vpop.permute.xlu0 %3177
      %3179 = vrot.lane.b32.xlu0 %v2590, 16
      %v3180 = vpop.permute.xlu0 %3179
      %3181 = vrot.lane.b32.xlu0 %v2591, 16
      %v3182 = vpop.permute.xlu0 %3181
      %3183 = vrot.lane.b32.xlu0 %v2592, 16
      %v3184 = vpop.permute.xlu0 %3183
      %3185 = vrot.lane.b32.xlu0 %v2593, 16
      %v3186 = vpop.permute.xlu0 %3185
      %3187 = vrot.lane.b32.xlu0 %v2594, 16
      %v3188 = vpop.permute.xlu0 %3187
      %3189 = vrot.lane.b32.xlu0 %v2595, 16
      %v3190 = vpop.permute.xlu0 %3189
      %3191 = vrot.lane.b32.xlu0 %v2596, 16
      %v3192 = vpop.permute.xlu0 %3191
      %3193 = vrot.lane.b32.xlu0 %v2597, 16
      %v3194 = vpop.permute.xlu0 %3193
      %3195 = vrot.lane.b32.xlu0 %v2598, 16
      %v3196 = vpop.permute.xlu0 %3195
      %3197 = vrot.lane.b32.xlu0 %v2599, 16
      %v3198 = vpop.permute.xlu0 %3197
      %3199 = vrot.lane.b32.xlu0 %v2600, 16
      %v3200 = vpop.permute.xlu0 %3199
      %3201 = vrot.lane.b32.xlu0 %v2601, 16
      %v3202 = vpop.permute.xlu0 %3201
      %3203 = vrot.lane.b32.xlu0 %v2602, 16
      %v3204 = vpop.permute.xlu0 %3203
      %3205 = vrot.lane.b32.xlu0 %v2603, 16
      %v3206 = vpop.permute.xlu0 %3205
      %3207 = vrot.lane.b32.xlu0 %v2604, 16
      %v3208 = vpop.permute.xlu0 %3207
      %3209 = vrot.lane.b32.xlu0 %v2605, 16
      %v3210 = vpop.permute.xlu0 %3209
      %3211 = vrot.lane.b32.xlu0 %v2606, 16
      %v3212 = vpop.permute.xlu0 %3211
      %3213 = vrot.lane.b32.xlu0 %v2607, 16
      %v3214 = vpop.permute.xlu0 %3213
      %3215 = vrot.lane.b32.xlu0 %v2608, 16
      %v3216 = vpop.permute.xlu0 %3215
      %3281 = vrot.lane.b32.xlu0 %v2609, 20
      %v3282 = vpop.permute.xlu0 %3281
      %3283 = vrot.lane.b32.xlu0 %v2610, 20
      %v3284 = vpop.permute.xlu0 %3283
      %3285 = vrot.lane.b32.xlu0 %v2611, 20
      %v3286 = vpop.permute.xlu0 %3285
      %3287 = vrot.lane.b32.xlu0 %v2612, 20
      %v3288 = vpop.permute.xlu0 %3287
      %3289 = vrot.lane.b32.xlu0 %v2613, 20
      %v3290 = vpop.permute.xlu0 %3289
      %3291 = vrot.lane.b32.xlu0 %v2614, 20
      %v3292 = vpop.permute.xlu0 %3291
      %3293 = vrot.lane.b32.xlu0 %v2615, 20
      %v3294 = vpop.permute.xlu0 %3293
      %3295 = vrot.lane.b32.xlu0 %v2616, 20
      %v3296 = vpop.permute.xlu0 %3295
      %3297 = vrot.lane.b32.xlu0 %v2617, 20
      %v3298 = vpop.permute.xlu0 %3297
      %3299 = vrot.lane.b32.xlu0 %v2618, 20
      %v3300 = vpop.permute.xlu0 %3299
      %3301 = vrot.lane.b32.xlu0 %v2619, 20
      %v3302 = vpop.permute.xlu0 %3301
      %3303 = vrot.lane.b32.xlu0 %v2620, 20
      %v3304 = vpop.permute.xlu0 %3303
      %3305 = vrot.lane.b32.xlu0 %v2621, 20
      %v3306 = vpop.permute.xlu0 %3305
      %3307 = vrot.lane.b32.xlu0 %v2622, 20
      %v3308 = vpop.permute.xlu0 %3307
      %3309 = vrot.lane.b32.xlu0 %v2623, 20
      %v3310 = vpop.permute.xlu0 %3309
      %3311 = vrot.lane.b32.xlu0 %v2624, 20
      %v3312 = vpop.permute.xlu0 %3311
      %3313 = vrot.lane.b32.xlu0 %v2625, 20
      %v3314 = vpop.permute.xlu0 %3313
      %3315 = vrot.lane.b32.xlu0 %v2626, 20
      %v3316 = vpop.permute.xlu0 %3315
      %3317 = vrot.lane.b32.xlu0 %v2627, 20
      %v3318 = vpop.permute.xlu0 %3317
      %3319 = vrot.lane.b32.xlu0 %v2628, 20
      %v3320 = vpop.permute.xlu0 %3319
      %3321 = vrot.lane.b32.xlu0 %v2629, 20
      %v3322 = vpop.permute.xlu0 %3321
      %3323 = vrot.lane.b32.xlu0 %v2630, 20
      %v3324 = vpop.permute.xlu0 %3323
      %3325 = vrot.lane.b32.xlu0 %v2631, 20
      %v3326 = vpop.permute.xlu0 %3325
      %3327 = vrot.lane.b32.xlu0 %v2632, 20
      %v3328 = vpop.permute.xlu0 %3327
      %3329 = vrot.lane.b32.xlu0 %v2633, 20
      %v3330 = vpop.permute.xlu0 %3329
      %3331 = vrot.lane.b32.xlu0 %v2634, 20
      %v3332 = vpop.permute.xlu0 %3331
      %3333 = vrot.lane.b32.xlu0 %v2635, 20
      %v3334 = vpop.permute.xlu0 %3333
      %3335 = vrot.lane.b32.xlu0 %v2636, 20
      %v3336 = vpop.permute.xlu0 %3335
      %3337 = vrot.lane.b32.xlu0 %v2637, 20
      %v3338 = vpop.permute.xlu0 %3337
      %3339 = vrot.lane.b32.xlu0 %v2638, 20
      %v3340 = vpop.permute.xlu0 %3339
      %3341 = vrot.lane.b32.xlu0 %v2639, 20
      %v3342 = vpop.permute.xlu0 %3341
      %3343 = vrot.lane.b32.xlu0 %v2640, 20
      %v3344 = vpop.permute.xlu0 %3343
      %3409 = vrot.lane.b32.xlu0 %v2641, 24
      %v3410 = vpop.permute.xlu0 %3409
      %3411 = vrot.lane.b32.xlu0 %v2642, 24
      %v3412 = vpop.permute.xlu0 %3411
      %3413 = vrot.lane.b32.xlu0 %v2643, 24
      %v3414 = vpop.permute.xlu0 %3413
      %3415 = vrot.lane.b32.xlu0 %v2644, 24
      %v3416 = vpop.permute.xlu0 %3415
      %3417 = vrot.lane.b32.xlu0 %v2645, 24
      %v3418 = vpop.permute.xlu0 %3417
      %3419 = vrot.lane.b32.xlu0 %v2646, 24
      %v3420 = vpop.permute.xlu0 %3419
      %3421 = vrot.lane.b32.xlu0 %v2647, 24
      %v3422 = vpop.permute.xlu0 %3421
      %3423 = vrot.lane.b32.xlu0 %v2648, 24
      %v3424 = vpop.permute.xlu0 %3423
      %3425 = vrot.lane.b32.xlu0 %v2649, 24
      %v3426 = vpop.permute.xlu0 %3425
      %3427 = vrot.lane.b32.xlu0 %v2650, 24
      %v3428 = vpop.permute.xlu0 %3427
      %3429 = vrot.lane.b32.xlu0 %v2651, 24
      %v3430 = vpop.permute.xlu0 %3429
      %3431 = vrot.lane.b32.xlu0 %v2652, 24
      %v3432 = vpop.permute.xlu0 %3431
      %3433 = vrot.lane.b32.xlu0 %v2653, 24
      %v3434 = vpop.permute.xlu0 %3433
      %3435 = vrot.lane.b32.xlu0 %v2654, 24
      %v3436 = vpop.permute.xlu0 %3435
      %3437 = vrot.lane.b32.xlu0 %v2655, 24
      %v3438 = vpop.permute.xlu0 %3437
      %3439 = vrot.lane.b32.xlu0 %v2656, 24
      %v3440 = vpop.permute.xlu0 %3439
      %3441 = vrot.lane.b32.xlu0 %v2657, 24
      %v3442 = vpop.permute.xlu0 %3441
      %3443 = vrot.lane.b32.xlu0 %v2658, 24
      %v3444 = vpop.permute.xlu0 %3443
      %3445 = vrot.lane.b32.xlu0 %v2659, 24
      %v3446 = vpop.permute.xlu0 %3445
      %3447 = vrot.lane.b32.xlu0 %v2660, 24
      %v3448 = vpop.permute.xlu0 %3447
      %3449 = vrot.lane.b32.xlu0 %v2661, 24
      %v3450 = vpop.permute.xlu0 %3449
      %3451 = vrot.lane.b32.xlu0 %v2662, 24
      %v3452 = vpop.permute.xlu0 %3451
      %3453 = vrot.lane.b32.xlu0 %v2663, 24
      %v3454 = vpop.permute.xlu0 %3453
      %3455 = vrot.lane.b32.xlu0 %v2664, 24
      %v3456 = vpop.permute.xlu0 %3455
      %3457 = vrot.lane.b32.xlu0 %v2665, 24
      %v3458 = vpop.permute.xlu0 %3457
      %3459 = vrot.lane.b32.xlu0 %v2666, 24
      %v3460 = vpop.permute.xlu0 %3459
      %3461 = vrot.lane.b32.xlu0 %v2667, 24
      %v3462 = vpop.permute.xlu0 %3461
      %3463 = vrot.lane.b32.xlu0 %v2668, 24
      %v3464 = vpop.permute.xlu0 %3463
      %3465 = vrot.lane.b32.xlu0 %v2669, 24
      %v3466 = vpop.permute.xlu0 %3465
      %3467 = vrot.lane.b32.xlu0 %v2670, 24
      %v3468 = vpop.permute.xlu0 %3467
      %3469 = vrot.lane.b32.xlu0 %v2671, 24
      %v3470 = vpop.permute.xlu0 %3469
      %3471 = vrot.lane.b32.xlu0 %v2672, 24
      %v3472 = vpop.permute.xlu0 %3471
      %3537 = vrot.lane.b32.xlu0 %v2673, 28
      %v3538 = vpop.permute.xlu0 %3537
      %3539 = vrot.lane.b32.xlu0 %v2674, 28
      %v3540 = vpop.permute.xlu0 %3539
      %3541 = vrot.lane.b32.xlu0 %v2675, 28
      %v3542 = vpop.permute.xlu0 %3541
      %3543 = vrot.lane.b32.xlu0 %v2676, 28
      %v3544 = vpop.permute.xlu0 %3543
      %3545 = vrot.lane.b32.xlu0 %v2677, 28
      %v3546 = vpop.permute.xlu0 %3545
      %3547 = vrot.lane.b32.xlu0 %v2678, 28
      %v3548 = vpop.permute.xlu0 %3547
      %3549 = vrot.lane.b32.xlu0 %v2679, 28
      %v3550 = vpop.permute.xlu0 %3549
      %3551 = vrot.lane.b32.xlu0 %v2680, 28
      %v3552 = vpop.permute.xlu0 %3551
      %3553 = vrot.lane.b32.xlu0 %v2681, 28
      %v3554 = vpop.permute.xlu0 %3553
      %3555 = vrot.lane.b32.xlu0 %v2682, 28
      %v3556 = vpop.permute.xlu0 %3555
      %3557 = vrot.lane.b32.xlu0 %v2683, 28
      %v3558 = vpop.permute.xlu0 %3557
      %3559 = vrot.lane.b32.xlu0 %v2684, 28
      %v3560 = vpop.permute.xlu0 %3559
      %3561 = vrot.lane.b32.xlu0 %v2685, 28
      %v3562 = vpop.permute.xlu0 %3561
      %3563 = vrot.lane.b32.xlu0 %v2686, 28
      %v3564 = vpop.permute.xlu0 %3563
      %3565 = vrot.lane.b32.xlu0 %v2687, 28
      %v3566 = vpop.permute.xlu0 %3565
      %3567 = vrot.lane.b32.xlu0 %v2688, 28
      %v3568 = vpop.permute.xlu0 %3567
      %3569 = vrot.lane.b32.xlu0 %v2689, 28
      %v3570 = vpop.permute.xlu0 %3569
      %3571 = vrot.lane.b32.xlu0 %v2690, 28
      %v3572 = vpop.permute.xlu0 %3571
      %3573 = vrot.lane.b32.xlu0 %v2691, 28
      %v3574 = vpop.permute.xlu0 %3573
      %3575 = vrot.lane.b32.xlu0 %v2692, 28
      %v3576 = vpop.permute.xlu0 %3575
      %3577 = vrot.lane.b32.xlu0 %v2693, 28
      %v3578 = vpop.permute.xlu0 %3577
      %3579 = vrot.lane.b32.xlu0 %v2694, 28
      %v3580 = vpop.permute.xlu0 %3579
      %3581 = vrot.lane.b32.xlu0 %v2695, 28
      %v3582 = vpop.permute.xlu0 %3581
      %3583 = vrot.lane.b32.xlu0 %v2696, 28
      %v3584 = vpop.permute.xlu0 %3583
      %3585 = vrot.lane.b32.xlu0 %v2697, 28
      %v3586 = vpop.permute.xlu0 %3585
      %3587 = vrot.lane.b32.xlu0 %v2698, 28
      %v3588 = vpop.permute.xlu0 %3587
      %3589 = vrot.lane.b32.xlu0 %v2699, 28
      %v3590 = vpop.permute.xlu0 %3589
      %3591 = vrot.lane.b32.xlu0 %v2700, 28
      %v3592 = vpop.permute.xlu0 %3591
      %3593 = vrot.lane.b32.xlu0 %v2701, 28
      %v3594 = vpop.permute.xlu0 %3593
      %3595 = vrot.lane.b32.xlu0 %v2702, 28
      %v3596 = vpop.permute.xlu0 %3595
      %3597 = vrot.lane.b32.xlu0 %v2703, 28
      %v3598 = vpop.permute.xlu0 %3597
      %3599 = vrot.lane.b32.xlu0 %v2704, 28
      %v3600 = vpop.permute.xlu0 %3599
      %3665 = vrot.lane.b32.xlu0 %v2705, 32
      %v3666 = vpop.permute.xlu0 %3665
      %3667 = vrot.lane.b32.xlu0 %v2706, 32
      %v3668 = vpop.permute.xlu0 %3667
      %3669 = vrot.lane.b32.xlu0 %v2707, 32
      %v3670 = vpop.permute.xlu0 %3669
      %3671 = vrot.lane.b32.xlu0 %v2708, 32
      %v3672 = vpop.permute.xlu0 %3671
      %3673 = vrot.lane.b32.xlu0 %v2709, 32
      %v3674 = vpop.permute.xlu0 %3673
      %3675 = vrot.lane.b32.xlu0 %v2710, 32
      %v3676 = vpop.permute.xlu0 %3675
      %3677 = vrot.lane.b32.xlu0 %v2711, 32
      %v3678 = vpop.permute.xlu0 %3677
      %3679 = vrot.lane.b32.xlu0 %v2712, 32
      %v3680 = vpop.permute.xlu0 %3679
      %3681 = vrot.lane.b32.xlu0 %v2713, 32
      %v3682 = vpop.permute.xlu0 %3681
      %3683 = vrot.lane.b32.xlu0 %v2714, 32
      %v3684 = vpop.permute.xlu0 %3683
      %3685 = vrot.lane.b32.xlu0 %v2715, 32
      %v3686 = vpop.permute.xlu0 %3685
      %3687 = vrot.lane.b32.xlu0 %v2716, 32
      %v3688 = vpop.permute.xlu0 %3687
      %3689 = vrot.lane.b32.xlu0 %v2717, 32
      %v3690 = vpop.permute.xlu0 %3689
      %3691 = vrot.lane.b32.xlu0 %v2718, 32
      %v3692 = vpop.permute.xlu0 %3691
      %3693 = vrot.lane.b32.xlu0 %v2719, 32
      %v3694 = vpop.permute.xlu0 %3693
      %3695 = vrot.lane.b32.xlu0 %v2720, 32
      %v3696 = vpop.permute.xlu0 %3695
      %3697 = vrot.lane.b32.xlu0 %v2721, 32
      %v3698 = vpop.permute.xlu0 %3697
      %3699 = vrot.lane.b32.xlu0 %v2722, 32
      %v3700 = vpop.permute.xlu0 %3699
      %3701 = vrot.lane.b32.xlu0 %v2723, 32
      %v3702 = vpop.permute.xlu0 %3701
      %3703 = vrot.lane.b32.xlu0 %v2724, 32
      %v3704 = vpop.permute.xlu0 %3703
      %3705 = vrot.lane.b32.xlu0 %v2725, 32
      %v3706 = vpop.permute.xlu0 %3705
      %3707 = vrot.lane.b32.xlu0 %v2726, 32
      %v3708 = vpop.permute.xlu0 %3707
      %3709 = vrot.lane.b32.xlu0 %v2727, 32
      %v3710 = vpop.permute.xlu0 %3709
      %3711 = vrot.lane.b32.xlu0 %v2728, 32
      %v3712 = vpop.permute.xlu0 %3711
      %3713 = vrot.lane.b32.xlu0 %v2729, 32
      %v3714 = vpop.permute.xlu0 %3713
      %3715 = vrot.lane.b32.xlu0 %v2730, 32
      %v3716 = vpop.permute.xlu0 %3715
      %3717 = vrot.lane.b32.xlu0 %v2731, 32
      %v3718 = vpop.permute.xlu0 %3717
      %3719 = vrot.lane.b32.xlu0 %v2732, 32
      %v3720 = vpop.permute.xlu0 %3719
      %3721 = vrot.lane.b32.xlu0 %v2733, 32
      %v3722 = vpop.permute.xlu0 %3721
      %3723 = vrot.lane.b32.xlu0 %v2734, 32
      %v3724 = vpop.permute.xlu0 %3723
      %3725 = vrot.lane.b32.xlu0 %v2735, 32
      %v3726 = vpop.permute.xlu0 %3725
      %3727 = vrot.lane.b32.xlu0 %v2736, 32
      %v3728 = vpop.permute.xlu0 %3727
      %3793 = vrot.lane.b32.xlu0 %v247, 36
      %v3794 = vpop.permute.xlu0 %3793
      %3795 = vrot.lane.b32.xlu0 %v248, 36
      %v3796 = vpop.permute.xlu0 %3795
      %3797 = vrot.lane.b32.xlu0 %v249, 36
      %v3798 = vpop.permute.xlu0 %3797
      %3799 = vrot.lane.b32.xlu0 %v250, 36
      %v3800 = vpop.permute.xlu0 %3799
      %3801 = vrot.lane.b32.xlu0 %v251, 36
      %v3802 = vpop.permute.xlu0 %3801
      %3803 = vrot.lane.b32.xlu0 %v252, 36
      %v3804 = vpop.permute.xlu0 %3803
      %3805 = vrot.lane.b32.xlu0 %v253, 36
      %v3806 = vpop.permute.xlu0 %3805
      %3807 = vrot.lane.b32.xlu0 %v254, 36
      %v3808 = vpop.permute.xlu0 %3807
      %3809 = vrot.lane.b32.xlu0 %v255, 36
      %v3810 = vpop.permute.xlu0 %3809
      %3811 = vrot.lane.b32.xlu0 %v256, 36
      %v3812 = vpop.permute.xlu0 %3811
      %3813 = vrot.lane.b32.xlu0 %v257, 36
      %v3814 = vpop.permute.xlu0 %3813
      %3815 = vrot.lane.b32.xlu0 %v258, 36
      %v3816 = vpop.permute.xlu0 %3815
      %3817 = vrot.lane.b32.xlu0 %v259, 36
      %v3818 = vpop.permute.xlu0 %3817
      %3819 = vrot.lane.b32.xlu0 %v260, 36
      %v3820 = vpop.permute.xlu0 %3819
      %3821 = vrot.lane.b32.xlu0 %v261, 36
      %v3822 = vpop.permute.xlu0 %3821
      %3823 = vrot.lane.b32.xlu0 %v262, 36
      %v3824 = vpop.permute.xlu0 %3823
      %3825 = vrot.lane.b32.xlu0 %v263, 36
      %v3826 = vpop.permute.xlu0 %3825
      %3827 = vrot.lane.b32.xlu0 %v264, 36
      %v3828 = vpop.permute.xlu0 %3827
      %3829 = vrot.lane.b32.xlu0 %v265, 36
      %v3830 = vpop.permute.xlu0 %3829
      %3831 = vrot.lane.b32.xlu0 %v266, 36
      %v3832 = vpop.permute.xlu0 %3831
      %3833 = vrot.lane.b32.xlu0 %v267, 36
      %v3834 = vpop.permute.xlu0 %3833
      %3835 = vrot.lane.b32.xlu0 %v268, 36
      %v3836 = vpop.permute.xlu0 %3835
      %3837 = vrot.lane.b32.xlu0 %v269, 36
      %v3838 = vpop.permute.xlu0 %3837
      %3839 = vrot.lane.b32.xlu0 %v270, 36
      %v3840 = vpop.permute.xlu0 %3839
      %3841 = vrot.lane.b32.xlu0 %v271, 36
      %v3842 = vpop.permute.xlu0 %3841
      %3843 = vrot.lane.b32.xlu0 %v272, 36
      %v3844 = vpop.permute.xlu0 %3843
      %3845 = vrot.lane.b32.xlu0 %v273, 36
      %v3846 = vpop.permute.xlu0 %3845
      %3847 = vrot.lane.b32.xlu0 %v274, 36
      %v3848 = vpop.permute.xlu0 %3847
      %3849 = vrot.lane.b32.xlu0 %v275, 36
      %v3850 = vpop.permute.xlu0 %3849
      %3851 = vrot.lane.b32.xlu0 %v276, 36
      %v3852 = vpop.permute.xlu0 %3851
      %3853 = vrot.lane.b32.xlu0 %v277, 36
      %v3854 = vpop.permute.xlu0 %3853
      %3855 = vrot.lane.b32.xlu0 %v278, 36
      %v3856 = vpop.permute.xlu0 %3855
      %v3889 = vsel %vm201, %v2449, %v2770
      %v3890 = vsel %vm201, %v2450, %v2772
      %v3891 = vsel %vm201, %v2451, %v2774
      %v3892 = vsel %vm201, %v2452, %v2776
      %v3893 = vsel %vm201, %v2453, %v2778
      %v3894 = vsel %vm201, %v2454, %v2780
      %v3895 = vsel %vm201, %v2455, %v2782
      %v3896 = vsel %vm201, %v2456, %v2784
      %v3897 = vsel %vm201, %v2457, %v2786
      %v3898 = vsel %vm201, %v2458, %v2788
      %v3899 = vsel %vm201, %v2459, %v2790
      %v3900 = vsel %vm201, %v2460, %v2792
      %v3901 = vsel %vm201, %v2461, %v2794
      %v3902 = vsel %vm201, %v2462, %v2796
      %v3903 = vsel %vm201, %v2463, %v2798
      %v3904 = vsel %vm201, %v2464, %v2800
      %v3905 = vsel %vm201, %v2465, %v2802
      %v3906 = vsel %vm201, %v2466, %v2804
      %v3907 = vsel %vm201, %v2467, %v2806
      %v3908 = vsel %vm201, %v2468, %v2808
      %v3909 = vsel %vm201, %v2469, %v2810
      %v3910 = vsel %vm201, %v2470, %v2812
      %v3911 = vsel %vm201, %v2471, %v2814
      %v3912 = vsel %vm201, %v2472, %v2816
      %v3913 = vsel %vm201, %v2473, %v2818
      %v3914 = vsel %vm201, %v2474, %v2820
      %v3915 = vsel %vm201, %v2475, %v2822
      %v3916 = vsel %vm201, %v2476, %v2824
      %v3917 = vsel %vm201, %v2477, %v2826
      %v3918 = vsel %vm201, %v2478, %v2828
      %v3919 = vsel %vm201, %v2479, %v2830
      %v3920 = vsel %vm201, %v2480, %v2832
      %v3921 = vsel %vm1765, %v3889, %v2898
      %v3922 = vsel %vm1765, %v3890, %v2900
      %v3923 = vsel %vm1765, %v3891, %v2902
      %v3924 = vsel %vm1765, %v3892, %v2904
      %v3925 = vsel %vm1765, %v3893, %v2906
      %v3926 = vsel %vm1765, %v3894, %v2908
      %v3927 = vsel %vm1765, %v3895, %v2910
      %v3928 = vsel %vm1765, %v3896, %v2912
      %v3929 = vsel %vm1765, %v3897, %v2914
      %v3930 = vsel %vm1765, %v3898, %v2916
      %v3931 = vsel %vm1765, %v3899, %v2918
      %v3932 = vsel %vm1765, %v3900, %v2920
      %v3933 = vsel %vm1765, %v3901, %v2922
      %v3934 = vsel %vm1765, %v3902, %v2924
      %v3935 = vsel %vm1765, %v3903, %v2926
      %v3936 = vsel %vm1765, %v3904, %v2928
      %v3937 = vsel %vm1765, %v3905, %v2930
      %v3938 = vsel %vm1765, %v3906, %v2932
      %v3939 = vsel %vm1765, %v3907, %v2934
      %v3940 = vsel %vm1765, %v3908, %v2936
      %v3941 = vsel %vm1765, %v3909, %v2938
      %v3942 = vsel %vm1765, %v3910, %v2940
      %v3943 = vsel %vm1765, %v3911, %v2942
      %v3944 = vsel %vm1765, %v3912, %v2944
      %v3945 = vsel %vm1765, %v3913, %v2946
      %v3946 = vsel %vm1765, %v3914, %v2948
      %v3947 = vsel %vm1765, %v3915, %v2950
      %v3948 = vsel %vm1765, %v3916, %v2952
      %v3949 = vsel %vm1765, %v3917, %v2954
      %v3950 = vsel %vm1765, %v3918, %v2956
      %v3951 = vsel %vm1765, %v3919, %v2958
      %v3952 = vsel %vm1765, %v3920, %v2960
      %v3953 = vsel %vm1798, %v3921, %v3026
      %v3954 = vsel %vm1798, %v3922, %v3028
      %v3955 = vsel %vm1798, %v3923, %v3030
      %v3956 = vsel %vm1798, %v3924, %v3032
      %v3957 = vsel %vm1798, %v3925, %v3034
      %v3958 = vsel %vm1798, %v3926, %v3036
      %v3959 = vsel %vm1798, %v3927, %v3038
      %v3960 = vsel %vm1798, %v3928, %v3040
      %v3961 = vsel %vm1798, %v3929, %v3042
      %v3962 = vsel %vm1798, %v3930, %v3044
      %v3963 = vsel %vm1798, %v3931, %v3046
      %v3964 = vsel %vm1798, %v3932, %v3048
      %v3965 = vsel %vm1798, %v3933, %v3050
      %v3966 = vsel %vm1798, %v3934, %v3052
      %v3967 = vsel %vm1798, %v3935, %v3054
      %v3968 = vsel %vm1798, %v3936, %v3056
      %v3969 = vsel %vm1798, %v3937, %v3058
      %v3970 = vsel %vm1798, %v3938, %v3060
      %v3971 = vsel %vm1798, %v3939, %v3062
      %v3972 = vsel %vm1798, %v3940, %v3064
      %v3973 = vsel %vm1798, %v3941, %v3066
      %v3974 = vsel %vm1798, %v3942, %v3068
      %v3975 = vsel %vm1798, %v3943, %v3070
      %v3976 = vsel %vm1798, %v3944, %v3072
      %v3977 = vsel %vm1798, %v3945, %v3074
      %v3978 = vsel %vm1798, %v3946, %v3076
      %v3979 = vsel %vm1798, %v3947, %v3078
      %v3980 = vsel %vm1798, %v3948, %v3080
      %v3981 = vsel %vm1798, %v3949, %v3082
      %v3982 = vsel %vm1798, %v3950, %v3084
      %v3983 = vsel %vm1798, %v3951, %v3086
      %v3984 = vsel %vm1798, %v3952, %v3088
      %v3985 = vsel %vm1831, %v3953, %v3154
      %v3986 = vsel %vm1831, %v3954, %v3156
      %v3987 = vsel %vm1831, %v3955, %v3158
      %v3988 = vsel %vm1831, %v3956, %v3160
      %v3989 = vsel %vm1831, %v3957, %v3162
      %v3990 = vsel %vm1831, %v3958, %v3164
      %v3991 = vsel %vm1831, %v3959, %v3166
      %v3992 = vsel %vm1831, %v3960, %v3168
      %v3993 = vsel %vm1831, %v3961, %v3170
      %v3994 = vsel %vm1831, %v3962, %v3172
      %v3995 = vsel %vm1831, %v3963, %v3174
      %v3996 = vsel %vm1831, %v3964, %v3176
      %v3997 = vsel %vm1831, %v3965, %v3178
      %v3998 = vsel %vm1831, %v3966, %v3180
      %v3999 = vsel %vm1831, %v3967, %v3182
      %v4000 = vsel %vm1831, %v3968, %v3184
      %v4001 = vsel %vm1831, %v3969, %v3186
      %v4002 = vsel %vm1831, %v3970, %v3188
      %v4003 = vsel %vm1831, %v3971, %v3190
      %v4004 = vsel %vm1831, %v3972, %v3192
      %v4005 = vsel %vm1831, %v3973, %v3194
      %v4006 = vsel %vm1831, %v3974, %v3196
      %v4007 = vsel %vm1831, %v3975, %v3198
      %v4008 = vsel %vm1831, %v3976, %v3200
      %v4009 = vsel %vm1831, %v3977, %v3202
      %v4010 = vsel %vm1831, %v3978, %v3204
      %v4011 = vsel %vm1831, %v3979, %v3206
      %v4012 = vsel %vm1831, %v3980, %v3208
      %v4013 = vsel %vm1831, %v3981, %v3210
      %v4014 = vsel %vm1831, %v3982, %v3212
      %v4015 = vsel %vm1831, %v3983, %v3214
      %v4016 = vsel %vm1831, %v3984, %v3216
      %v4017 = vsel %vm1864, %v3985, %v3282
      %v4018 = vsel %vm1864, %v3986, %v3284
      %v4019 = vsel %vm1864, %v3987, %v3286
      %v4020 = vsel %vm1864, %v3988, %v3288
      %v4021 = vsel %vm1864, %v3989, %v3290
      %v4022 = vsel %vm1864, %v3990, %v3292
      %v4023 = vsel %vm1864, %v3991, %v3294
      %v4024 = vsel %vm1864, %v3992, %v3296
      %v4025 = vsel %vm1864, %v3993, %v3298
      %v4026 = vsel %vm1864, %v3994, %v3300
      %v4027 = vsel %vm1864, %v3995, %v3302
      %v4028 = vsel %vm1864, %v3996, %v3304
      %v4029 = vsel %vm1864, %v3997, %v3306
      %v4030 = vsel %vm1864, %v3998, %v3308
      %v4031 = vsel %vm1864, %v3999, %v3310
      %v4032 = vsel %vm1864, %v4000, %v3312
      %v4033 = vsel %vm1864, %v4001, %v3314
      %v4034 = vsel %vm1864, %v4002, %v3316
      %v4035 = vsel %vm1864, %v4003, %v3318
      %v4036 = vsel %vm1864, %v4004, %v3320
      %v4037 = vsel %vm1864, %v4005, %v3322
      %v4038 = vsel %vm1864, %v4006, %v3324
      %v4039 = vsel %vm1864, %v4007, %v3326
      %v4040 = vsel %vm1864, %v4008, %v3328
      %v4041 = vsel %vm1864, %v4009, %v3330
      %v4042 = vsel %vm1864, %v4010, %v3332
      %v4043 = vsel %vm1864, %v4011, %v3334
      %v4044 = vsel %vm1864, %v4012, %v3336
      %v4045 = vsel %vm1864, %v4013, %v3338
      %v4046 = vsel %vm1864, %v4014, %v3340
      %v4047 = vsel %vm1864, %v4015, %v3342
      %v4048 = vsel %vm1864, %v4016, %v3344
      %v4049 = vsel %vm1897, %v4017, %v3410
      %v4050 = vsel %vm1897, %v4018, %v3412
      %v4051 = vsel %vm1897, %v4019, %v3414
      %v4052 = vsel %vm1897, %v4020, %v3416
      %v4053 = vsel %vm1897, %v4021, %v3418
      %v4054 = vsel %vm1897, %v4022, %v3420
      %v4055 = vsel %vm1897, %v4023, %v3422
      %v4056 = vsel %vm1897, %v4024, %v3424
      %v4057 = vsel %vm1897, %v4025, %v3426
      %v4058 = vsel %vm1897, %v4026, %v3428
      %v4059 = vsel %vm1897, %v4027, %v3430
      %v4060 = vsel %vm1897, %v4028, %v3432
      %v4061 = vsel %vm1897, %v4029, %v3434
      %v4062 = vsel %vm1897, %v4030, %v3436
      %v4063 = vsel %vm1897, %v4031, %v3438
      %v4064 = vsel %vm1897, %v4032, %v3440
      %v4065 = vsel %vm1897, %v4033, %v3442
      %v4066 = vsel %vm1897, %v4034, %v3444
      %v4067 = vsel %vm1897, %v4035, %v3446
      %v4068 = vsel %vm1897, %v4036, %v3448
      %v4069 = vsel %vm1897, %v4037, %v3450
      %v4070 = vsel %vm1897, %v4038, %v3452
      %v4071 = vsel %vm1897, %v4039, %v3454
      %v4072 = vsel %vm1897, %v4040, %v3456
      %v4073 = vsel %vm1897, %v4041, %v3458
      %v4074 = vsel %vm1897, %v4042, %v3460
      %v4075 = vsel %vm1897, %v4043, %v3462
      %v4076 = vsel %vm1897, %v4044, %v3464
      %v4077 = vsel %vm1897, %v4045, %v3466
      %v4078 = vsel %vm1897, %v4046, %v3468
      %v4079 = vsel %vm1897, %v4047, %v3470
      %v4080 = vsel %vm1897, %v4048, %v3472
      %v4081 = vsel %vm1930, %v4049, %v3538
      %v4082 = vsel %vm1930, %v4050, %v3540
      %v4083 = vsel %vm1930, %v4051, %v3542
      %v4084 = vsel %vm1930, %v4052, %v3544
      %v4085 = vsel %vm1930, %v4053, %v3546
      %v4086 = vsel %vm1930, %v4054, %v3548
      %v4087 = vsel %vm1930, %v4055, %v3550
      %v4088 = vsel %vm1930, %v4056, %v3552
      %v4089 = vsel %vm1930, %v4057, %v3554
      %v4090 = vsel %vm1930, %v4058, %v3556
      %v4091 = vsel %vm1930, %v4059, %v3558
      %v4092 = vsel %vm1930, %v4060, %v3560
      %v4093 = vsel %vm1930, %v4061, %v3562
      %v4094 = vsel %vm1930, %v4062, %v3564
      %v4095 = vsel %vm1930, %v4063, %v3566
      %v4096 = vsel %vm1930, %v4064, %v3568
      %v4097 = vsel %vm1930, %v4065, %v3570
      %v4098 = vsel %vm1930, %v4066, %v3572
      %v4099 = vsel %vm1930, %v4067, %v3574
      %v4100 = vsel %vm1930, %v4068, %v3576
      %v4101 = vsel %vm1930, %v4069, %v3578
      %v4102 = vsel %vm1930, %v4070, %v3580
      %v4103 = vsel %vm1930, %v4071, %v3582
      %v4104 = vsel %vm1930, %v4072, %v3584
      %v4105 = vsel %vm1930, %v4073, %v3586
      %v4106 = vsel %vm1930, %v4074, %v3588
      %v4107 = vsel %vm1930, %v4075, %v3590
      %v4108 = vsel %vm1930, %v4076, %v3592
      %v4109 = vsel %vm1930, %v4077, %v3594
      %v4110 = vsel %vm1930, %v4078, %v3596
      %v4111 = vsel %vm1930, %v4079, %v3598
      %v4112 = vsel %vm1930, %v4080, %v3600
      %v4113 = vsel %vm1963, %v4081, %v3666
      %v4114 = vsel %vm1963, %v4082, %v3668
      %v4115 = vsel %vm1963, %v4083, %v3670
      %v4116 = vsel %vm1963, %v4084, %v3672
      %v4117 = vsel %vm1963, %v4085, %v3674
      %v4118 = vsel %vm1963, %v4086, %v3676
      %v4119 = vsel %vm1963, %v4087, %v3678
      %v4120 = vsel %vm1963, %v4088, %v3680
      %v4121 = vsel %vm1963, %v4089, %v3682
      %v4122 = vsel %vm1963, %v4090, %v3684
      %v4123 = vsel %vm1963, %v4091, %v3686
      %v4124 = vsel %vm1963, %v4092, %v3688
      %v4125 = vsel %vm1963, %v4093, %v3690
      %v4126 = vsel %vm1963, %v4094, %v3692
      %v4127 = vsel %vm1963, %v4095, %v3694
      %v4128 = vsel %vm1963, %v4096, %v3696
      %v4129 = vsel %vm1963, %v4097, %v3698
      %v4130 = vsel %vm1963, %v4098, %v3700
      %v4131 = vsel %vm1963, %v4099, %v3702
      %v4132 = vsel %vm1963, %v4100, %v3704
      %v4133 = vsel %vm1963, %v4101, %v3706
      %v4134 = vsel %vm1963, %v4102, %v3708
      %v4135 = vsel %vm1963, %v4103, %v3710
      %v4136 = vsel %vm1963, %v4104, %v3712
      %v4137 = vsel %vm1963, %v4105, %v3714
      %v4138 = vsel %vm1963, %v4106, %v3716
      %v4139 = vsel %vm1963, %v4107, %v3718
      %v4140 = vsel %vm1963, %v4108, %v3720
      %v4141 = vsel %vm1963, %v4109, %v3722
      %v4142 = vsel %vm1963, %v4110, %v3724
      %v4143 = vsel %vm1963, %v4111, %v3726
      %v4144 = vsel %vm1963, %v4112, %v3728
      %v4145 = vsel %vm1996, %v4113, %v3794
      %v4146 = vsel %vm1996, %v4114, %v3796
      %v4147 = vsel %vm1996, %v4115, %v3798
      %v4148 = vsel %vm1996, %v4116, %v3800
      %v4149 = vsel %vm1996, %v4117, %v3802
      %v4150 = vsel %vm1996, %v4118, %v3804
      %v4151 = vsel %vm1996, %v4119, %v3806
      %v4152 = vsel %vm1996, %v4120, %v3808
      %v4153 = vsel %vm1996, %v4121, %v3810
      %v4154 = vsel %vm1996, %v4122, %v3812
      %v4155 = vsel %vm1996, %v4123, %v3814
      %v4156 = vsel %vm1996, %v4124, %v3816
      %v4157 = vsel %vm1996, %v4125, %v3818
      %v4158 = vsel %vm1996, %v4126, %v3820
      %v4159 = vsel %vm1996, %v4127, %v3822
      %v4160 = vsel %vm1996, %v4128, %v3824
      %v4161 = vsel %vm1996, %v4129, %v3826
      %v4162 = vsel %vm1996, %v4130, %v3828
      %v4163 = vsel %vm1996, %v4131, %v3830
      %v4164 = vsel %vm1996, %v4132, %v3832
      %v4165 = vsel %vm1996, %v4133, %v3834
      %v4166 = vsel %vm1996, %v4134, %v3836
      %v4167 = vsel %vm1996, %v4135, %v3838
      %v4168 = vsel %vm1996, %v4136, %v3840
      %v4169 = vsel %vm1996, %v4137, %v3842
      %v4170 = vsel %vm1996, %v4138, %v3844
      %v4171 = vsel %vm1996, %v4139, %v3846
      %v4172 = vsel %vm1996, %v4140, %v3848
      %v4173 = vsel %vm1996, %v4141, %v3850
      %v4174 = vsel %vm1996, %v4142, %v3852
      %v4175 = vsel %vm1996, %v4143, %v3854
      %v4176 = vsel %vm1996, %v4144, %v3856
      %vm4177 = vcmask 326656
      %v4178 = vsel %vm4177, %v200, 0
      %v4181 = vsel %vm4177, %v4145, 0
      %v4184 = vsel %vm4177, %v4146, 0
      %v4187 = vsel %vm4177, %v4147, 0
      %v4190 = vsel %vm4177, %v4148, 0
      %v4193 = vsel %vm4177, %v4149, 0
      %v4196 = vsel %vm4177, %v4150, 0
      %v4199 = vsel %vm4177, %v4151, 0
      %v4202 = vsel %vm4177, %v4152, 0
      %v4205 = vsel %vm4177, %v4153, 0
      %v4208 = vsel %vm4177, %v4154, 0
      %v4211 = vsel %vm4177, %v4155, 0
      %v4214 = vsel %vm4177, %v4156, 0
      %v4217 = vsel %vm4177, %v4157, 0
      %v4220 = vsel %vm4177, %v4158, 0
      %v4223 = vsel %vm4177, %v4159, 0
      %v4226 = vsel %vm4177, %v4160, 0
      %v4229 = vsel %vm4177, %v4161, 0
      %v4232 = vsel %vm4177, %v4162, 0
      %v4235 = vsel %vm4177, %v4163, 0
      %v4238 = vsel %vm4177, %v4164, 0
      %v4241 = vsel %vm4177, %v4165, 0
      %v4244 = vsel %vm4177, %v4166, 0
      %v4247 = vsel %vm4177, %v4167, 0
      %v4250 = vsel %vm4177, %v4168, 0
      %v4253 = vsel %vm4177, %v4169, 0
      %v4256 = vsel %vm4177, %v4170, 0
      %v4259 = vsel %vm4177, %v4171, 0
      %v4262 = vsel %vm4177, %v4172, 0
      %v4265 = vsel %vm4177, %v4173, 0
      %v4268 = vsel %vm4177, %v4174, 0
      %v4271 = vsel %vm4177, %v4175, 0
      %v4274 = vsel %vm4177, %v4176, 0
      %4276 = vmatprep.subr.mxu0 0.0
      %4277 = vmatpush1.xpose.msra.mxu0 %v4226
      %4278 = vmatprep.subr.mxu0 0.0
      %4279 = vmatpush1.xpose.msra.mxu0 %v4223
      %4280 = vmatprep.subr.mxu0 0.0
      %4281 = vmatpush1.xpose.msra.mxu0 %v4220
      %4282 = vmatprep.subr.mxu0 0.0
      %4283 = vmatpush1.xpose.msra.mxu0 %v4217
      %4284 = vmatprep.subr.mxu0 0.0
      %4285 = vmatpush1.xpose.msra.mxu0 %v4214
      %4286 = vmatprep.subr.mxu0 0.0
      %4287 = vmatpush1.xpose.msra.mxu0 %v4211
      %4288 = vmatprep.subr.mxu0 0.0
      %4289 = vmatpush1.xpose.msra.mxu0 %v4208
      %4290 = vmatprep.subr.mxu0 0.0
      %4291 = vmatpush1.xpose.msra.mxu0 %v4205
      %4292 = vmatprep.subr.mxu0 0.0
      %4293 = vmatpush1.xpose.msra.mxu0 %v4202
      %4294 = vmatprep.subr.mxu0 0.0
      %4295 = vmatpush1.xpose.msra.mxu0 %v4199
      %4296 = vmatprep.subr.mxu0 0.0
      %4297 = vmatpush1.xpose.msra.mxu0 %v4196
      %4298 = vmatprep.subr.mxu0 0.0
      %4299 = vmatpush1.xpose.msra.mxu0 %v4193
      %4300 = vmatprep.subr.mxu0 0.0
      %4301 = vmatpush1.xpose.msra.mxu0 %v4190
      %4302 = vmatprep.subr.mxu0 0.0
      %4303 = vmatpush1.xpose.msra.mxu0 %v4187
      %4304 = vmatprep.subr.mxu0 0.0
      %4305 = vmatpush1.xpose.msra.mxu0 %v4184
      %4306 = vmatprep.subr.mxu0 0.0
      %4307 = vmatpush1.xpose.msra.mxu0 %v4181
      %4308 = vmatprep.subr.mxu0 0.0
      %4309 = vmatpush2.xpose.msra.mxu0 %v4274
      %4310 = vmatprep.subr.mxu0 0.0
      %4311 = vmatpush2.xpose.msra.mxu0 %v4271
      %4312 = vmatprep.subr.mxu0 0.0
      %4313 = vmatpush2.xpose.msra.mxu0 %v4268
      %4314 = vmatprep.subr.mxu0 0.0
      %4315 = vmatpush2.xpose.msra.mxu0 %v4265
      %4316 = vmatprep.subr.mxu0 0.0
      %4317 = vmatpush2.xpose.msra.mxu0 %v4262
      %4318 = vmatprep.subr.mxu0 0.0
      %4319 = vmatpush2.xpose.msra.mxu0 %v4259
      %4320 = vmatprep.subr.mxu0 0.0
      %4321 = vmatpush2.xpose.msra.mxu0 %v4256
      %4322 = vmatprep.subr.mxu0 0.0
      %4323 = vmatpush2.xpose.msra.mxu0 %v4253
      %4324 = vmatprep.subr.mxu0 0.0
      %4325 = vmatpush2.xpose.msra.mxu0 %v4250
      %4326 = vmatprep.subr.mxu0 0.0
      %4327 = vmatpush2.xpose.msra.mxu0 %v4247
      %4328 = vmatprep.subr.mxu0 0.0
      %4329 = vmatpush2.xpose.msra.mxu0 %v4244
      %4330 = vmatprep.subr.mxu0 0.0
      %4331 = vmatpush2.xpose.msra.mxu0 %v4241
      %4332 = vmatprep.subr.mxu0 0.0
      %4333 = vmatpush2.xpose.msra.mxu0 %v4238
      %4334 = vmatprep.subr.mxu0 0.0
      %4335 = vmatpush2.xpose.msra.mxu0 %v4235
      %4336 = vmatprep.subr.mxu0 0.0
      %4337 = vmatpush2.xpose.msra.mxu0 %v4232
      %4338 = vmatprep.subr.mxu0 0.0
      %4339 = vmatpush2.xpose.msra.mxu0 %v4229
      %4340 = vmatprep.mubr.f32.mxu0 0.0
      %4341 = vmatmul.mubr.f32.gmra.mxu0 %v4178
      %v4342 = vpop.f32.mrf.mxu0
      %v4343 = vadd.f32 0.0, %v4342
      %v4344 = vpop.f32.mrf.mxu0
      %v4345 = vadd.f32 0.0, %v4344
      %4346 = vdwg.mxu0
      %v4349 = vcombine.low %v4343, %v4345
      %4351 = vst [vmem:[%s197] sm:$0xff] %v4349
      %p4352 = scmp.lt.s32.totalorder %s15, 1
      %s4353 = scalar_select %p4352, %s15, 1
      %s4354 = smul.addr %s4353, 2
      %s4355 = smul.addr %s4354, 4
      %s4356 = scalar_lea.vmem %s4, %s4355
      // Predicated region
      $region37: #{upsample_block_forward.1} parent=35 // pred_check
        %p4357 = pneg %p122
      $region38: #{upsample_block_forward.1} parent=35 // pred_check_branch
        %4359 = sbr.rel (%p4357) target = $region40
      $region39: #{upsample_block_forward.1} parent=35 // pred_region
        _
      $region40: #{upsample_block_forward.1} parent=35 // pred_fallthru
        _
    $region36: #{upsample_block_forward.1} parent=5 // pred_fallthru
      _
    %p4360 = scmp.le.s32.totalorder 2, %s10
    // Predicated region
    $region41: #{upsample_block_forward.1} parent=5 // pred_check
      %p4361 = pneg %p4360
    $region42: #{upsample_block_forward.1} parent=5 // pred_check_branch
      %4363 = sbr.rel (%p4361) target = $region44
    $region43: #{upsample_block_forward.1} parent=5 // pred_region
      %s4364 = ssub.s32 %s10, 2
      // Predicated region
      $region45: #{upsample_block_forward.1} parent=43 // pred_check
        %p4365 = pneg %p128
      $region46: #{upsample_block_forward.1} parent=43 // pred_check_branch
        %4367 = sbr.rel (%p4365) target = $region48
      $region47: #{upsample_block_forward.1} parent=43 // pred_region
        %p4368 = scmp.lt.s32.totalorder %s16, 1
        %s4369 = scalar_select %p4368, %s16, 1
        %s4370 = smul.addr %s4369, 2
        %s4371 = smul.addr %s4370, 4
        %s4372 = scalar_lea.vmem %s4, %s4371
      $region48: #{upsample_block_forward.1} parent=43 // pred_fallthru
        _
    $region44: #{upsample_block_forward.1} parent=5 // pred_fallthru
      _
  $region6: #{upsample_block_forward.1} parent=0 // loop_footer
    %s14 = sadd.s32 1, %s10
  $region7: #{upsample_block_forward.1} parent=0 // loop_footer_branch
    %9 = sbr.rel target = $region3
  $region8: #{upsample_block_forward.1} parent=0 // loop_exit
    _

</llo_original>
